<compile_context>
chip_gen: v6e
topology: v6e:2x2x1
jax: 0.10.0
libtpu: 0.0.40
codegen_flags: <defaults>
</compile_context>

<pallas_src>
import numpy as np

import jax
import jax.numpy as jnp
from jax.experimental import pallas as pl
from jax.experimental.pallas import tpu as pltpu

# ----------------------- synthetic model hyper-parameters -----------------------
B = 2
C_IN = 3                       # RGB
IN_H = 16                      # codec.input_size[1]  (small synthetic size)
IN_W = 16                      # codec.input_size[0]
KH = KW = 3                    # stem conv kernel
STRIDE = 2
PAD = 1
H_OUT = (IN_H + 2 * PAD - KH) // STRIDE + 1
W_OUT = (IN_W + 2 * PAD - KW) // STRIDE + 1
HW = H_OUT * W_OUT
HW_IN = IN_H * IN_W
N_TAP = KH * KW
FEAT_C = 32                    # backbone feature channels
NUM_KPT = 144                  # 144 keypoint channels
HIDDEN = 32                    # head hidden width
SIMCC_SPLIT_RATIO = 2.0
SIMCC_X = int(IN_W * SIMCC_SPLIT_RATIO)
SIMCC_Y = int(IN_H * SIMCC_SPLIT_RATIO)
SIMCC_XY = SIMCC_X + SIMCC_Y   # fused (simcc_x || simcc_y) head width

# data_preprocessor mean/std (standard ImageNet*255 values used by DWPose configs)
MEAN = jnp.array([123.675, 116.28, 103.53], dtype=jnp.float32)
STD = jnp.array([58.395, 57.12, 57.375], dtype=jnp.float32)


# ---------------- constant 0/1 selection matrices for the in-kernel im2col ----------------
def _build_selection():
    """S[t, p, m] = 1 iff input pixel p (= ih*IN_W + iw) is tap t of output position m.
    valid[t, m] = 1 iff tap t of output position m lands inside the (unpadded) image."""
    S = np.zeros((N_TAP, HW_IN, HW), np.float32)
    valid = np.zeros((N_TAP, HW), np.float32)
    for dh in range(KH):
        for dw in range(KW):
            t = dh * KW + dw
            for mh in range(H_OUT):
                for mw in range(W_OUT):
                    m = mh * W_OUT + mw
                    ih = STRIDE * mh + dh - PAD
                    iw = STRIDE * mw + dw - PAD
                    if 0 <= ih < IN_H and 0 <= iw < IN_W:
                        S[t, ih * IN_W + iw, m] = 1.0
                        valid[t, m] = 1.0
    return jnp.asarray(S), jnp.asarray(valid)


_SEL, _VALID = _build_selection()


# ----------------------------- fused Pallas kernel -----------------------------------
def _fused_dwpose_kernel(x_ref, sel_ref, wbd_ref, bmap_ref, wkbd_ref, bk_ref,
                         wfc_ref, bfc_ref, wxy_ref, bxy_ref, o_ref):
    """Fully fused preprocess + stem conv + SimCC head (both batches at once).

    x_ref   : (B*C_IN, HW_IN)            raw input in [0, 1], batch stacked in sublanes
    sel_ref : (N_TAP, HW_IN, HW)         constant 0/1 tap-selection matrices
    wbd_ref : (N_TAP, B*FEAT_C, B*C_IN)  block-diag conv tap weights, preprocess scale folded in
    bmap_ref: (B*FEAT_C, HW)             conv bias + preprocess bias (valid-tap corrected)
    wkbd_ref: (B*NUM_KPT, B*FEAT_C)      block-diag keypoint projection (no in-kernel transpose)
    bk_ref  : (B*NUM_KPT, 1)
    wfc_ref : (HW, HIDDEN)               bfc_ref: (1, HIDDEN)
    wxy_ref : (HIDDEN, SIMCC_XY)         bxy_ref: (1, SIMCC_XY)   fused simcc_x||simcc_y head
    o_ref   : (NUM_KPT, B*SIMCC_XY)      lane-dense (144, 128) output slab
    """
    xs = x_ref[...]                                     # (B*C_IN, HW_IN)

    # ---- stem conv via 9 tap matmuls against constant selection matrices (MXU only) ----
    feat = bmap_ref[...]                                # (B*FEAT_C, HW): effective-bias start
    for t in range(N_TAP):                              # static unroll over the 3x3 taps
        # gather tap t of every output position for BOTH batches with one matmul;
        # zero-padded taps come out as exact zeros
        tap = jnp.dot(xs, sel_ref[t], preferred_element_type=jnp.float32)   # (B*C_IN, HW)
        # block-diagonal weights keep the two batches separated in the sublane dim
        feat = feat + jnp.dot(wbd_ref[t], tap, preferred_element_type=jnp.float32)
    feat = jnp.maximum(feat, 0.0)                       # (B*FEAT_C, HW)

    # ---- SimCC head: 3 matmuls total for the whole batch, no XLU transposes ----
    kpt = jnp.dot(wkbd_ref[...], feat,
                  preferred_element_type=jnp.float32) + bk_ref[...]         # (B*K, HW)
    hid = jnp.dot(kpt, wfc_ref[...],
                  preferred_element_type=jnp.float32) + bfc_ref[...]        # (B*K, HIDDEN)
    hid = jnp.maximum(hid, 0.0)  # TODO(synk): real DWPose/RTMPose head uses a GAU block here
    out = jnp.dot(hid, wxy_ref[...],
                  preferred_element_type=jnp.float32) + bxy_ref[...]        # (B*K, SIMCC_XY)

    # scatter the batch-stacked rows into the lane-dense (144, 128) output slab
    for b in range(B):                                  # static unroll, 8-aligned row slices
        o_ref[:, b * SIMCC_XY:(b + 1) * SIMCC_XY] = out[b * NUM_KPT:(b + 1) * NUM_KPT, :]


# ------------------------------- JAX glue / wrapper ---------------------------------------
def init_params(key):
    ks = jax.random.split(key, 5)
    s = 0.05
    return dict(
        conv_w=jax.random.normal(ks[0], (C_IN * KH * KW, FEAT_C), jnp.float32) * s,
        conv_b=jnp.zeros((1, FEAT_C), jnp.float32),
        wk=jax.random.normal(ks[1], (FEAT_C, NUM_KPT), jnp.float32) * s,
        bk=jnp.zeros((1, NUM_KPT), jnp.float32),
        wfc=jax.random.normal(ks[2], (HW, HIDDEN), jnp.float32) * s,
        bfc=jnp.zeros((1, HIDDEN), jnp.float32),
        wx=jax.random.normal(ks[3], (HIDDEN, SIMCC_X), jnp.float32) * s,
        bx=jnp.zeros((1, SIMCC_X), jnp.float32),
        wy=jax.random.normal(ks[4], (HIDDEN, SIMCC_Y), jnp.float32) * s,
        by=jnp.zeros((1, SIMCC_Y), jnp.float32),
    )


def _fold_params(params):
    """Trace-time weight plumbing: fold the preprocess affine into the conv, build the
    block-diagonal (over batch) conv / keypoint weights, and fuse the two SimCC heads.
    Tiny XLA ops on weights only — no per-pixel work here."""
    scale = 255.0 / STD                                   # (C,)   x*255 then /std
    bias = -MEAN / STD                                    # (C,)   -mean/std
    eye_b = jnp.eye(B, dtype=jnp.float32)

    # conv_w rows are ordered (c*9 + t); wt[t, f, c] = conv_w[c*9 + t, f]
    wt = params['conv_w'].reshape(C_IN, N_TAP, FEAT_C).transpose(1, 2, 0)     # (9, F, C)
    wts = wt * scale[None, None, :]                       # preprocess scale folded into conv
    # block-diagonal over batch: (9, B*F, B*C)
    wbd = jnp.einsum('bd,tfc->tbfdc', eye_b, wts).reshape(N_TAP, B * FEAT_C, B * C_IN)
    # preprocess bias contributes only through valid (non zero-padded) taps
    wb = jnp.einsum('tfc,c->tf', wt, bias)                # (9, F)
    bmap = params['conv_b'].T + jnp.einsum('tf,tm->fm', wb, _VALID)           # (F, HW)
    bmap_s = jnp.tile(bmap, (B, 1))                       # (B*F, HW)

    wkT = params['wk'].T                                  # (K, F)
    wkbd = jnp.einsum('bd,kf->bkdf', eye_b, wkT).reshape(B * NUM_KPT, B * FEAT_C)
    bk_s = jnp.tile(params['bk'].T, (B, 1))               # (B*K, 1)

    wxy = jnp.concatenate([params['wx'], params['wy']], axis=1)               # (HIDDEN, SX+SY)
    bxy = jnp.concatenate([params['bx'], params['by']], axis=1)               # (1, SX+SY)
    return wbd, bmap_s, wkbd, bk_s, params['wfc'], params['bfc'], wxy, bxy


def dwpose_wrapper_forward(x, params, check_input_range=False):
    """Mirrors DWPoseWarpper.forward. x: (B, C, H, W) in [0, 1]. Returns (simcc_x, simcc_y)."""
    Hh, Ww = x.shape[-2:]
    assert x.shape[0] == B and x.shape[1] == C_IN, x.shape
    assert (Hh, Ww) == (IN_H, IN_W), f'required: {(IN_H, IN_W)}, got: {(Hh, Ww)}'
    if check_input_range:
        # debug only: forces a device->host sync and breaks jit (same as PyTorch .item())
        assert float(jnp.max(x)) <= 1.0001, 'The input tensor should be normalized to [0, 1]'
        assert float(jnp.min(x)) >= -0.0001, 'The input tensor should be normalized to [0, 1]'

    wbd, bmap_s, wkbd, bk_s, wfc, bfc, wxy, bxy = _fold_params(params)
    x2 = x.reshape(B * C_IN, HW_IN)                       # batch stacked along sublanes

    vmem = pl.BlockSpec(memory_space=pltpu.MemorySpace.VMEM)
    out_all = pl.pallas_call(
        _fused_dwpose_kernel,
        out_shape=jax.ShapeDtypeStruct((NUM_KPT, B * SIMCC_XY), jnp.float32),
        in_specs=[vmem] * 10,
        out_specs=vmem,
    )(x2, _SEL, wbd, bmap_s, wkbd, bk_s, wfc, bfc, wxy, bxy)

    # split the lane-dense (144, B*(SX+SY)) slab back into per-batch simcc_x / simcc_y
    out_b = out_all.reshape(NUM_KPT, B, SIMCC_XY).transpose(1, 0, 2)   # (B, K, SX+SY)
    return out_b[..., :SIMCC_X], out_b[..., SIMCC_X:]


# ------------------------- plain-JAX reference (for checking) -----------------------------
def _reference_forward(x, params):
    scale = (255.0 / STD)[None, :, None, None]
    bias = (-MEAN / STD)[None, :, None, None]
    x_norm = x * scale + bias
    xp = jnp.pad(x_norm, ((0, 0), (0, 0), (PAD, PAD), (PAD, PAD)))
    cols = []
    for dh in range(KH):
        for dw in range(KW):
            cols.append(xp[:, :, dh:dh + IN_H:STRIDE, dw:dw + IN_W:STRIDE])
    patches = jnp.stack(cols, axis=2)                                # (B, C, 9, Ho, Wo)
    patches = patches.transpose(0, 3, 4, 1, 2).reshape(B * HW, C_IN * N_TAP)
    feat = jnp.maximum(patches @ params['conv_w'] + params['conv_b'], 0.0)
    feat = feat.reshape(B, HW, FEAT_C)
    sx, sy = [], []
    for b in range(B):
        kpt = (feat[b] @ params['wk'] + params['bk']).T              # (K, HW)
        hid = jnp.maximum(kpt @ params['wfc'] + params['bfc'], 0.0)  # (K, HIDDEN)
        sx.append(hid @ params['wx'] + params['bx'])
        sy.append(hid @ params['wy'] + params['by'])
    return jnp.stack(sx), jnp.stack(sy)


if __name__ == "__main__":
    key = jax.random.PRNGKey(0)
    k_x, k_p = jax.random.split(key)
    x = jax.random.uniform(k_x, (B, C_IN, IN_H, IN_W), dtype=jnp.float32,
                           minval=0.0, maxval=1.0)
    params = init_params(k_p)

    forward = jax.jit(dwpose_wrapper_forward)
    simcc_x, simcc_y = forward(x, params)
    jax.block_until_ready(simcc_x)
    jax.block_until_ready(simcc_y)

    assert simcc_x.shape == (B, NUM_KPT, SIMCC_X), simcc_x.shape
    assert simcc_y.shape == (B, NUM_KPT, SIMCC_Y), simcc_y.shape

    ref_x, ref_y = _reference_forward(x, params)
    err = max(float(jnp.max(jnp.abs(simcc_x - ref_x))),
              float(jnp.max(jnp.abs(simcc_y - ref_y))))
    assert err < 5e-2, f"mismatch vs reference: max abs err {err}"

    print("KERNEL_OK")
</pallas_src>

<mosaic_0001>
module attributes {stable_mosaic.version = 11 : i64} {
  func.func @_fused_dwpose_kernel(%arg0: memref<6x256xf32, #tpu.memory_space<vmem>>, %arg1: memref<9x256x64xf32, #tpu.memory_space<vmem>>, %arg2: memref<9x64x6xf32, #tpu.memory_space<vmem>>, %arg3: memref<64x64xf32, #tpu.memory_space<vmem>>, %arg4: memref<288x64xf32, #tpu.memory_space<vmem>>, %arg5: memref<288x1xf32, #tpu.memory_space<vmem>>, %arg6: memref<64x32xf32, #tpu.memory_space<vmem>>, %arg7: memref<1x32xf32, #tpu.memory_space<vmem>>, %arg8: memref<32x64xf32, #tpu.memory_space<vmem>>, %arg9: memref<1x64xf32, #tpu.memory_space<vmem>>, %arg10: memref<144x128xf32, #tpu.memory_space<vmem>>) attributes {dimension_semantics = [], scalar_prefetch = 0 : i64, scratch_operands = 0 : i64, tpu.core_type = #tpu.core_type<tc>} {
    %c0 = arith.constant 0 : index
    %c0_0 = arith.constant 0 : index
    %0 = vector.load %arg0[%c0, %c0_0] : memref<6x256xf32, #tpu.memory_space<vmem>>, vector<6x256xf32>
    %c0_1 = arith.constant 0 : index
    %c0_2 = arith.constant 0 : index
    %1 = vector.load %arg3[%c0_1, %c0_2] : memref<64x64xf32, #tpu.memory_space<vmem>>, vector<64x64xf32>
    %c0_3 = arith.constant 0 : index
    %c0_4 = arith.constant 0 : index
    %c0_5 = arith.constant 0 : index
    %2 = vector.load %arg1[%c0_3, %c0_4, %c0_5] : memref<9x256x64xf32, #tpu.memory_space<vmem>>, vector<1x256x64xf32>
    %3 = vector.shape_cast %2 : vector<1x256x64xf32> to vector<256x64xf32>
    %cst = arith.constant dense<0.000000e+00> : vector<6x64xf32>
    %4 = tpu.matmul %0, %3, %cst {dimension_numbers = #tpu.dot_dimension_numbers<[1], [0], [0], [1], [0, 0, 1, 1], [], []>} : vector<6x256xf32>, vector<256x64xf32>, vector<6x64xf32> -> vector<6x64xf32>
    %c0_6 = arith.constant 0 : index
    %c0_7 = arith.constant 0 : index
    %c0_8 = arith.constant 0 : index
    %5 = vector.load %arg2[%c0_6, %c0_7, %c0_8] : memref<9x64x6xf32, #tpu.memory_space<vmem>>, vector<1x64x6xf32>
    %6 = vector.shape_cast %5 : vector<1x64x6xf32> to vector<64x6xf32>
    %cst_9 = arith.constant dense<0.000000e+00> : vector<64x64xf32>
    %7 = tpu.matmul %6, %4, %cst_9 {dimension_numbers = #tpu.dot_dimension_numbers<[1], [0], [0], [1], [0, 0, 1, 1], [], []>} : vector<64x6xf32>, vector<6x64xf32>, vector<64x64xf32> -> vector<64x64xf32>
    %8 = arith.addf %1, %7 : vector<64x64xf32>
    %c1 = arith.constant 1 : index
    %c0_10 = arith.constant 0 : index
    %c0_11 = arith.constant 0 : index
    %9 = vector.load %arg1[%c1, %c0_10, %c0_11] : memref<9x256x64xf32, #tpu.memory_space<vmem>>, vector<1x256x64xf32>
    %10 = vector.shape_cast %9 : vector<1x256x64xf32> to vector<256x64xf32>
    %cst_12 = arith.constant dense<0.000000e+00> : vector<6x64xf32>
    %11 = tpu.matmul %0, %10, %cst_12 {dimension_numbers = #tpu.dot_dimension_numbers<[1], [0], [0], [1], [0, 0, 1, 1], [], []>} : vector<6x256xf32>, vector<256x64xf32>, vector<6x64xf32> -> vector<6x64xf32>
    %c1_13 = arith.constant 1 : index
    %c0_14 = arith.constant 0 : index
    %c0_15 = arith.constant 0 : index
    %12 = vector.load %arg2[%c1_13, %c0_14, %c0_15] : memref<9x64x6xf32, #tpu.memory_space<vmem>>, vector<1x64x6xf32>
    %13 = vector.shape_cast %12 : vector<1x64x6xf32> to vector<64x6xf32>
    %cst_16 = arith.constant dense<0.000000e+00> : vector<64x64xf32>
    %14 = tpu.matmul %13, %11, %cst_16 {dimension_numbers = #tpu.dot_dimension_numbers<[1], [0], [0], [1], [0, 0, 1, 1], [], []>} : vector<64x6xf32>, vector<6x64xf32>, vector<64x64xf32> -> vector<64x64xf32>
    %15 = arith.addf %8, %14 : vector<64x64xf32>
    %c2 = arith.constant 2 : index
    %c0_17 = arith.constant 0 : index
    %c0_18 = arith.constant 0 : index
    %16 = vector.load %arg1[%c2, %c0_17, %c0_18] : memref<9x256x64xf32, #tpu.memory_space<vmem>>, vector<1x256x64xf32>
    %17 = vector.shape_cast %16 : vector<1x256x64xf32> to vector<256x64xf32>
    %cst_19 = arith.constant dense<0.000000e+00> : vector<6x64xf32>
    %18 = tpu.matmul %0, %17, %cst_19 {dimension_numbers = #tpu.dot_dimension_numbers<[1], [0], [0], [1], [0, 0, 1, 1], [], []>} : vector<6x256xf32>, vector<256x64xf32>, vector<6x64xf32> -> vector<6x64xf32>
    %c2_20 = arith.constant 2 : index
    %c0_21 = arith.constant 0 : index
    %c0_22 = arith.constant 0 : index
    %19 = vector.load %arg2[%c2_20, %c0_21, %c0_22] : memref<9x64x6xf32, #tpu.memory_space<vmem>>, vector<1x64x6xf32>
    %20 = vector.shape_cast %19 : vector<1x64x6xf32> to vector<64x6xf32>
    %cst_23 = arith.constant dense<0.000000e+00> : vector<64x64xf32>
    %21 = tpu.matmul %20, %18, %cst_23 {dimension_numbers = #tpu.dot_dimension_numbers<[1], [0], [0], [1], [0, 0, 1, 1], [], []>} : vector<64x6xf32>, vector<6x64xf32>, vector<64x64xf32> -> vector<64x64xf32>
    %22 = arith.addf %15, %21 : vector<64x64xf32>
    %c3 = arith.constant 3 : index
    %c0_24 = arith.constant 0 : index
    %c0_25 = arith.constant 0 : index
    %23 = vector.load %arg1[%c3, %c0_24, %c0_25] : memref<9x256x64xf32, #tpu.memory_space<vmem>>, vector<1x256x64xf32>
    %24 = vector.shape_cast %23 : vector<1x256x64xf32> to vector<256x64xf32>
    %cst_26 = arith.constant dense<0.000000e+00> : vector<6x64xf32>
    %25 = tpu.matmul %0, %24, %cst_26 {dimension_numbers = #tpu.dot_dimension_numbers<[1], [0], [0], [1], [0, 0, 1, 1], [], []>} : vector<6x256xf32>, vector<256x64xf32>, vector<6x64xf32> -> vector<6x64xf32>
    %c3_27 = arith.constant 3 : index
    %c0_28 = arith.constant 0 : index
    %c0_29 = arith.constant 0 : index
    %26 = vector.load %arg2[%c3_27, %c0_28, %c0_29] : memref<9x64x6xf32, #tpu.memory_space<vmem>>, vector<1x64x6xf32>
    %27 = vector.shape_cast %26 : vector<1x64x6xf32> to vector<64x6xf32>
    %cst_30 = arith.constant dense<0.000000e+00> : vector<64x64xf32>
    %28 = tpu.matmul %27, %25, %cst_30 {dimension_numbers = #tpu.dot_dimension_numbers<[1], [0], [0], [1], [0, 0, 1, 1], [], []>} : vector<64x6xf32>, vector<6x64xf32>, vector<64x64xf32> -> vector<64x64xf32>
    %29 = arith.addf %22, %28 : vector<64x64xf32>
    %c4 = arith.constant 4 : index
    %c0_31 = arith.constant 0 : index
    %c0_32 = arith.constant 0 : index
    %30 = vector.load %arg1[%c4, %c0_31, %c0_32] : memref<9x256x64xf32, #tpu.memory_space<vmem>>, vector<1x256x64xf32>
    %31 = vector.shape_cast %30 : vector<1x256x64xf32> to vector<256x64xf32>
    %cst_33 = arith.constant dense<0.000000e+00> : vector<6x64xf32>
    %32 = tpu.matmul %0, %31, %cst_33 {dimension_numbers = #tpu.dot_dimension_numbers<[1], [0], [0], [1], [0, 0, 1, 1], [], []>} : vector<6x256xf32>, vector<256x64xf32>, vector<6x64xf32> -> vector<6x64xf32>
    %c4_34 = arith.constant 4 : index
    %c0_35 = arith.constant 0 : index
    %c0_36 = arith.constant 0 : index
    %33 = vector.load %arg2[%c4_34, %c0_35, %c0_36] : memref<9x64x6xf32, #tpu.memory_space<vmem>>, vector<1x64x6xf32>
    %34 = vector.shape_cast %33 : vector<1x64x6xf32> to vector<64x6xf32>
    %cst_37 = arith.constant dense<0.000000e+00> : vector<64x64xf32>
    %35 = tpu.matmul %34, %32, %cst_37 {dimension_numbers = #tpu.dot_dimension_numbers<[1], [0], [0], [1], [0, 0, 1, 1], [], []>} : vector<64x6xf32>, vector<6x64xf32>, vector<64x64xf32> -> vector<64x64xf32>
    %36 = arith.addf %29, %35 : vector<64x64xf32>
    %c5 = arith.constant 5 : index
    %c0_38 = arith.constant 0 : index
    %c0_39 = arith.constant 0 : index
    %37 = vector.load %arg1[%c5, %c0_38, %c0_39] : memref<9x256x64xf32, #tpu.memory_space<vmem>>, vector<1x256x64xf32>
    %38 = vector.shape_cast %37 : vector<1x256x64xf32> to vector<256x64xf32>
    %cst_40 = arith.constant dense<0.000000e+00> : vector<6x64xf32>
    %39 = tpu.matmul %0, %38, %cst_40 {dimension_numbers = #tpu.dot_dimension_numbers<[1], [0], [0], [1], [0, 0, 1, 1], [], []>} : vector<6x256xf32>, vector<256x64xf32>, vector<6x64xf32> -> vector<6x64xf32>
    %c5_41 = arith.constant 5 : index
    %c0_42 = arith.constant 0 : index
    %c0_43 = arith.constant 0 : index
    %40 = vector.load %arg2[%c5_41, %c0_42, %c0_43] : memref<9x64x6xf32, #tpu.memory_space<vmem>>, vector<1x64x6xf32>
    %41 = vector.shape_cast %40 : vector<1x64x6xf32> to vector<64x6xf32>
    %cst_44 = arith.constant dense<0.000000e+00> : vector<64x64xf32>
    %42 = tpu.matmul %41, %39, %cst_44 {dimension_numbers = #tpu.dot_dimension_numbers<[1], [0], [0], [1], [0, 0, 1, 1], [], []>} : vector<64x6xf32>, vector<6x64xf32>, vector<64x64xf32> -> vector<64x64xf32>
    %43 = arith.addf %36, %42 : vector<64x64xf32>
    %c6 = arith.constant 6 : index
    %c0_45 = arith.constant 0 : index
    %c0_46 = arith.constant 0 : index
    %44 = vector.load %arg1[%c6, %c0_45, %c0_46] : memref<9x256x64xf32, #tpu.memory_space<vmem>>, vector<1x256x64xf32>
    %45 = vector.shape_cast %44 : vector<1x256x64xf32> to vector<256x64xf32>
    %cst_47 = arith.constant dense<0.000000e+00> : vector<6x64xf32>
    %46 = tpu.matmul %0, %45, %cst_47 {dimension_numbers = #tpu.dot_dimension_numbers<[1], [0], [0], [1], [0, 0, 1, 1], [], []>} : vector<6x256xf32>, vector<256x64xf32>, vector<6x64xf32> -> vector<6x64xf32>
    %c6_48 = arith.constant 6 : index
    %c0_49 = arith.constant 0 : index
    %c0_50 = arith.constant 0 : index
    %47 = vector.load %arg2[%c6_48, %c0_49, %c0_50] : memref<9x64x6xf32, #tpu.memory_space<vmem>>, vector<1x64x6xf32>
    %48 = vector.shape_cast %47 : vector<1x64x6xf32> to vector<64x6xf32>
    %cst_51 = arith.constant dense<0.000000e+00> : vector<64x64xf32>
    %49 = tpu.matmul %48, %46, %cst_51 {dimension_numbers = #tpu.dot_dimension_numbers<[1], [0], [0], [1], [0, 0, 1, 1], [], []>} : vector<64x6xf32>, vector<6x64xf32>, vector<64x64xf32> -> vector<64x64xf32>
    %50 = arith.addf %43, %49 : vector<64x64xf32>
    %c7 = arith.constant 7 : index
    %c0_52 = arith.constant 0 : index
    %c0_53 = arith.constant 0 : index
    %51 = vector.load %arg1[%c7, %c0_52, %c0_53] : memref<9x256x64xf32, #tpu.memory_space<vmem>>, vector<1x256x64xf32>
    %52 = vector.shape_cast %51 : vector<1x256x64xf32> to vector<256x64xf32>
    %cst_54 = arith.constant dense<0.000000e+00> : vector<6x64xf32>
    %53 = tpu.matmul %0, %52, %cst_54 {dimension_numbers = #tpu.dot_dimension_numbers<[1], [0], [0], [1], [0, 0, 1, 1], [], []>} : vector<6x256xf32>, vector<256x64xf32>, vector<6x64xf32> -> vector<6x64xf32>
    %c7_55 = arith.constant 7 : index
    %c0_56 = arith.constant 0 : index
    %c0_57 = arith.constant 0 : index
    %54 = vector.load %arg2[%c7_55, %c0_56, %c0_57] : memref<9x64x6xf32, #tpu.memory_space<vmem>>, vector<1x64x6xf32>
    %55 = vector.shape_cast %54 : vector<1x64x6xf32> to vector<64x6xf32>
    %cst_58 = arith.constant dense<0.000000e+00> : vector<64x64xf32>
    %56 = tpu.matmul %55, %53, %cst_58 {dimension_numbers = #tpu.dot_dimension_numbers<[1], [0], [0], [1], [0, 0, 1, 1], [], []>} : vector<64x6xf32>, vector<6x64xf32>, vector<64x64xf32> -> vector<64x64xf32>
    %57 = arith.addf %50, %56 : vector<64x64xf32>
    %c8 = arith.constant 8 : index
    %c0_59 = arith.constant 0 : index
    %c0_60 = arith.constant 0 : index
    %58 = vector.load %arg1[%c8, %c0_59, %c0_60] : memref<9x256x64xf32, #tpu.memory_space<vmem>>, vector<1x256x64xf32>
    %59 = vector.shape_cast %58 : vector<1x256x64xf32> to vector<256x64xf32>
    %cst_61 = arith.constant dense<0.000000e+00> : vector<6x64xf32>
    %60 = tpu.matmul %0, %59, %cst_61 {dimension_numbers = #tpu.dot_dimension_numbers<[1], [0], [0], [1], [0, 0, 1, 1], [], []>} : vector<6x256xf32>, vector<256x64xf32>, vector<6x64xf32> -> vector<6x64xf32>
    %c8_62 = arith.constant 8 : index
    %c0_63 = arith.constant 0 : index
    %c0_64 = arith.constant 0 : index
    %61 = vector.load %arg2[%c8_62, %c0_63, %c0_64] : memref<9x64x6xf32, #tpu.memory_space<vmem>>, vector<1x64x6xf32>
    %62 = vector.shape_cast %61 : vector<1x64x6xf32> to vector<64x6xf32>
    %cst_65 = arith.constant dense<0.000000e+00> : vector<64x64xf32>
    %63 = tpu.matmul %62, %60, %cst_65 {dimension_numbers = #tpu.dot_dimension_numbers<[1], [0], [0], [1], [0, 0, 1, 1], [], []>} : vector<64x6xf32>, vector<6x64xf32>, vector<64x64xf32> -> vector<64x64xf32>
    %64 = arith.addf %57, %63 : vector<64x64xf32>
    %cst_66 = arith.constant 0.000000e+00 : f32
    %65 = vector.broadcast %cst_66 : f32 to vector<64x64xf32>
    %66 = arith.maximumf %64, %65 : vector<64x64xf32>
    %c0_67 = arith.constant 0 : index
    %c0_68 = arith.constant 0 : index
    %67 = vector.load %arg4[%c0_67, %c0_68] : memref<288x64xf32, #tpu.memory_space<vmem>>, vector<288x64xf32>
    %cst_69 = arith.constant dense<0.000000e+00> : vector<288x64xf32>
    %68 = tpu.matmul %67, %66, %cst_69 {dimension_numbers = #tpu.dot_dimension_numbers<[1], [0], [0], [1], [0, 0, 1, 1], [], []>} : vector<288x64xf32>, vector<64x64xf32>, vector<288x64xf32> -> vector<288x64xf32>
    %c0_70 = arith.constant 0 : index
    %c0_71 = arith.constant 0 : index
    %69 = vector.load %arg5[%c0_70, %c0_71] : memref<288x1xf32, #tpu.memory_space<vmem>>, vector<288x1xf32>
    %70 = vector.broadcast %69 : vector<288x1xf32> to vector<288x64xf32>
    %71 = arith.addf %68, %70 : vector<288x64xf32>
    %c0_72 = arith.constant 0 : index
    %c0_73 = arith.constant 0 : index
    %72 = vector.load %arg6[%c0_72, %c0_73] : memref<64x32xf32, #tpu.memory_space<vmem>>, vector<64x32xf32>
    %cst_74 = arith.constant dense<0.000000e+00> : vector<288x32xf32>
    %73 = tpu.matmul %71, %72, %cst_74 {dimension_numbers = #tpu.dot_dimension_numbers<[1], [0], [0], [1], [0, 0, 1, 1], [], []>} : vector<288x64xf32>, vector<64x32xf32>, vector<288x32xf32> -> vector<288x32xf32>
    %c0_75 = arith.constant 0 : index
    %c0_76 = arith.constant 0 : index
    %74 = vector.load %arg7[%c0_75, %c0_76] : memref<1x32xf32, #tpu.memory_space<vmem>>, vector<1x32xf32>
    %75 = vector.broadcast %74 : vector<1x32xf32> to vector<288x32xf32>
    %76 = arith.addf %73, %75 : vector<288x32xf32>
    %cst_77 = arith.constant 0.000000e+00 : f32
    %77 = vector.broadcast %cst_77 : f32 to vector<288x32xf32>
    %78 = arith.maximumf %76, %77 : vector<288x32xf32>
    %c0_78 = arith.constant 0 : index
    %c0_79 = arith.constant 0 : index
    %79 = vector.load %arg8[%c0_78, %c0_79] : memref<32x64xf32, #tpu.memory_space<vmem>>, vector<32x64xf32>
    %cst_80 = arith.constant dense<0.000000e+00> : vector<288x64xf32>
    %80 = tpu.matmul %78, %79, %cst_80 {dimension_numbers = #tpu.dot_dimension_numbers<[1], [0], [0], [1], [0, 0, 1, 1], [], []>} : vector<288x32xf32>, vector<32x64xf32>, vector<288x64xf32> -> vector<288x64xf32>
    %c0_81 = arith.constant 0 : index
    %c0_82 = arith.constant 0 : index
    %81 = vector.load %arg9[%c0_81, %c0_82] : memref<1x64xf32, #tpu.memory_space<vmem>>, vector<1x64xf32>
    %82 = vector.broadcast %81 : vector<1x64xf32> to vector<288x64xf32>
    %83 = arith.addf %80, %82 : vector<288x64xf32>
    %84 = vector.extract_strided_slice %83 {offsets = [0, 0], sizes = [144, 64], strides = [1, 1]} : vector<288x64xf32> to vector<144x64xf32>
    %c0_83 = arith.constant 0 : index
    %c0_84 = arith.constant 0 : index
    %85 = vector.load %arg10[%c0_83, %c0_84] : memref<144x128xf32, #tpu.memory_space<vmem>>, vector<144x64xf32>
    tpu.vector_store %arg10[%c0_83, %c0_84], %84 {strides = array<i32>} : memref<144x128xf32, #tpu.memory_space<vmem>>, vector<144x64xf32>,
    %86 = vector.extract_strided_slice %83 {offsets = [144, 0], sizes = [144, 64], strides = [1, 1]} : vector<288x64xf32> to vector<144x64xf32>
    %c0_85 = arith.constant 0 : index
    %c64 = arith.constant 64 : index
    %87 = vector.load %arg10[%c0_85, %c64] : memref<144x128xf32, #tpu.memory_space<vmem>>, vector<144x64xf32>
    tpu.vector_store %arg10[%c0_85, %c64], %86 {strides = array<i32>} : memref<144x128xf32, #tpu.memory_space<vmem>>, vector<144x64xf32>,
    return
  }
}

</mosaic_0001>

<llo_original>
// kernel: dwpose_wrapper_forward.1
$region0: #{dwpose_wrapper_forward.1}
  #allocation0 [shape = 'u32[]', space=smem, size = 0x4, offset = 0x4, fixed_abs, tag = 'smem constant byte address 0x4 - core index']
  #allocation1 [shape = 'u32[144,128]{1,0:T(1,128)}', space=vmem, size = 0x12000, scoped, tag = 'internal scratch']
  %s0 = inlined_call_operand.vmem [shape: f32[6,256], index: 0, kind: input, shape index: {}]
  %s1 = inlined_call_operand.vmem [shape: f32[9,256,64], index: 1, kind: input, shape index: {}]
  %s2 = inlined_call_operand.vmem [shape: f32[9,64,6], index: 2, kind: input, shape index: {}]
  %s3 = inlined_call_operand.vmem [shape: f32[64,64], index: 3, kind: input, shape index: {}]
  %s4 = inlined_call_operand.vmem [shape: f32[288,64], index: 4, kind: input, shape index: {}]
  %s5 = inlined_call_operand.vmem [shape: f32[288,1], index: 5, kind: input, shape index: {}]
  %s6 = inlined_call_operand.vmem [shape: f32[64,32], index: 6, kind: input, shape index: {}]
  %s7 = inlined_call_operand.vmem [shape: f32[1,32], index: 7, kind: input, shape index: {}]
  %s8 = inlined_call_operand.vmem [shape: f32[32,64], index: 8, kind: input, shape index: {}]
  %s9 = inlined_call_operand.vmem [shape: f32[1,64], index: 9, kind: input, shape index: {}]
  %s10 = inlined_call_operand.vmem [shape: f32[144,128], index: 10, kind: output, shape index: {}]
  %s11 = sld [smem:[#allocation0]]
  $region50: #{dwpose_wrapper_forward.1} parent=0
    _
  %s13 = ssub.s32 1, %s11
  %s14 = scalar_select 0, %s13, %s11
  // Predicated region
  $region2: #{dwpose_wrapper_forward.1} parent=0 // pred_check
    _
  $region3: #{dwpose_wrapper_forward.1} parent=0 // pred_check_branch
    %16 = sbr.rel (0) target = $region5
  $region4: #{dwpose_wrapper_forward.1} parent=0 // pred_region
    _
  $region5: #{dwpose_wrapper_forward.1} parent=0 // pred_fallthru
    _
  // Predicated region
  $region6: #{dwpose_wrapper_forward.1} parent=0 // pred_check
    _
  $region7: #{dwpose_wrapper_forward.1} parent=0 // pred_check_branch
    %18 = sbr.rel (0) target = $region9
  $region8: #{dwpose_wrapper_forward.1} parent=0 // pred_region
    _
  $region9: #{dwpose_wrapper_forward.1} parent=0 // pred_fallthru
    _
  // Predicated region
  $region10: #{dwpose_wrapper_forward.1} parent=0 // pred_check
    _
  $region11: #{dwpose_wrapper_forward.1} parent=0 // pred_check_branch
    %20 = sbr.rel (0) target = $region13
  $region12: #{dwpose_wrapper_forward.1} parent=0 // pred_region
    _
  $region13: #{dwpose_wrapper_forward.1} parent=0 // pred_fallthru
    _
  // Predicated region
  $region14: #{dwpose_wrapper_forward.1} parent=0 // pred_check
    _
  $region15: #{dwpose_wrapper_forward.1} parent=0 // pred_check_branch
    %22 = sbr.rel (0) target = $region17
  $region16: #{dwpose_wrapper_forward.1} parent=0 // pred_region
    _
  $region17: #{dwpose_wrapper_forward.1} parent=0 // pred_fallthru
    _
  // Predicated region
  $region18: #{dwpose_wrapper_forward.1} parent=0 // pred_check
    _
  $region19: #{dwpose_wrapper_forward.1} parent=0 // pred_check_branch
    %24 = sbr.rel (0) target = $region21
  $region20: #{dwpose_wrapper_forward.1} parent=0 // pred_region
    _
  $region21: #{dwpose_wrapper_forward.1} parent=0 // pred_fallthru
    _
  // Predicated region
  $region22: #{dwpose_wrapper_forward.1} parent=0 // pred_check
    _
  $region23: #{dwpose_wrapper_forward.1} parent=0 // pred_check_branch
    %26 = sbr.rel (0) target = $region25
  $region24: #{dwpose_wrapper_forward.1} parent=0 // pred_region
    _
  $region25: #{dwpose_wrapper_forward.1} parent=0 // pred_fallthru
    _
  // Predicated region
  $region26: #{dwpose_wrapper_forward.1} parent=0 // pred_check
    _
  $region27: #{dwpose_wrapper_forward.1} parent=0 // pred_check_branch
    %28 = sbr.rel (0) target = $region29
  $region28: #{dwpose_wrapper_forward.1} parent=0 // pred_region
    _
  $region29: #{dwpose_wrapper_forward.1} parent=0 // pred_fallthru
    _
  // Predicated region
  $region30: #{dwpose_wrapper_forward.1} parent=0 // pred_check
    _
  $region31: #{dwpose_wrapper_forward.1} parent=0 // pred_check_branch
    %30 = sbr.rel (0) target = $region33
  $region32: #{dwpose_wrapper_forward.1} parent=0 // pred_region
    _
  $region33: #{dwpose_wrapper_forward.1} parent=0 // pred_fallthru
    _
  // Predicated region
  $region34: #{dwpose_wrapper_forward.1} parent=0 // pred_check
    _
  $region35: #{dwpose_wrapper_forward.1} parent=0 // pred_check_branch
    %32 = sbr.rel (0) target = $region37
  $region36: #{dwpose_wrapper_forward.1} parent=0 // pred_region
    _
  $region37: #{dwpose_wrapper_forward.1} parent=0 // pred_fallthru
    _
  // Predicated region
  $region38: #{dwpose_wrapper_forward.1} parent=0 // pred_check
    _
  $region39: #{dwpose_wrapper_forward.1} parent=0 // pred_check_branch
    %34 = sbr.rel (0) target = $region41
  $region40: #{dwpose_wrapper_forward.1} parent=0 // pred_region
    _
  $region41: #{dwpose_wrapper_forward.1} parent=0 // pred_fallthru
    _
  %v35 = vld [vmem:[%s0] sm:$0x3f]
  %v36 = vld [vmem:[%s0 + $0x8] sm:$0x3f]
  %v37 = vld [vmem:[%s3] sm:$0xff]
  %v38 = vld [vmem:[%s3 + $0x8] sm:$0xff]
  %v39 = vld [vmem:[%s3 + $0x10] sm:$0xff]
  %v40 = vld [vmem:[%s3 + $0x18] sm:$0xff]
  %v41 = vld [vmem:[%s3 + $0x20] sm:$0xff]
  %v42 = vld [vmem:[%s3 + $0x28] sm:$0xff]
  %v43 = vld [vmem:[%s3 + $0x30] sm:$0xff]
  %v44 = vld [vmem:[%s3 + $0x38] sm:$0xff]
  %v45 = vld [vmem:[%s1] sm:$0xff]
  %v46 = vld [vmem:[%s1 + $0x8] sm:$0xff]
  %v47 = vld [vmem:[%s1 + $0x10] sm:$0xff]
  %v48 = vld [vmem:[%s1 + $0x18] sm:$0xff]
  %v49 = vld [vmem:[%s1 + $0x20] sm:$0xff]
  %v50 = vld [vmem:[%s1 + $0x28] sm:$0xff]
  %v51 = vld [vmem:[%s1 + $0x30] sm:$0xff]
  %v52 = vld [vmem:[%s1 + $0x38] sm:$0xff]
  %v53 = vld [vmem:[%s1 + $0x40] sm:$0xff]
  %v54 = vld [vmem:[%s1 + $0x48] sm:$0xff]
  %v55 = vld [vmem:[%s1 + $0x50] sm:$0xff]
  %v56 = vld [vmem:[%s1 + $0x58] sm:$0xff]
  %v57 = vld [vmem:[%s1 + $0x60] sm:$0xff]
  %v58 = vld [vmem:[%s1 + $0x68] sm:$0xff]
  %v59 = vld [vmem:[%s1 + $0x70] sm:$0xff]
  %v60 = vld [vmem:[%s1 + $0x78] sm:$0xff]
  %v61 = vld [vmem:[%s1 + $0x80] sm:$0xff]
  %v62 = vld [vmem:[%s1 + $0x88] sm:$0xff]
  %v63 = vld [vmem:[%s1 + $0x90] sm:$0xff]
  %v64 = vld [vmem:[%s1 + $0x98] sm:$0xff]
  %v65 = vld [vmem:[%s1 + $0xa0] sm:$0xff]
  %v66 = vld [vmem:[%s1 + $0xa8] sm:$0xff]
  %v67 = vld [vmem:[%s1 + $0xb0] sm:$0xff]
  %v68 = vld [vmem:[%s1 + $0xb8] sm:$0xff]
  %v69 = vld [vmem:[%s1 + $0xc0] sm:$0xff]
  %v70 = vld [vmem:[%s1 + $0xc8] sm:$0xff]
  %v71 = vld [vmem:[%s1 + $0xd0] sm:$0xff]
  %v72 = vld [vmem:[%s1 + $0xd8] sm:$0xff]
  %v73 = vld [vmem:[%s1 + $0xe0] sm:$0xff]
  %v74 = vld [vmem:[%s1 + $0xe8] sm:$0xff]
  %v75 = vld [vmem:[%s1 + $0xf0] sm:$0xff]
  %v76 = vld [vmem:[%s1 + $0xf8] sm:$0xff]
  %77 = vmatprep.subr.mxu0 0.0
  %78 = vmatpush1.msra.mxu0 %v60
  %79 = vmatprep.subr.mxu0 0.0
  %80 = vmatpush1.msra.mxu0 %v59
  %81 = vmatprep.subr.mxu0 0.0
  %82 = vmatpush1.msra.mxu0 %v58
  %83 = vmatprep.subr.mxu0 0.0
  %84 = vmatpush1.msra.mxu0 %v57
  %85 = vmatprep.subr.mxu0 0.0
  %86 = vmatpush1.msra.mxu0 %v56
  %87 = vmatprep.subr.mxu0 0.0
  %88 = vmatpush1.msra.mxu0 %v55
  %89 = vmatprep.subr.mxu0 0.0
  %90 = vmatpush1.msra.mxu0 %v54
  %91 = vmatprep.subr.mxu0 0.0
  %92 = vmatpush1.msra.mxu0 %v53
  %93 = vmatprep.subr.mxu0 0.0
  %94 = vmatpush1.msra.mxu0 %v52
  %95 = vmatprep.subr.mxu0 0.0
  %96 = vmatpush1.msra.mxu0 %v51
  %97 = vmatprep.subr.mxu0 0.0
  %98 = vmatpush1.msra.mxu0 %v50
  %99 = vmatprep.subr.mxu0 0.0
  %100 = vmatpush1.msra.mxu0 %v49
  %101 = vmatprep.subr.mxu0 0.0
  %102 = vmatpush1.msra.mxu0 %v48
  %103 = vmatprep.subr.mxu0 0.0
  %104 = vmatpush1.msra.mxu0 %v47
  %105 = vmatprep.subr.mxu0 0.0
  %106 = vmatpush1.msra.mxu0 %v46
  %107 = vmatprep.subr.mxu0 0.0
  %108 = vmatpush1.msra.mxu0 %v45
  %109 = vmatprep.subr.mxu0 0.0
  %110 = vmatpush2.msra.mxu0 %v76
  %111 = vmatprep.subr.mxu0 0.0
  %112 = vmatpush2.msra.mxu0 %v75
  %113 = vmatprep.subr.mxu0 0.0
  %114 = vmatpush2.msra.mxu0 %v74
  %115 = vmatprep.subr.mxu0 0.0
  %116 = vmatpush2.msra.mxu0 %v73
  %117 = vmatprep.subr.mxu0 0.0
  %118 = vmatpush2.msra.mxu0 %v72
  %119 = vmatprep.subr.mxu0 0.0
  %120 = vmatpush2.msra.mxu0 %v71
  %121 = vmatprep.subr.mxu0 0.0
  %122 = vmatpush2.msra.mxu0 %v70
  %123 = vmatprep.subr.mxu0 0.0
  %124 = vmatpush2.msra.mxu0 %v69
  %125 = vmatprep.subr.mxu0 0.0
  %126 = vmatpush2.msra.mxu0 %v68
  %127 = vmatprep.subr.mxu0 0.0
  %128 = vmatpush2.msra.mxu0 %v67
  %129 = vmatprep.subr.mxu0 0.0
  %130 = vmatpush2.msra.mxu0 %v66
  %131 = vmatprep.subr.mxu0 0.0
  %132 = vmatpush2.msra.mxu0 %v65
  %133 = vmatprep.subr.mxu0 0.0
  %134 = vmatpush2.msra.mxu0 %v64
  %135 = vmatprep.subr.mxu0 0.0
  %136 = vmatpush2.msra.mxu0 %v63
  %137 = vmatprep.subr.mxu0 0.0
  %138 = vmatpush2.msra.mxu0 %v62
  %139 = vmatprep.subr.mxu0 0.0
  %140 = vmatpush2.msra.mxu0 %v61
  %141 = vmatprep.mubr.f32.mxu0 %v36
  %142 = vmatmul.mubr.f32.gmra.mxu0 %v35
  %v143 = vpop.f32.mrf.mxu0
  %v144 = vadd.f32 0.0, %v143
  %v145 = vpop.f32.mrf.mxu0
  %146 = vdwg.mxu0
  %v147 = vld [vmem:[%s2] sm:$0xff]
  %v148 = vld [vmem:[%s2 + $0x8] sm:$0xff]
  %v149 = vld [vmem:[%s2 + $0x10] sm:$0xff]
  %v150 = vld [vmem:[%s2 + $0x18] sm:$0xff]
  %v151 = vld [vmem:[%s2 + $0x20] sm:$0xff]
  %v152 = vld [vmem:[%s2 + $0x28] sm:$0xff]
  %v153 = vld [vmem:[%s2 + $0x30] sm:$0xff]
  %v154 = vld [vmem:[%s2 + $0x38] sm:$0xff]
  %vm155 = vcmask 48128
  %v157 = vsel %vm155, %v147, 0
  %v160 = vsel %vm155, %v148, 0
  %v163 = vsel %vm155, %v149, 0
  %v166 = vsel %vm155, %v150, 0
  %v169 = vsel %vm155, %v151, 0
  %v172 = vsel %vm155, %v152, 0
  %v175 = vsel %vm155, %v153, 0
  %v178 = vsel %vm155, %v154, 0
  %vm180 = vcmask 1045504
  %v182 = vsel %vm180, %v144, 0
  %184 = vmatprep.subr.mxu0 0.0
  %185 = vmatpush1.msra.mxu0 0.0
  %186 = vmatprep.subr.mxu0 0.0
  %187 = vmatpush1.msra.mxu0 0.0
  %188 = vmatprep.subr.mxu0 0.0
  %189 = vmatpush1.msra.mxu0 0.0
  %190 = vmatprep.subr.mxu0 0.0
  %191 = vmatpush1.msra.mxu0 0.0
  %192 = vmatprep.subr.mxu0 0.0
  %193 = vmatpush1.msra.mxu0 0.0
  %194 = vmatprep.subr.mxu0 0.0
  %195 = vmatpush1.msra.mxu0 0.0
  %196 = vmatprep.subr.mxu0 0.0
  %197 = vmatpush1.msra.mxu0 0.0
  %198 = vmatprep.subr.mxu0 0.0
  %199 = vmatpush1.msra.mxu0 0.0
  %200 = vmatprep.subr.mxu0 0.0
  %201 = vmatpush1.msra.mxu0 0.0
  %202 = vmatprep.subr.mxu0 0.0
  %203 = vmatpush1.msra.mxu0 0.0
  %204 = vmatprep.subr.mxu0 0.0
  %205 = vmatpush1.msra.mxu0 0.0
  %206 = vmatprep.subr.mxu0 0.0
  %207 = vmatpush1.msra.mxu0 0.0
  %208 = vmatprep.subr.mxu0 0.0
  %209 = vmatpush1.msra.mxu0 0.0
  %210 = vmatprep.subr.mxu0 0.0
  %211 = vmatpush1.msra.mxu0 0.0
  %212 = vmatprep.subr.mxu0 0.0
  %213 = vmatpush1.msra.mxu0 0.0
  %214 = vmatprep.subr.mxu0 0.0
  %215 = vmatpush1.msra.mxu0 %v182
  %216 = vmatprep.subr.mxu0 0.0
  %217 = vmatpush2.msra.mxu0 0.0
  %218 = vmatprep.subr.mxu0 0.0
  %219 = vmatpush2.msra.mxu0 0.0
  %220 = vmatprep.subr.mxu0 0.0
  %221 = vmatpush2.msra.mxu0 0.0
  %222 = vmatprep.subr.mxu0 0.0
  %223 = vmatpush2.msra.mxu0 0.0
  %224 = vmatprep.subr.mxu0 0.0
  %225 = vmatpush2.msra.mxu0 0.0
  %226 = vmatprep.subr.mxu0 0.0
  %227 = vmatpush2.msra.mxu0 0.0
  %228 = vmatprep.subr.mxu0 0.0
  %229 = vmatpush2.msra.mxu0 0.0
  %230 = vmatprep.subr.mxu0 0.0
  %231 = vmatpush2.msra.mxu0 0.0
  %232 = vmatprep.subr.mxu0 0.0
  %233 = vmatpush2.msra.mxu0 0.0
  %234 = vmatprep.subr.mxu0 0.0
  %235 = vmatpush2.msra.mxu0 0.0
  %236 = vmatprep.subr.mxu0 0.0
  %237 = vmatpush2.msra.mxu0 0.0
  %238 = vmatprep.subr.mxu0 0.0
  %239 = vmatpush2.msra.mxu0 0.0
  %240 = vmatprep.subr.mxu0 0.0
  %241 = vmatpush2.msra.mxu0 0.0
  %242 = vmatprep.subr.mxu0 0.0
  %243 = vmatpush2.msra.mxu0 0.0
  %244 = vmatprep.subr.mxu0 0.0
  %245 = vmatpush2.msra.mxu0 0.0
  %246 = vmatprep.subr.mxu0 0.0
  %247 = vmatpush2.msra.mxu0 0.0
  %248 = vmatprep.mubr.f32.mxu0 0.0
  %249 = vmatmul.mubr.f32.gmra.mxu0 %v157
  %v250 = vpop.f32.mrf.mxu0
  %v251 = vadd.f32 0.0, %v250
  %v252 = vpop.f32.mrf.mxu0
  %253 = vmatprep.mubr.f32.mxu0 0.0
  %254 = vmatmul.mubr.f32.gmra.mxu0 %v160
  %v255 = vpop.f32.mrf.mxu0
  %v256 = vadd.f32 0.0, %v255
  %v257 = vpop.f32.mrf.mxu0
  %258 = vmatprep.mubr.f32.mxu0 0.0
  %259 = vmatmul.mubr.f32.gmra.mxu0 %v163
  %v260 = vpop.f32.mrf.mxu0
  %v261 = vadd.f32 0.0, %v260
  %v262 = vpop.f32.mrf.mxu0
  %263 = vmatprep.mubr.f32.mxu0 0.0
  %264 = vmatmul.mubr.f32.gmra.mxu0 %v166
  %v265 = vpop.f32.mrf.mxu0
  %v266 = vadd.f32 0.0, %v265
  %v267 = vpop.f32.mrf.mxu0
  %268 = vmatprep.mubr.f32.mxu0 0.0
  %269 = vmatmul.mubr.f32.gmra.mxu0 %v169
  %v270 = vpop.f32.mrf.mxu0
  %v271 = vadd.f32 0.0, %v270
  %v272 = vpop.f32.mrf.mxu0
  %273 = vmatprep.mubr.f32.mxu0 0.0
  %274 = vmatmul.mubr.f32.gmra.mxu0 %v172
  %v275 = vpop.f32.mrf.mxu0
  %v276 = vadd.f32 0.0, %v275
  %v277 = vpop.f32.mrf.mxu0
  %278 = vmatprep.mubr.f32.mxu0 0.0
  %279 = vmatmul.mubr.f32.gmra.mxu0 %v175
  %v280 = vpop.f32.mrf.mxu0
  %v281 = vadd.f32 0.0, %v280
  %v282 = vpop.f32.mrf.mxu0
  %283 = vmatprep.mubr.f32.mxu0 0.0
  %284 = vmatmul.mubr.f32.gmra.mxu0 %v178
  %v285 = vpop.f32.mrf.mxu0
  %v286 = vadd.f32 0.0, %v285
  %v287 = vpop.f32.mrf.mxu0
  %288 = vdwg.mxu0
  %v289 = vadd.f32 %v37, %v251
  %v290 = vadd.f32 %v38, %v256
  %v291 = vadd.f32 %v39, %v261
  %v292 = vadd.f32 %v40, %v266
  %v293 = vadd.f32 %v41, %v271
  %v294 = vadd.f32 %v42, %v276
  %v295 = vadd.f32 %v43, %v281
  %v296 = vadd.f32 %v44, %v286
  %s297 = scalar_lea.vmem %s1, 256
  %v298 = vld [vmem:[%s297] sm:$0xff]
  %v299 = vld [vmem:[%s297 + $0x8] sm:$0xff]
  %v300 = vld [vmem:[%s297 + $0x10] sm:$0xff]
  %v301 = vld [vmem:[%s297 + $0x18] sm:$0xff]
  %v302 = vld [vmem:[%s297 + $0x20] sm:$0xff]
  %v303 = vld [vmem:[%s297 + $0x28] sm:$0xff]
  %v304 = vld [vmem:[%s297 + $0x30] sm:$0xff]
  %v305 = vld [vmem:[%s297 + $0x38] sm:$0xff]
  %v306 = vld [vmem:[%s297 + $0x40] sm:$0xff]
  %v307 = vld [vmem:[%s297 + $0x48] sm:$0xff]
  %v308 = vld [vmem:[%s297 + $0x50] sm:$0xff]
  %v309 = vld [vmem:[%s297 + $0x58] sm:$0xff]
  %v310 = vld [vmem:[%s297 + $0x60] sm:$0xff]
  %v311 = vld [vmem:[%s297 + $0x68] sm:$0xff]
  %v312 = vld [vmem:[%s297 + $0x70] sm:$0xff]
  %v313 = vld [vmem:[%s297 + $0x78] sm:$0xff]
  %v314 = vld [vmem:[%s297 + $0x80] sm:$0xff]
  %v315 = vld [vmem:[%s297 + $0x88] sm:$0xff]
  %v316 = vld [vmem:[%s297 + $0x90] sm:$0xff]
  %v317 = vld [vmem:[%s297 + $0x98] sm:$0xff]
  %v318 = vld [vmem:[%s297 + $0xa0] sm:$0xff]
  %v319 = vld [vmem:[%s297 + $0xa8] sm:$0xff]
  %v320 = vld [vmem:[%s297 + $0xb0] sm:$0xff]
  %v321 = vld [vmem:[%s297 + $0xb8] sm:$0xff]
  %v322 = vld [vmem:[%s297 + $0xc0] sm:$0xff]
  %v323 = vld [vmem:[%s297 + $0xc8] sm:$0xff]
  %v324 = vld [vmem:[%s297 + $0xd0] sm:$0xff]
  %v325 = vld [vmem:[%s297 + $0xd8] sm:$0xff]
  %v326 = vld [vmem:[%s297 + $0xe0] sm:$0xff]
  %v327 = vld [vmem:[%s297 + $0xe8] sm:$0xff]
  %v328 = vld [vmem:[%s297 + $0xf0] sm:$0xff]
  %v329 = vld [vmem:[%s297 + $0xf8] sm:$0xff]
  %330 = vmatprep.subr.mxu0 0.0
  %331 = vmatpush1.msra.mxu0 %v313
  %332 = vmatprep.subr.mxu0 0.0
  %333 = vmatpush1.msra.mxu0 %v312
  %334 = vmatprep.subr.mxu0 0.0
  %335 = vmatpush1.msra.mxu0 %v311
  %336 = vmatprep.subr.mxu0 0.0
  %337 = vmatpush1.msra.mxu0 %v310
  %338 = vmatprep.subr.mxu0 0.0
  %339 = vmatpush1.msra.mxu0 %v309
  %340 = vmatprep.subr.mxu0 0.0
  %341 = vmatpush1.msra.mxu0 %v308
  %342 = vmatprep.subr.mxu0 0.0
  %343 = vmatpush1.msra.mxu0 %v307
  %344 = vmatprep.subr.mxu0 0.0
  %345 = vmatpush1.msra.mxu0 %v306
  %346 = vmatprep.subr.mxu0 0.0
  %347 = vmatpush1.msra.mxu0 %v305
  %348 = vmatprep.subr.mxu0 0.0
  %349 = vmatpush1.msra.mxu0 %v304
  %350 = vmatprep.subr.mxu0 0.0
  %351 = vmatpush1.msra.mxu0 %v303
  %352 = vmatprep.subr.mxu0 0.0
  %353 = vmatpush1.msra.mxu0 %v302
  %354 = vmatprep.subr.mxu0 0.0
  %355 = vmatpush1.msra.mxu0 %v301
  %356 = vmatprep.subr.mxu0 0.0
  %357 = vmatpush1.msra.mxu0 %v300
  %358 = vmatprep.subr.mxu0 0.0
  %359 = vmatpush1.msra.mxu0 %v299
  %360 = vmatprep.subr.mxu0 0.0
  %361 = vmatpush1.msra.mxu0 %v298
  %362 = vmatprep.subr.mxu0 0.0
  %363 = vmatpush2.msra.mxu0 %v329
  %364 = vmatprep.subr.mxu0 0.0
  %365 = vmatpush2.msra.mxu0 %v328
  %366 = vmatprep.subr.mxu0 0.0
  %367 = vmatpush2.msra.mxu0 %v327
  %368 = vmatprep.subr.mxu0 0.0
  %369 = vmatpush2.msra.mxu0 %v326
  %370 = vmatprep.subr.mxu0 0.0
  %371 = vmatpush2.msra.mxu0 %v325
  %372 = vmatprep.subr.mxu0 0.0
  %373 = vmatpush2.msra.mxu0 %v324
  %374 = vmatprep.subr.mxu0 0.0
  %375 = vmatpush2.msra.mxu0 %v323
  %376 = vmatprep.subr.mxu0 0.0
  %377 = vmatpush2.msra.mxu0 %v322
  %378 = vmatprep.subr.mxu0 0.0
  %379 = vmatpush2.msra.mxu0 %v321
  %380 = vmatprep.subr.mxu0 0.0
  %381 = vmatpush2.msra.mxu0 %v320
  %382 = vmatprep.subr.mxu0 0.0
  %383 = vmatpush2.msra.mxu0 %v319
  %384 = vmatprep.subr.mxu0 0.0
  %385 = vmatpush2.msra.mxu0 %v318
  %386 = vmatprep.subr.mxu0 0.0
  %387 = vmatpush2.msra.mxu0 %v317
  %388 = vmatprep.subr.mxu0 0.0
  %389 = vmatpush2.msra.mxu0 %v316
  %390 = vmatprep.subr.mxu0 0.0
  %391 = vmatpush2.msra.mxu0 %v315
  %392 = vmatprep.subr.mxu0 0.0
  %393 = vmatpush2.msra.mxu0 %v314
  %394 = vmatprep.mubr.f32.mxu0 %v36
  %395 = vmatmul.mubr.f32.gmra.mxu0 %v35
  %v396 = vpop.f32.mrf.mxu0
  %v397 = vadd.f32 0.0, %v396
  %v398 = vpop.f32.mrf.mxu0
  %399 = vdwg.mxu0
  %s400 = scalar_lea.vmem %s2, 64
  %v401 = vld [vmem:[%s400] sm:$0xff]
  %v402 = vld [vmem:[%s400 + $0x8] sm:$0xff]
  %v403 = vld [vmem:[%s400 + $0x10] sm:$0xff]
  %v404 = vld [vmem:[%s400 + $0x18] sm:$0xff]
  %v405 = vld [vmem:[%s400 + $0x20] sm:$0xff]
  %v406 = vld [vmem:[%s400 + $0x28] sm:$0xff]
  %v407 = vld [vmem:[%s400 + $0x30] sm:$0xff]
  %v408 = vld [vmem:[%s400 + $0x38] sm:$0xff]
  %v410 = vsel %vm155, %v401, 0
  %v413 = vsel %vm155, %v402, 0
  %v416 = vsel %vm155, %v403, 0
  %v419 = vsel %vm155, %v404, 0
  %v422 = vsel %vm155, %v405, 0
  %v425 = vsel %vm155, %v406, 0
  %v428 = vsel %vm155, %v407, 0
  %v431 = vsel %vm155, %v408, 0
  %v434 = vsel %vm180, %v397, 0
  %436 = vmatprep.subr.mxu0 0.0
  %437 = vmatpush1.msra.mxu0 0.0
  %438 = vmatprep.subr.mxu0 0.0
  %439 = vmatpush1.msra.mxu0 0.0
  %440 = vmatprep.subr.mxu0 0.0
  %441 = vmatpush1.msra.mxu0 0.0
  %442 = vmatprep.subr.mxu0 0.0
  %443 = vmatpush1.msra.mxu0 0.0
  %444 = vmatprep.subr.mxu0 0.0
  %445 = vmatpush1.msra.mxu0 0.0
  %446 = vmatprep.subr.mxu0 0.0
  %447 = vmatpush1.msra.mxu0 0.0
  %448 = vmatprep.subr.mxu0 0.0
  %449 = vmatpush1.msra.mxu0 0.0
  %450 = vmatprep.subr.mxu0 0.0
  %451 = vmatpush1.msra.mxu0 0.0
  %452 = vmatprep.subr.mxu0 0.0
  %453 = vmatpush1.msra.mxu0 0.0
  %454 = vmatprep.subr.mxu0 0.0
  %455 = vmatpush1.msra.mxu0 0.0
  %456 = vmatprep.subr.mxu0 0.0
  %457 = vmatpush1.msra.mxu0 0.0
  %458 = vmatprep.subr.mxu0 0.0
  %459 = vmatpush1.msra.mxu0 0.0
  %460 = vmatprep.subr.mxu0 0.0
  %461 = vmatpush1.msra.mxu0 0.0
  %462 = vmatprep.subr.mxu0 0.0
  %463 = vmatpush1.msra.mxu0 0.0
  %464 = vmatprep.subr.mxu0 0.0
  %465 = vmatpush1.msra.mxu0 0.0
  %466 = vmatprep.subr.mxu0 0.0
  %467 = vmatpush1.msra.mxu0 %v434
  %468 = vmatprep.subr.mxu0 0.0
  %469 = vmatpush2.msra.mxu0 0.0
  %470 = vmatprep.subr.mxu0 0.0
  %471 = vmatpush2.msra.mxu0 0.0
  %472 = vmatprep.subr.mxu0 0.0
  %473 = vmatpush2.msra.mxu0 0.0
  %474 = vmatprep.subr.mxu0 0.0
  %475 = vmatpush2.msra.mxu0 0.0
  %476 = vmatprep.subr.mxu0 0.0
  %477 = vmatpush2.msra.mxu0 0.0
  %478 = vmatprep.subr.mxu0 0.0
  %479 = vmatpush2.msra.mxu0 0.0
  %480 = vmatprep.subr.mxu0 0.0
  %481 = vmatpush2.msra.mxu0 0.0
  %482 = vmatprep.subr.mxu0 0.0
  %483 = vmatpush2.msra.mxu0 0.0
  %484 = vmatprep.subr.mxu0 0.0
  %485 = vmatpush2.msra.mxu0 0.0
  %486 = vmatprep.subr.mxu0 0.0
  %487 = vmatpush2.msra.mxu0 0.0
  %488 = vmatprep.subr.mxu0 0.0
  %489 = vmatpush2.msra.mxu0 0.0
  %490 = vmatprep.subr.mxu0 0.0
  %491 = vmatpush2.msra.mxu0 0.0
  %492 = vmatprep.subr.mxu0 0.0
  %493 = vmatpush2.msra.mxu0 0.0
  %494 = vmatprep.subr.mxu0 0.0
  %495 = vmatpush2.msra.mxu0 0.0
  %496 = vmatprep.subr.mxu0 0.0
  %497 = vmatpush2.msra.mxu0 0.0
  %498 = vmatprep.subr.mxu0 0.0
  %499 = vmatpush2.msra.mxu0 0.0
  %500 = vmatprep.mubr.f32.mxu0 0.0
  %501 = vmatmul.mubr.f32.gmra.mxu0 %v410
  %v502 = vpop.f32.mrf.mxu0
  %v503 = vadd.f32 0.0, %v502
  %v504 = vpop.f32.mrf.mxu0
  %505 = vmatprep.mubr.f32.mxu0 0.0
  %506 = vmatmul.mubr.f32.gmra.mxu0 %v413
  %v507 = vpop.f32.mrf.mxu0
  %v508 = vadd.f32 0.0, %v507
  %v509 = vpop.f32.mrf.mxu0
  %510 = vmatprep.mubr.f32.mxu0 0.0
  %511 = vmatmul.mubr.f32.gmra.mxu0 %v416
  %v512 = vpop.f32.mrf.mxu0
  %v513 = vadd.f32 0.0, %v512
  %v514 = vpop.f32.mrf.mxu0
  %515 = vmatprep.mubr.f32.mxu0 0.0
  %516 = vmatmul.mubr.f32.gmra.mxu0 %v419
  %v517 = vpop.f32.mrf.mxu0
  %v518 = vadd.f32 0.0, %v517
  %v519 = vpop.f32.mrf.mxu0
  %520 = vmatprep.mubr.f32.mxu0 0.0
  %521 = vmatmul.mubr.f32.gmra.mxu0 %v422
  %v522 = vpop.f32.mrf.mxu0
  %v523 = vadd.f32 0.0, %v522
  %v524 = vpop.f32.mrf.mxu0
  %525 = vmatprep.mubr.f32.mxu0 0.0
  %526 = vmatmul.mubr.f32.gmra.mxu0 %v425
  %v527 = vpop.f32.mrf.mxu0
  %v528 = vadd.f32 0.0, %v527
  %v529 = vpop.f32.mrf.mxu0
  %530 = vmatprep.mubr.f32.mxu0 0.0
  %531 = vmatmul.mubr.f32.gmra.mxu0 %v428
  %v532 = vpop.f32.mrf.mxu0
  %v533 = vadd.f32 0.0, %v532
  %v534 = vpop.f32.mrf.mxu0
  %535 = vmatprep.mubr.f32.mxu0 0.0
  %536 = vmatmul.mubr.f32.gmra.mxu0 %v431
  %v537 = vpop.f32.mrf.mxu0
  %v538 = vadd.f32 0.0, %v537
  %v539 = vpop.f32.mrf.mxu0
  %540 = vdwg.mxu0
  %v541 = vadd.f32 %v289, %v503
  %v542 = vadd.f32 %v290, %v508
  %v543 = vadd.f32 %v291, %v513
  %v544 = vadd.f32 %v292, %v518
  %v545 = vadd.f32 %v293, %v523
  %v546 = vadd.f32 %v294, %v528
  %v547 = vadd.f32 %v295, %v533
  %v548 = vadd.f32 %v296, %v538
  %s549 = scalar_lea.vmem %s1, 512
  %v550 = vld [vmem:[%s549] sm:$0xff]
  %v551 = vld [vmem:[%s549 + $0x8] sm:$0xff]
  %v552 = vld [vmem:[%s549 + $0x10] sm:$0xff]
  %v553 = vld [vmem:[%s549 + $0x18] sm:$0xff]
  %v554 = vld [vmem:[%s549 + $0x20] sm:$0xff]
  %v555 = vld [vmem:[%s549 + $0x28] sm:$0xff]
  %v556 = vld [vmem:[%s549 + $0x30] sm:$0xff]
  %v557 = vld [vmem:[%s549 + $0x38] sm:$0xff]
  %v558 = vld [vmem:[%s549 + $0x40] sm:$0xff]
  %v559 = vld [vmem:[%s549 + $0x48] sm:$0xff]
  %v560 = vld [vmem:[%s549 + $0x50] sm:$0xff]
  %v561 = vld [vmem:[%s549 + $0x58] sm:$0xff]
  %v562 = vld [vmem:[%s549 + $0x60] sm:$0xff]
  %v563 = vld [vmem:[%s549 + $0x68] sm:$0xff]
  %v564 = vld [vmem:[%s549 + $0x70] sm:$0xff]
  %v565 = vld [vmem:[%s549 + $0x78] sm:$0xff]
  %v566 = vld [vmem:[%s549 + $0x80] sm:$0xff]
  %v567 = vld [vmem:[%s549 + $0x88] sm:$0xff]
  %v568 = vld [vmem:[%s549 + $0x90] sm:$0xff]
  %v569 = vld [vmem:[%s549 + $0x98] sm:$0xff]
  %v570 = vld [vmem:[%s549 + $0xa0] sm:$0xff]
  %v571 = vld [vmem:[%s549 + $0xa8] sm:$0xff]
  %v572 = vld [vmem:[%s549 + $0xb0] sm:$0xff]
  %v573 = vld [vmem:[%s549 + $0xb8] sm:$0xff]
  %v574 = vld [vmem:[%s549 + $0xc0] sm:$0xff]
  %v575 = vld [vmem:[%s549 + $0xc8] sm:$0xff]
  %v576 = vld [vmem:[%s549 + $0xd0] sm:$0xff]
  %v577 = vld [vmem:[%s549 + $0xd8] sm:$0xff]
  %v578 = vld [vmem:[%s549 + $0xe0] sm:$0xff]
  %v579 = vld [vmem:[%s549 + $0xe8] sm:$0xff]
  %v580 = vld [vmem:[%s549 + $0xf0] sm:$0xff]
  %v581 = vld [vmem:[%s549 + $0xf8] sm:$0xff]
  %582 = vmatprep.subr.mxu0 0.0
  %583 = vmatpush1.msra.mxu0 %v565
  %584 = vmatprep.subr.mxu0 0.0
  %585 = vmatpush1.msra.mxu0 %v564
  %586 = vmatprep.subr.mxu0 0.0
  %587 = vmatpush1.msra.mxu0 %v563
  %588 = vmatprep.subr.mxu0 0.0
  %589 = vmatpush1.msra.mxu0 %v562
  %590 = vmatprep.subr.mxu0 0.0
  %591 = vmatpush1.msra.mxu0 %v561
  %592 = vmatprep.subr.mxu0 0.0
  %593 = vmatpush1.msra.mxu0 %v560
  %594 = vmatprep.subr.mxu0 0.0
  %595 = vmatpush1.msra.mxu0 %v559
  %596 = vmatprep.subr.mxu0 0.0
  %597 = vmatpush1.msra.mxu0 %v558
  %598 = vmatprep.subr.mxu0 0.0
  %599 = vmatpush1.msra.mxu0 %v557
  %600 = vmatprep.subr.mxu0 0.0
  %601 = vmatpush1.msra.mxu0 %v556
  %602 = vmatprep.subr.mxu0 0.0
  %603 = vmatpush1.msra.mxu0 %v555
  %604 = vmatprep.subr.mxu0 0.0
  %605 = vmatpush1.msra.mxu0 %v554
  %606 = vmatprep.subr.mxu0 0.0
  %607 = vmatpush1.msra.mxu0 %v553
  %608 = vmatprep.subr.mxu0 0.0
  %609 = vmatpush1.msra.mxu0 %v552
  %610 = vmatprep.subr.mxu0 0.0
  %611 = vmatpush1.msra.mxu0 %v551
  %612 = vmatprep.subr.mxu0 0.0
  %613 = vmatpush1.msra.mxu0 %v550
  %614 = vmatprep.subr.mxu0 0.0
  %615 = vmatpush2.msra.mxu0 %v581
  %616 = vmatprep.subr.mxu0 0.0
  %617 = vmatpush2.msra.mxu0 %v580
  %618 = vmatprep.subr.mxu0 0.0
  %619 = vmatpush2.msra.mxu0 %v579
  %620 = vmatprep.subr.mxu0 0.0
  %621 = vmatpush2.msra.mxu0 %v578
  %622 = vmatprep.subr.mxu0 0.0
  %623 = vmatpush2.msra.mxu0 %v577
  %624 = vmatprep.subr.mxu0 0.0
  %625 = vmatpush2.msra.mxu0 %v576
  %626 = vmatprep.subr.mxu0 0.0
  %627 = vmatpush2.msra.mxu0 %v575
  %628 = vmatprep.subr.mxu0 0.0
  %629 = vmatpush2.msra.mxu0 %v574
  %630 = vmatprep.subr.mxu0 0.0
  %631 = vmatpush2.msra.mxu0 %v573
  %632 = vmatprep.subr.mxu0 0.0
  %633 = vmatpush2.msra.mxu0 %v572
  %634 = vmatprep.subr.mxu0 0.0
  %635 = vmatpush2.msra.mxu0 %v571
  %636 = vmatprep.subr.mxu0 0.0
  %637 = vmatpush2.msra.mxu0 %v570
  %638 = vmatprep.subr.mxu0 0.0
  %639 = vmatpush2.msra.mxu0 %v569
  %640 = vmatprep.subr.mxu0 0.0
  %641 = vmatpush2.msra.mxu0 %v568
  %642 = vmatprep.subr.mxu0 0.0
  %643 = vmatpush2.msra.mxu0 %v567
  %644 = vmatprep.subr.mxu0 0.0
  %645 = vmatpush2.msra.mxu0 %v566
  %646 = vmatprep.mubr.f32.mxu0 %v36
  %647 = vmatmul.mubr.f32.gmra.mxu0 %v35
  %v648 = vpop.f32.mrf.mxu0
  %v649 = vadd.f32 0.0, %v648
  %v650 = vpop.f32.mrf.mxu0
  %651 = vdwg.mxu0
  %s652 = scalar_lea.vmem %s2, 128
  %v653 = vld [vmem:[%s652] sm:$0xff]
  %v654 = vld [vmem:[%s652 + $0x8] sm:$0xff]
  %v655 = vld [vmem:[%s652 + $0x10] sm:$0xff]
  %v656 = vld [vmem:[%s652 + $0x18] sm:$0xff]
  %v657 = vld [vmem:[%s652 + $0x20] sm:$0xff]
  %v658 = vld [vmem:[%s652 + $0x28] sm:$0xff]
  %v659 = vld [vmem:[%s652 + $0x30] sm:$0xff]
  %v660 = vld [vmem:[%s652 + $0x38] sm:$0xff]
  %v662 = vsel %vm155, %v653, 0
  %v665 = vsel %vm155, %v654, 0
  %v668 = vsel %vm155, %v655, 0
  %v671 = vsel %vm155, %v656, 0
  %v674 = vsel %vm155, %v657, 0
  %v677 = vsel %vm155, %v658, 0
  %v680 = vsel %vm155, %v659, 0
  %v683 = vsel %vm155, %v660, 0
  %v686 = vsel %vm180, %v649, 0
  %688 = vmatprep.subr.mxu0 0.0
  %689 = vmatpush1.msra.mxu0 0.0
  %690 = vmatprep.subr.mxu0 0.0
  %691 = vmatpush1.msra.mxu0 0.0
  %692 = vmatprep.subr.mxu0 0.0
  %693 = vmatpush1.msra.mxu0 0.0
  %694 = vmatprep.subr.mxu0 0.0
  %695 = vmatpush1.msra.mxu0 0.0
  %696 = vmatprep.subr.mxu0 0.0
  %697 = vmatpush1.msra.mxu0 0.0
  %698 = vmatprep.subr.mxu0 0.0
  %699 = vmatpush1.msra.mxu0 0.0
  %700 = vmatprep.subr.mxu0 0.0
  %701 = vmatpush1.msra.mxu0 0.0
  %702 = vmatprep.subr.mxu0 0.0
  %703 = vmatpush1.msra.mxu0 0.0
  %704 = vmatprep.subr.mxu0 0.0
  %705 = vmatpush1.msra.mxu0 0.0
  %706 = vmatprep.subr.mxu0 0.0
  %707 = vmatpush1.msra.mxu0 0.0
  %708 = vmatprep.subr.mxu0 0.0
  %709 = vmatpush1.msra.mxu0 0.0
  %710 = vmatprep.subr.mxu0 0.0
  %711 = vmatpush1.msra.mxu0 0.0
  %712 = vmatprep.subr.mxu0 0.0
  %713 = vmatpush1.msra.mxu0 0.0
  %714 = vmatprep.subr.mxu0 0.0
  %715 = vmatpush1.msra.mxu0 0.0
  %716 = vmatprep.subr.mxu0 0.0
  %717 = vmatpush1.msra.mxu0 0.0
  %718 = vmatprep.subr.mxu0 0.0
  %719 = vmatpush1.msra.mxu0 %v686
  %720 = vmatprep.subr.mxu0 0.0
  %721 = vmatpush2.msra.mxu0 0.0
  %722 = vmatprep.subr.mxu0 0.0
  %723 = vmatpush2.msra.mxu0 0.0
  %724 = vmatprep.subr.mxu0 0.0
  %725 = vmatpush2.msra.mxu0 0.0
  %726 = vmatprep.subr.mxu0 0.0
  %727 = vmatpush2.msra.mxu0 0.0
  %728 = vmatprep.subr.mxu0 0.0
  %729 = vmatpush2.msra.mxu0 0.0
  %730 = vmatprep.subr.mxu0 0.0
  %731 = vmatpush2.msra.mxu0 0.0
  %732 = vmatprep.subr.mxu0 0.0
  %733 = vmatpush2.msra.mxu0 0.0
  %734 = vmatprep.subr.mxu0 0.0
  %735 = vmatpush2.msra.mxu0 0.0
  %736 = vmatprep.subr.mxu0 0.0
  %737 = vmatpush2.msra.mxu0 0.0
  %738 = vmatprep.subr.mxu0 0.0
  %739 = vmatpush2.msra.mxu0 0.0
  %740 = vmatprep.subr.mxu0 0.0
  %741 = vmatpush2.msra.mxu0 0.0
  %742 = vmatprep.subr.mxu0 0.0
  %743 = vmatpush2.msra.mxu0 0.0
  %744 = vmatprep.subr.mxu0 0.0
  %745 = vmatpush2.msra.mxu0 0.0
  %746 = vmatprep.subr.mxu0 0.0
  %747 = vmatpush2.msra.mxu0 0.0
  %748 = vmatprep.subr.mxu0 0.0
  %749 = vmatpush2.msra.mxu0 0.0
  %750 = vmatprep.subr.mxu0 0.0
  %751 = vmatpush2.msra.mxu0 0.0
  %752 = vmatprep.mubr.f32.mxu0 0.0
  %753 = vmatmul.mubr.f32.gmra.mxu0 %v662
  %v754 = vpop.f32.mrf.mxu0
  %v755 = vadd.f32 0.0, %v754
  %v756 = vpop.f32.mrf.mxu0
  %757 = vmatprep.mubr.f32.mxu0 0.0
  %758 = vmatmul.mubr.f32.gmra.mxu0 %v665
  %v759 = vpop.f32.mrf.mxu0
  %v760 = vadd.f32 0.0, %v759
  %v761 = vpop.f32.mrf.mxu0
  %762 = vmatprep.mubr.f32.mxu0 0.0
  %763 = vmatmul.mubr.f32.gmra.mxu0 %v668
  %v764 = vpop.f32.mrf.mxu0
  %v765 = vadd.f32 0.0, %v764
  %v766 = vpop.f32.mrf.mxu0
  %767 = vmatprep.mubr.f32.mxu0 0.0
  %768 = vmatmul.mubr.f32.gmra.mxu0 %v671
  %v769 = vpop.f32.mrf.mxu0
  %v770 = vadd.f32 0.0, %v769
  %v771 = vpop.f32.mrf.mxu0
  %772 = vmatprep.mubr.f32.mxu0 0.0
  %773 = vmatmul.mubr.f32.gmra.mxu0 %v674
  %v774 = vpop.f32.mrf.mxu0
  %v775 = vadd.f32 0.0, %v774
  %v776 = vpop.f32.mrf.mxu0
  %777 = vmatprep.mubr.f32.mxu0 0.0
  %778 = vmatmul.mubr.f32.gmra.mxu0 %v677
  %v779 = vpop.f32.mrf.mxu0
  %v780 = vadd.f32 0.0, %v779
  %v781 = vpop.f32.mrf.mxu0
  %782 = vmatprep.mubr.f32.mxu0 0.0
  %783 = vmatmul.mubr.f32.gmra.mxu0 %v680
  %v784 = vpop.f32.mrf.mxu0
  %v785 = vadd.f32 0.0, %v784
  %v786 = vpop.f32.mrf.mxu0
  %787 = vmatprep.mubr.f32.mxu0 0.0
  %788 = vmatmul.mubr.f32.gmra.mxu0 %v683
  %v789 = vpop.f32.mrf.mxu0
  %v790 = vadd.f32 0.0, %v789
  %v791 = vpop.f32.mrf.mxu0
  %792 = vdwg.mxu0
  %v793 = vadd.f32 %v541, %v755
  %v794 = vadd.f32 %v542, %v760
  %v795 = vadd.f32 %v543, %v765
  %v796 = vadd.f32 %v544, %v770
  %v797 = vadd.f32 %v545, %v775
  %v798 = vadd.f32 %v546, %v780
  %v799 = vadd.f32 %v547, %v785
  %v800 = vadd.f32 %v548, %v790
  %s801 = scalar_lea.vmem %s1, 768
  %v802 = vld [vmem:[%s801] sm:$0xff]
  %v803 = vld [vmem:[%s801 + $0x8] sm:$0xff]
  %v804 = vld [vmem:[%s801 + $0x10] sm:$0xff]
  %v805 = vld [vmem:[%s801 + $0x18] sm:$0xff]
  %v806 = vld [vmem:[%s801 + $0x20] sm:$0xff]
  %v807 = vld [vmem:[%s801 + $0x28] sm:$0xff]
  %v808 = vld [vmem:[%s801 + $0x30] sm:$0xff]
  %v809 = vld [vmem:[%s801 + $0x38] sm:$0xff]
  %v810 = vld [vmem:[%s801 + $0x40] sm:$0xff]
  %v811 = vld [vmem:[%s801 + $0x48] sm:$0xff]
  %v812 = vld [vmem:[%s801 + $0x50] sm:$0xff]
  %v813 = vld [vmem:[%s801 + $0x58] sm:$0xff]
  %v814 = vld [vmem:[%s801 + $0x60] sm:$0xff]
  %v815 = vld [vmem:[%s801 + $0x68] sm:$0xff]
  %v816 = vld [vmem:[%s801 + $0x70] sm:$0xff]
  %v817 = vld [vmem:[%s801 + $0x78] sm:$0xff]
  %v818 = vld [vmem:[%s801 + $0x80] sm:$0xff]
  %v819 = vld [vmem:[%s801 + $0x88] sm:$0xff]
  %v820 = vld [vmem:[%s801 + $0x90] sm:$0xff]
  %v821 = vld [vmem:[%s801 + $0x98] sm:$0xff]
  %v822 = vld [vmem:[%s801 + $0xa0] sm:$0xff]
  %v823 = vld [vmem:[%s801 + $0xa8] sm:$0xff]
  %v824 = vld [vmem:[%s801 + $0xb0] sm:$0xff]
  %v825 = vld [vmem:[%s801 + $0xb8] sm:$0xff]
  %v826 = vld [vmem:[%s801 + $0xc0] sm:$0xff]
  %v827 = vld [vmem:[%s801 + $0xc8] sm:$0xff]
  %v828 = vld [vmem:[%s801 + $0xd0] sm:$0xff]
  %v829 = vld [vmem:[%s801 + $0xd8] sm:$0xff]
  %v830 = vld [vmem:[%s801 + $0xe0] sm:$0xff]
  %v831 = vld [vmem:[%s801 + $0xe8] sm:$0xff]
  %v832 = vld [vmem:[%s801 + $0xf0] sm:$0xff]
  %v833 = vld [vmem:[%s801 + $0xf8] sm:$0xff]
  %834 = vmatprep.subr.mxu0 0.0
  %835 = vmatpush1.msra.mxu0 %v817
  %836 = vmatprep.subr.mxu0 0.0
  %837 = vmatpush1.msra.mxu0 %v816
  %838 = vmatprep.subr.mxu0 0.0
  %839 = vmatpush1.msra.mxu0 %v815
  %840 = vmatprep.subr.mxu0 0.0
  %841 = vmatpush1.msra.mxu0 %v814
  %842 = vmatprep.subr.mxu0 0.0
  %843 = vmatpush1.msra.mxu0 %v813
  %844 = vmatprep.subr.mxu0 0.0
  %845 = vmatpush1.msra.mxu0 %v812
  %846 = vmatprep.subr.mxu0 0.0
  %847 = vmatpush1.msra.mxu0 %v811
  %848 = vmatprep.subr.mxu0 0.0
  %849 = vmatpush1.msra.mxu0 %v810
  %850 = vmatprep.subr.mxu0 0.0
  %851 = vmatpush1.msra.mxu0 %v809
  %852 = vmatprep.subr.mxu0 0.0
  %853 = vmatpush1.msra.mxu0 %v808
  %854 = vmatprep.subr.mxu0 0.0
  %855 = vmatpush1.msra.mxu0 %v807
  %856 = vmatprep.subr.mxu0 0.0
  %857 = vmatpush1.msra.mxu0 %v806
  %858 = vmatprep.subr.mxu0 0.0
  %859 = vmatpush1.msra.mxu0 %v805
  %860 = vmatprep.subr.mxu0 0.0
  %861 = vmatpush1.msra.mxu0 %v804
  %862 = vmatprep.subr.mxu0 0.0
  %863 = vmatpush1.msra.mxu0 %v803
  %864 = vmatprep.subr.mxu0 0.0
  %865 = vmatpush1.msra.mxu0 %v802
  %866 = vmatprep.subr.mxu0 0.0
  %867 = vmatpush2.msra.mxu0 %v833
  %868 = vmatprep.subr.mxu0 0.0
  %869 = vmatpush2.msra.mxu0 %v832
  %870 = vmatprep.subr.mxu0 0.0
  %871 = vmatpush2.msra.mxu0 %v831
  %872 = vmatprep.subr.mxu0 0.0
  %873 = vmatpush2.msra.mxu0 %v830
  %874 = vmatprep.subr.mxu0 0.0
  %875 = vmatpush2.msra.mxu0 %v829
  %876 = vmatprep.subr.mxu0 0.0
  %877 = vmatpush2.msra.mxu0 %v828
  %878 = vmatprep.subr.mxu0 0.0
  %879 = vmatpush2.msra.mxu0 %v827
  %880 = vmatprep.subr.mxu0 0.0
  %881 = vmatpush2.msra.mxu0 %v826
  %882 = vmatprep.subr.mxu0 0.0
  %883 = vmatpush2.msra.mxu0 %v825
  %884 = vmatprep.subr.mxu0 0.0
  %885 = vmatpush2.msra.mxu0 %v824
  %886 = vmatprep.subr.mxu0 0.0
  %887 = vmatpush2.msra.mxu0 %v823
  %888 = vmatprep.subr.mxu0 0.0
  %889 = vmatpush2.msra.mxu0 %v822
  %890 = vmatprep.subr.mxu0 0.0
  %891 = vmatpush2.msra.mxu0 %v821
  %892 = vmatprep.subr.mxu0 0.0
  %893 = vmatpush2.msra.mxu0 %v820
  %894 = vmatprep.subr.mxu0 0.0
  %895 = vmatpush2.msra.mxu0 %v819
  %896 = vmatprep.subr.mxu0 0.0
  %897 = vmatpush2.msra.mxu0 %v818
  %898 = vmatprep.mubr.f32.mxu0 %v36
  %899 = vmatmul.mubr.f32.gmra.mxu0 %v35
  %v900 = vpop.f32.mrf.mxu0
  %v901 = vadd.f32 0.0, %v900
  %v902 = vpop.f32.mrf.mxu0
  %903 = vdwg.mxu0
  %s904 = scalar_lea.vmem %s2, 192
  %v905 = vld [vmem:[%s904] sm:$0xff]
  %v906 = vld [vmem:[%s904 + $0x8] sm:$0xff]
  %v907 = vld [vmem:[%s904 + $0x10] sm:$0xff]
  %v908 = vld [vmem:[%s904 + $0x18] sm:$0xff]
  %v909 = vld [vmem:[%s904 + $0x20] sm:$0xff]
  %v910 = vld [vmem:[%s904 + $0x28] sm:$0xff]
  %v911 = vld [vmem:[%s904 + $0x30] sm:$0xff]
  %v912 = vld [vmem:[%s904 + $0x38] sm:$0xff]
  %v914 = vsel %vm155, %v905, 0
  %v917 = vsel %vm155, %v906, 0
  %v920 = vsel %vm155, %v907, 0
  %v923 = vsel %vm155, %v908, 0
  %v926 = vsel %vm155, %v909, 0
  %v929 = vsel %vm155, %v910, 0
  %v932 = vsel %vm155, %v911, 0
  %v935 = vsel %vm155, %v912, 0
  %v938 = vsel %vm180, %v901, 0
  %940 = vmatprep.subr.mxu0 0.0
  %941 = vmatpush1.msra.mxu0 0.0
  %942 = vmatprep.subr.mxu0 0.0
  %943 = vmatpush1.msra.mxu0 0.0
  %944 = vmatprep.subr.mxu0 0.0
  %945 = vmatpush1.msra.mxu0 0.0
  %946 = vmatprep.subr.mxu0 0.0
  %947 = vmatpush1.msra.mxu0 0.0
  %948 = vmatprep.subr.mxu0 0.0
  %949 = vmatpush1.msra.mxu0 0.0
  %950 = vmatprep.subr.mxu0 0.0
  %951 = vmatpush1.msra.mxu0 0.0
  %952 = vmatprep.subr.mxu0 0.0
  %953 = vmatpush1.msra.mxu0 0.0
  %954 = vmatprep.subr.mxu0 0.0
  %955 = vmatpush1.msra.mxu0 0.0
  %956 = vmatprep.subr.mxu0 0.0
  %957 = vmatpush1.msra.mxu0 0.0
  %958 = vmatprep.subr.mxu0 0.0
  %959 = vmatpush1.msra.mxu0 0.0
  %960 = vmatprep.subr.mxu0 0.0
  %961 = vmatpush1.msra.mxu0 0.0
  %962 = vmatprep.subr.mxu0 0.0
  %963 = vmatpush1.msra.mxu0 0.0
  %964 = vmatprep.subr.mxu0 0.0
  %965 = vmatpush1.msra.mxu0 0.0
  %966 = vmatprep.subr.mxu0 0.0
  %967 = vmatpush1.msra.mxu0 0.0
  %968 = vmatprep.subr.mxu0 0.0
  %969 = vmatpush1.msra.mxu0 0.0
  %970 = vmatprep.subr.mxu0 0.0
  %971 = vmatpush1.msra.mxu0 %v938
  %972 = vmatprep.subr.mxu0 0.0
  %973 = vmatpush2.msra.mxu0 0.0
  %974 = vmatprep.subr.mxu0 0.0
  %975 = vmatpush2.msra.mxu0 0.0
  %976 = vmatprep.subr.mxu0 0.0
  %977 = vmatpush2.msra.mxu0 0.0
  %978 = vmatprep.subr.mxu0 0.0
  %979 = vmatpush2.msra.mxu0 0.0
  %980 = vmatprep.subr.mxu0 0.0
  %981 = vmatpush2.msra.mxu0 0.0
  %982 = vmatprep.subr.mxu0 0.0
  %983 = vmatpush2.msra.mxu0 0.0
  %984 = vmatprep.subr.mxu0 0.0
  %985 = vmatpush2.msra.mxu0 0.0
  %986 = vmatprep.subr.mxu0 0.0
  %987 = vmatpush2.msra.mxu0 0.0
  %988 = vmatprep.subr.mxu0 0.0
  %989 = vmatpush2.msra.mxu0 0.0
  %990 = vmatprep.subr.mxu0 0.0
  %991 = vmatpush2.msra.mxu0 0.0
  %992 = vmatprep.subr.mxu0 0.0
  %993 = vmatpush2.msra.mxu0 0.0
  %994 = vmatprep.subr.mxu0 0.0
  %995 = vmatpush2.msra.mxu0 0.0
  %996 = vmatprep.subr.mxu0 0.0
  %997 = vmatpush2.msra.mxu0 0.0
  %998 = vmatprep.subr.mxu0 0.0
  %999 = vmatpush2.msra.mxu0 0.0
  %1000 = vmatprep.subr.mxu0 0.0
  %1001 = vmatpush2.msra.mxu0 0.0
  %1002 = vmatprep.subr.mxu0 0.0
  %1003 = vmatpush2.msra.mxu0 0.0
  %1004 = vmatprep.mubr.f32.mxu0 0.0
  %1005 = vmatmul.mubr.f32.gmra.mxu0 %v914
  %v1006 = vpop.f32.mrf.mxu0
  %v1007 = vadd.f32 0.0, %v1006
  %v1008 = vpop.f32.mrf.mxu0
  %1009 = vmatprep.mubr.f32.mxu0 0.0
  %1010 = vmatmul.mubr.f32.gmra.mxu0 %v917
  %v1011 = vpop.f32.mrf.mxu0
  %v1012 = vadd.f32 0.0, %v1011
  %v1013 = vpop.f32.mrf.mxu0
  %1014 = vmatprep.mubr.f32.mxu0 0.0
  %1015 = vmatmul.mubr.f32.gmra.mxu0 %v920
  %v1016 = vpop.f32.mrf.mxu0
  %v1017 = vadd.f32 0.0, %v1016
  %v1018 = vpop.f32.mrf.mxu0
  %1019 = vmatprep.mubr.f32.mxu0 0.0
  %1020 = vmatmul.mubr.f32.gmra.mxu0 %v923
  %v1021 = vpop.f32.mrf.mxu0
  %v1022 = vadd.f32 0.0, %v1021
  %v1023 = vpop.f32.mrf.mxu0
  %1024 = vmatprep.mubr.f32.mxu0 0.0
  %1025 = vmatmul.mubr.f32.gmra.mxu0 %v926
  %v1026 = vpop.f32.mrf.mxu0
  %v1027 = vadd.f32 0.0, %v1026
  %v1028 = vpop.f32.mrf.mxu0
  %1029 = vmatprep.mubr.f32.mxu0 0.0
  %1030 = vmatmul.mubr.f32.gmra.mxu0 %v929
  %v1031 = vpop.f32.mrf.mxu0
  %v1032 = vadd.f32 0.0, %v1031
  %v1033 = vpop.f32.mrf.mxu0
  %1034 = vmatprep.mubr.f32.mxu0 0.0
  %1035 = vmatmul.mubr.f32.gmra.mxu0 %v932
  %v1036 = vpop.f32.mrf.mxu0
  %v1037 = vadd.f32 0.0, %v1036
  %v1038 = vpop.f32.mrf.mxu0
  %1039 = vmatprep.mubr.f32.mxu0 0.0
  %1040 = vmatmul.mubr.f32.gmra.mxu0 %v935
  %v1041 = vpop.f32.mrf.mxu0
  %v1042 = vadd.f32 0.0, %v1041
  %v1043 = vpop.f32.mrf.mxu0
  %1044 = vdwg.mxu0
  %v1045 = vadd.f32 %v793, %v1007
  %v1046 = vadd.f32 %v794, %v1012
  %v1047 = vadd.f32 %v795, %v1017
  %v1048 = vadd.f32 %v796, %v1022
  %v1049 = vadd.f32 %v797, %v1027
  %v1050 = vadd.f32 %v798, %v1032
  %v1051 = vadd.f32 %v799, %v1037
  %v1052 = vadd.f32 %v800, %v1042
  %s1053 = scalar_lea.vmem %s1, 1024
  %v1054 = vld [vmem:[%s1053] sm:$0xff]
  %v1055 = vld [vmem:[%s1053 + $0x8] sm:$0xff]
  %v1056 = vld [vmem:[%s1053 + $0x10] sm:$0xff]
  %v1057 = vld [vmem:[%s1053 + $0x18] sm:$0xff]
  %v1058 = vld [vmem:[%s1053 + $0x20] sm:$0xff]
  %v1059 = vld [vmem:[%s1053 + $0x28] sm:$0xff]
  %v1060 = vld [vmem:[%s1053 + $0x30] sm:$0xff]
  %v1061 = vld [vmem:[%s1053 + $0x38] sm:$0xff]
  %v1062 = vld [vmem:[%s1053 + $0x40] sm:$0xff]
  %v1063 = vld [vmem:[%s1053 + $0x48] sm:$0xff]
  %v1064 = vld [vmem:[%s1053 + $0x50] sm:$0xff]
  %v1065 = vld [vmem:[%s1053 + $0x58] sm:$0xff]
  %v1066 = vld [vmem:[%s1053 + $0x60] sm:$0xff]
  %v1067 = vld [vmem:[%s1053 + $0x68] sm:$0xff]
  %v1068 = vld [vmem:[%s1053 + $0x70] sm:$0xff]
  %v1069 = vld [vmem:[%s1053 + $0x78] sm:$0xff]
  %v1070 = vld [vmem:[%s1053 + $0x80] sm:$0xff]
  %v1071 = vld [vmem:[%s1053 + $0x88] sm:$0xff]
  %v1072 = vld [vmem:[%s1053 + $0x90] sm:$0xff]
  %v1073 = vld [vmem:[%s1053 + $0x98] sm:$0xff]
  %v1074 = vld [vmem:[%s1053 + $0xa0] sm:$0xff]
  %v1075 = vld [vmem:[%s1053 + $0xa8] sm:$0xff]
  %v1076 = vld [vmem:[%s1053 + $0xb0] sm:$0xff]
  %v1077 = vld [vmem:[%s1053 + $0xb8] sm:$0xff]
  %v1078 = vld [vmem:[%s1053 + $0xc0] sm:$0xff]
  %v1079 = vld [vmem:[%s1053 + $0xc8] sm:$0xff]
  %v1080 = vld [vmem:[%s1053 + $0xd0] sm:$0xff]
  %v1081 = vld [vmem:[%s1053 + $0xd8] sm:$0xff]
  %v1082 = vld [vmem:[%s1053 + $0xe0] sm:$0xff]
  %v1083 = vld [vmem:[%s1053 + $0xe8] sm:$0xff]
  %v1084 = vld [vmem:[%s1053 + $0xf0] sm:$0xff]
  %v1085 = vld [vmem:[%s1053 + $0xf8] sm:$0xff]
  %1086 = vmatprep.subr.mxu0 0.0
  %1087 = vmatpush1.msra.mxu0 %v1069
  %1088 = vmatprep.subr.mxu0 0.0
  %1089 = vmatpush1.msra.mxu0 %v1068
  %1090 = vmatprep.subr.mxu0 0.0
  %1091 = vmatpush1.msra.mxu0 %v1067
  %1092 = vmatprep.subr.mxu0 0.0
  %1093 = vmatpush1.msra.mxu0 %v1066
  %1094 = vmatprep.subr.mxu0 0.0
  %1095 = vmatpush1.msra.mxu0 %v1065
  %1096 = vmatprep.subr.mxu0 0.0
  %1097 = vmatpush1.msra.mxu0 %v1064
  %1098 = vmatprep.subr.mxu0 0.0
  %1099 = vmatpush1.msra.mxu0 %v1063
  %1100 = vmatprep.subr.mxu0 0.0
  %1101 = vmatpush1.msra.mxu0 %v1062
  %1102 = vmatprep.subr.mxu0 0.0
  %1103 = vmatpush1.msra.mxu0 %v1061
  %1104 = vmatprep.subr.mxu0 0.0
  %1105 = vmatpush1.msra.mxu0 %v1060
  %1106 = vmatprep.subr.mxu0 0.0
  %1107 = vmatpush1.msra.mxu0 %v1059
  %1108 = vmatprep.subr.mxu0 0.0
  %1109 = vmatpush1.msra.mxu0 %v1058
  %1110 = vmatprep.subr.mxu0 0.0
  %1111 = vmatpush1.msra.mxu0 %v1057
  %1112 = vmatprep.subr.mxu0 0.0
  %1113 = vmatpush1.msra.mxu0 %v1056
  %1114 = vmatprep.subr.mxu0 0.0
  %1115 = vmatpush1.msra.mxu0 %v1055
  %1116 = vmatprep.subr.mxu0 0.0
  %1117 = vmatpush1.msra.mxu0 %v1054
  %1118 = vmatprep.subr.mxu0 0.0
  %1119 = vmatpush2.msra.mxu0 %v1085
  %1120 = vmatprep.subr.mxu0 0.0
  %1121 = vmatpush2.msra.mxu0 %v1084
  %1122 = vmatprep.subr.mxu0 0.0
  %1123 = vmatpush2.msra.mxu0 %v1083
  %1124 = vmatprep.subr.mxu0 0.0
  %1125 = vmatpush2.msra.mxu0 %v1082
  %1126 = vmatprep.subr.mxu0 0.0
  %1127 = vmatpush2.msra.mxu0 %v1081
  %1128 = vmatprep.subr.mxu0 0.0
  %1129 = vmatpush2.msra.mxu0 %v1080
  %1130 = vmatprep.subr.mxu0 0.0
  %1131 = vmatpush2.msra.mxu0 %v1079
  %1132 = vmatprep.subr.mxu0 0.0
  %1133 = vmatpush2.msra.mxu0 %v1078
  %1134 = vmatprep.subr.mxu0 0.0
  %1135 = vmatpush2.msra.mxu0 %v1077
  %1136 = vmatprep.subr.mxu0 0.0
  %1137 = vmatpush2.msra.mxu0 %v1076
  %1138 = vmatprep.subr.mxu0 0.0
  %1139 = vmatpush2.msra.mxu0 %v1075
  %1140 = vmatprep.subr.mxu0 0.0
  %1141 = vmatpush2.msra.mxu0 %v1074
  %1142 = vmatprep.subr.mxu0 0.0
  %1143 = vmatpush2.msra.mxu0 %v1073
  %1144 = vmatprep.subr.mxu0 0.0
  %1145 = vmatpush2.msra.mxu0 %v1072
  %1146 = vmatprep.subr.mxu0 0.0
  %1147 = vmatpush2.msra.mxu0 %v1071
  %1148 = vmatprep.subr.mxu0 0.0
  %1149 = vmatpush2.msra.mxu0 %v1070
  %1150 = vmatprep.mubr.f32.mxu0 %v36
  %1151 = vmatmul.mubr.f32.gmra.mxu0 %v35
  %v1152 = vpop.f32.mrf.mxu0
  %v1153 = vadd.f32 0.0, %v1152
  %v1154 = vpop.f32.mrf.mxu0
  %1155 = vdwg.mxu0
  %s1156 = scalar_lea.vmem %s2, 256
  %v1157 = vld [vmem:[%s1156] sm:$0xff]
  %v1158 = vld [vmem:[%s1156 + $0x8] sm:$0xff]
  %v1159 = vld [vmem:[%s1156 + $0x10] sm:$0xff]
  %v1160 = vld [vmem:[%s1156 + $0x18] sm:$0xff]
  %v1161 = vld [vmem:[%s1156 + $0x20] sm:$0xff]
  %v1162 = vld [vmem:[%s1156 + $0x28] sm:$0xff]
  %v1163 = vld [vmem:[%s1156 + $0x30] sm:$0xff]
  %v1164 = vld [vmem:[%s1156 + $0x38] sm:$0xff]
  %v1166 = vsel %vm155, %v1157, 0
  %v1169 = vsel %vm155, %v1158, 0
  %v1172 = vsel %vm155, %v1159, 0
  %v1175 = vsel %vm155, %v1160, 0
  %v1178 = vsel %vm155, %v1161, 0
  %v1181 = vsel %vm155, %v1162, 0
  %v1184 = vsel %vm155, %v1163, 0
  %v1187 = vsel %vm155, %v1164, 0
  %v1190 = vsel %vm180, %v1153, 0
  %1192 = vmatprep.subr.mxu0 0.0
  %1193 = vmatpush1.msra.mxu0 0.0
  %1194 = vmatprep.subr.mxu0 0.0
  %1195 = vmatpush1.msra.mxu0 0.0
  %1196 = vmatprep.subr.mxu0 0.0
  %1197 = vmatpush1.msra.mxu0 0.0
  %1198 = vmatprep.subr.mxu0 0.0
  %1199 = vmatpush1.msra.mxu0 0.0
  %1200 = vmatprep.subr.mxu0 0.0
  %1201 = vmatpush1.msra.mxu0 0.0
  %1202 = vmatprep.subr.mxu0 0.0
  %1203 = vmatpush1.msra.mxu0 0.0
  %1204 = vmatprep.subr.mxu0 0.0
  %1205 = vmatpush1.msra.mxu0 0.0
  %1206 = vmatprep.subr.mxu0 0.0
  %1207 = vmatpush1.msra.mxu0 0.0
  %1208 = vmatprep.subr.mxu0 0.0
  %1209 = vmatpush1.msra.mxu0 0.0
  %1210 = vmatprep.subr.mxu0 0.0
  %1211 = vmatpush1.msra.mxu0 0.0
  %1212 = vmatprep.subr.mxu0 0.0
  %1213 = vmatpush1.msra.mxu0 0.0
  %1214 = vmatprep.subr.mxu0 0.0
  %1215 = vmatpush1.msra.mxu0 0.0
  %1216 = vmatprep.subr.mxu0 0.0
  %1217 = vmatpush1.msra.mxu0 0.0
  %1218 = vmatprep.subr.mxu0 0.0
  %1219 = vmatpush1.msra.mxu0 0.0
  %1220 = vmatprep.subr.mxu0 0.0
  %1221 = vmatpush1.msra.mxu0 0.0
  %1222 = vmatprep.subr.mxu0 0.0
  %1223 = vmatpush1.msra.mxu0 %v1190
  %1224 = vmatprep.subr.mxu0 0.0
  %1225 = vmatpush2.msra.mxu0 0.0
  %1226 = vmatprep.subr.mxu0 0.0
  %1227 = vmatpush2.msra.mxu0 0.0
  %1228 = vmatprep.subr.mxu0 0.0
  %1229 = vmatpush2.msra.mxu0 0.0
  %1230 = vmatprep.subr.mxu0 0.0
  %1231 = vmatpush2.msra.mxu0 0.0
  %1232 = vmatprep.subr.mxu0 0.0
  %1233 = vmatpush2.msra.mxu0 0.0
  %1234 = vmatprep.subr.mxu0 0.0
  %1235 = vmatpush2.msra.mxu0 0.0
  %1236 = vmatprep.subr.mxu0 0.0
  %1237 = vmatpush2.msra.mxu0 0.0
  %1238 = vmatprep.subr.mxu0 0.0
  %1239 = vmatpush2.msra.mxu0 0.0
  %1240 = vmatprep.subr.mxu0 0.0
  %1241 = vmatpush2.msra.mxu0 0.0
  %1242 = vmatprep.subr.mxu0 0.0
  %1243 = vmatpush2.msra.mxu0 0.0
  %1244 = vmatprep.subr.mxu0 0.0
  %1245 = vmatpush2.msra.mxu0 0.0
  %1246 = vmatprep.subr.mxu0 0.0
  %1247 = vmatpush2.msra.mxu0 0.0
  %1248 = vmatprep.subr.mxu0 0.0
  %1249 = vmatpush2.msra.mxu0 0.0
  %1250 = vmatprep.subr.mxu0 0.0
  %1251 = vmatpush2.msra.mxu0 0.0
  %1252 = vmatprep.subr.mxu0 0.0
  %1253 = vmatpush2.msra.mxu0 0.0
  %1254 = vmatprep.subr.mxu0 0.0
  %1255 = vmatpush2.msra.mxu0 0.0
  %1256 = vmatprep.mubr.f32.mxu0 0.0
  %1257 = vmatmul.mubr.f32.gmra.mxu0 %v1166
  %v1258 = vpop.f32.mrf.mxu0
  %v1259 = vadd.f32 0.0, %v1258
  %v1260 = vpop.f32.mrf.mxu0
  %1261 = vmatprep.mubr.f32.mxu0 0.0
  %1262 = vmatmul.mubr.f32.gmra.mxu0 %v1169
  %v1263 = vpop.f32.mrf.mxu0
  %v1264 = vadd.f32 0.0, %v1263
  %v1265 = vpop.f32.mrf.mxu0
  %1266 = vmatprep.mubr.f32.mxu0 0.0
  %1267 = vmatmul.mubr.f32.gmra.mxu0 %v1172
  %v1268 = vpop.f32.mrf.mxu0
  %v1269 = vadd.f32 0.0, %v1268
  %v1270 = vpop.f32.mrf.mxu0
  %1271 = vmatprep.mubr.f32.mxu0 0.0
  %1272 = vmatmul.mubr.f32.gmra.mxu0 %v1175
  %v1273 = vpop.f32.mrf.mxu0
  %v1274 = vadd.f32 0.0, %v1273
  %v1275 = vpop.f32.mrf.mxu0
  %1276 = vmatprep.mubr.f32.mxu0 0.0
  %1277 = vmatmul.mubr.f32.gmra.mxu0 %v1178
  %v1278 = vpop.f32.mrf.mxu0
  %v1279 = vadd.f32 0.0, %v1278
  %v1280 = vpop.f32.mrf.mxu0
  %1281 = vmatprep.mubr.f32.mxu0 0.0
  %1282 = vmatmul.mubr.f32.gmra.mxu0 %v1181
  %v1283 = vpop.f32.mrf.mxu0
  %v1284 = vadd.f32 0.0, %v1283
  %v1285 = vpop.f32.mrf.mxu0
  %1286 = vmatprep.mubr.f32.mxu0 0.0
  %1287 = vmatmul.mubr.f32.gmra.mxu0 %v1184
  %v1288 = vpop.f32.mrf.mxu0
  %v1289 = vadd.f32 0.0, %v1288
  %v1290 = vpop.f32.mrf.mxu0
  %1291 = vmatprep.mubr.f32.mxu0 0.0
  %1292 = vmatmul.mubr.f32.gmra.mxu0 %v1187
  %v1293 = vpop.f32.mrf.mxu0
  %v1294 = vadd.f32 0.0, %v1293
  %v1295 = vpop.f32.mrf.mxu0
  %1296 = vdwg.mxu0
  %v1297 = vadd.f32 %v1045, %v1259
  %v1298 = vadd.f32 %v1046, %v1264
  %v1299 = vadd.f32 %v1047, %v1269
  %v1300 = vadd.f32 %v1048, %v1274
  %v1301 = vadd.f32 %v1049, %v1279
  %v1302 = vadd.f32 %v1050, %v1284
  %v1303 = vadd.f32 %v1051, %v1289
  %v1304 = vadd.f32 %v1052, %v1294
  %s1305 = scalar_lea.vmem %s1, 1280
  %v1306 = vld [vmem:[%s1305] sm:$0xff]
  %v1307 = vld [vmem:[%s1305 + $0x8] sm:$0xff]
  %v1308 = vld [vmem:[%s1305 + $0x10] sm:$0xff]
  %v1309 = vld [vmem:[%s1305 + $0x18] sm:$0xff]
  %v1310 = vld [vmem:[%s1305 + $0x20] sm:$0xff]
  %v1311 = vld [vmem:[%s1305 + $0x28] sm:$0xff]
  %v1312 = vld [vmem:[%s1305 + $0x30] sm:$0xff]
  %v1313 = vld [vmem:[%s1305 + $0x38] sm:$0xff]
  %v1314 = vld [vmem:[%s1305 + $0x40] sm:$0xff]
  %v1315 = vld [vmem:[%s1305 + $0x48] sm:$0xff]
  %v1316 = vld [vmem:[%s1305 + $0x50] sm:$0xff]
  %v1317 = vld [vmem:[%s1305 + $0x58] sm:$0xff]
  %v1318 = vld [vmem:[%s1305 + $0x60] sm:$0xff]
  %v1319 = vld [vmem:[%s1305 + $0x68] sm:$0xff]
  %v1320 = vld [vmem:[%s1305 + $0x70] sm:$0xff]
  %v1321 = vld [vmem:[%s1305 + $0x78] sm:$0xff]
  %v1322 = vld [vmem:[%s1305 + $0x80] sm:$0xff]
  %v1323 = vld [vmem:[%s1305 + $0x88] sm:$0xff]
  %v1324 = vld [vmem:[%s1305 + $0x90] sm:$0xff]
  %v1325 = vld [vmem:[%s1305 + $0x98] sm:$0xff]
  %v1326 = vld [vmem:[%s1305 + $0xa0] sm:$0xff]
  %v1327 = vld [vmem:[%s1305 + $0xa8] sm:$0xff]
  %v1328 = vld [vmem:[%s1305 + $0xb0] sm:$0xff]
  %v1329 = vld [vmem:[%s1305 + $0xb8] sm:$0xff]
  %v1330 = vld [vmem:[%s1305 + $0xc0] sm:$0xff]
  %v1331 = vld [vmem:[%s1305 + $0xc8] sm:$0xff]
  %v1332 = vld [vmem:[%s1305 + $0xd0] sm:$0xff]
  %v1333 = vld [vmem:[%s1305 + $0xd8] sm:$0xff]
  %v1334 = vld [vmem:[%s1305 + $0xe0] sm:$0xff]
  %v1335 = vld [vmem:[%s1305 + $0xe8] sm:$0xff]
  %v1336 = vld [vmem:[%s1305 + $0xf0] sm:$0xff]
  %v1337 = vld [vmem:[%s1305 + $0xf8] sm:$0xff]
  %1338 = vmatprep.subr.mxu0 0.0
  %1339 = vmatpush1.msra.mxu0 %v1321
  %1340 = vmatprep.subr.mxu0 0.0
  %1341 = vmatpush1.msra.mxu0 %v1320
  %1342 = vmatprep.subr.mxu0 0.0
  %1343 = vmatpush1.msra.mxu0 %v1319
  %1344 = vmatprep.subr.mxu0 0.0
  %1345 = vmatpush1.msra.mxu0 %v1318
  %1346 = vmatprep.subr.mxu0 0.0
  %1347 = vmatpush1.msra.mxu0 %v1317
  %1348 = vmatprep.subr.mxu0 0.0
  %1349 = vmatpush1.msra.mxu0 %v1316
  %1350 = vmatprep.subr.mxu0 0.0
  %1351 = vmatpush1.msra.mxu0 %v1315
  %1352 = vmatprep.subr.mxu0 0.0
  %1353 = vmatpush1.msra.mxu0 %v1314
  %1354 = vmatprep.subr.mxu0 0.0
  %1355 = vmatpush1.msra.mxu0 %v1313
  %1356 = vmatprep.subr.mxu0 0.0
  %1357 = vmatpush1.msra.mxu0 %v1312
  %1358 = vmatprep.subr.mxu0 0.0
  %1359 = vmatpush1.msra.mxu0 %v1311
  %1360 = vmatprep.subr.mxu0 0.0
  %1361 = vmatpush1.msra.mxu0 %v1310
  %1362 = vmatprep.subr.mxu0 0.0
  %1363 = vmatpush1.msra.mxu0 %v1309
  %1364 = vmatprep.subr.mxu0 0.0
  %1365 = vmatpush1.msra.mxu0 %v1308
  %1366 = vmatprep.subr.mxu0 0.0
  %1367 = vmatpush1.msra.mxu0 %v1307
  %1368 = vmatprep.subr.mxu0 0.0
  %1369 = vmatpush1.msra.mxu0 %v1306
  %1370 = vmatprep.subr.mxu0 0.0
  %1371 = vmatpush2.msra.mxu0 %v1337
  %1372 = vmatprep.subr.mxu0 0.0
  %1373 = vmatpush2.msra.mxu0 %v1336
  %1374 = vmatprep.subr.mxu0 0.0
  %1375 = vmatpush2.msra.mxu0 %v1335
  %1376 = vmatprep.subr.mxu0 0.0
  %1377 = vmatpush2.msra.mxu0 %v1334
  %1378 = vmatprep.subr.mxu0 0.0
  %1379 = vmatpush2.msra.mxu0 %v1333
  %1380 = vmatprep.subr.mxu0 0.0
  %1381 = vmatpush2.msra.mxu0 %v1332
  %1382 = vmatprep.subr.mxu0 0.0
  %1383 = vmatpush2.msra.mxu0 %v1331
  %1384 = vmatprep.subr.mxu0 0.0
  %1385 = vmatpush2.msra.mxu0 %v1330
  %1386 = vmatprep.subr.mxu0 0.0
  %1387 = vmatpush2.msra.mxu0 %v1329
  %1388 = vmatprep.subr.mxu0 0.0
  %1389 = vmatpush2.msra.mxu0 %v1328
  %1390 = vmatprep.subr.mxu0 0.0
  %1391 = vmatpush2.msra.mxu0 %v1327
  %1392 = vmatprep.subr.mxu0 0.0
  %1393 = vmatpush2.msra.mxu0 %v1326
  %1394 = vmatprep.subr.mxu0 0.0
  %1395 = vmatpush2.msra.mxu0 %v1325
  %1396 = vmatprep.subr.mxu0 0.0
  %1397 = vmatpush2.msra.mxu0 %v1324
  %1398 = vmatprep.subr.mxu0 0.0
  %1399 = vmatpush2.msra.mxu0 %v1323
  %1400 = vmatprep.subr.mxu0 0.0
  %1401 = vmatpush2.msra.mxu0 %v1322
  %1402 = vmatprep.mubr.f32.mxu0 %v36
  %1403 = vmatmul.mubr.f32.gmra.mxu0 %v35
  %v1404 = vpop.f32.mrf.mxu0
  %v1405 = vadd.f32 0.0, %v1404
  %v1406 = vpop.f32.mrf.mxu0
  %1407 = vdwg.mxu0
  %s1408 = scalar_lea.vmem %s2, 320
  %v1409 = vld [vmem:[%s1408] sm:$0xff]
  %v1410 = vld [vmem:[%s1408 + $0x8] sm:$0xff]
  %v1411 = vld [vmem:[%s1408 + $0x10] sm:$0xff]
  %v1412 = vld [vmem:[%s1408 + $0x18] sm:$0xff]
  %v1413 = vld [vmem:[%s1408 + $0x20] sm:$0xff]
  %v1414 = vld [vmem:[%s1408 + $0x28] sm:$0xff]
  %v1415 = vld [vmem:[%s1408 + $0x30] sm:$0xff]
  %v1416 = vld [vmem:[%s1408 + $0x38] sm:$0xff]
  %v1418 = vsel %vm155, %v1409, 0
  %v1421 = vsel %vm155, %v1410, 0
  %v1424 = vsel %vm155, %v1411, 0
  %v1427 = vsel %vm155, %v1412, 0
  %v1430 = vsel %vm155, %v1413, 0
  %v1433 = vsel %vm155, %v1414, 0
  %v1436 = vsel %vm155, %v1415, 0
  %v1439 = vsel %vm155, %v1416, 0
  %v1442 = vsel %vm180, %v1405, 0
  %1444 = vmatprep.subr.mxu0 0.0
  %1445 = vmatpush1.msra.mxu0 0.0
  %1446 = vmatprep.subr.mxu0 0.0
  %1447 = vmatpush1.msra.mxu0 0.0
  %1448 = vmatprep.subr.mxu0 0.0
  %1449 = vmatpush1.msra.mxu0 0.0
  %1450 = vmatprep.subr.mxu0 0.0
  %1451 = vmatpush1.msra.mxu0 0.0
  %1452 = vmatprep.subr.mxu0 0.0
  %1453 = vmatpush1.msra.mxu0 0.0
  %1454 = vmatprep.subr.mxu0 0.0
  %1455 = vmatpush1.msra.mxu0 0.0
  %1456 = vmatprep.subr.mxu0 0.0
  %1457 = vmatpush1.msra.mxu0 0.0
  %1458 = vmatprep.subr.mxu0 0.0
  %1459 = vmatpush1.msra.mxu0 0.0
  %1460 = vmatprep.subr.mxu0 0.0
  %1461 = vmatpush1.msra.mxu0 0.0
  %1462 = vmatprep.subr.mxu0 0.0
  %1463 = vmatpush1.msra.mxu0 0.0
  %1464 = vmatprep.subr.mxu0 0.0
  %1465 = vmatpush1.msra.mxu0 0.0
  %1466 = vmatprep.subr.mxu0 0.0
  %1467 = vmatpush1.msra.mxu0 0.0
  %1468 = vmatprep.subr.mxu0 0.0
  %1469 = vmatpush1.msra.mxu0 0.0
  %1470 = vmatprep.subr.mxu0 0.0
  %1471 = vmatpush1.msra.mxu0 0.0
  %1472 = vmatprep.subr.mxu0 0.0
  %1473 = vmatpush1.msra.mxu0 0.0
  %1474 = vmatprep.subr.mxu0 0.0
  %1475 = vmatpush1.msra.mxu0 %v1442
  %1476 = vmatprep.subr.mxu0 0.0
  %1477 = vmatpush2.msra.mxu0 0.0
  %1478 = vmatprep.subr.mxu0 0.0
  %1479 = vmatpush2.msra.mxu0 0.0
  %1480 = vmatprep.subr.mxu0 0.0
  %1481 = vmatpush2.msra.mxu0 0.0
  %1482 = vmatprep.subr.mxu0 0.0
  %1483 = vmatpush2.msra.mxu0 0.0
  %1484 = vmatprep.subr.mxu0 0.0
  %1485 = vmatpush2.msra.mxu0 0.0
  %1486 = vmatprep.subr.mxu0 0.0
  %1487 = vmatpush2.msra.mxu0 0.0
  %1488 = vmatprep.subr.mxu0 0.0
  %1489 = vmatpush2.msra.mxu0 0.0
  %1490 = vmatprep.subr.mxu0 0.0
  %1491 = vmatpush2.msra.mxu0 0.0
  %1492 = vmatprep.subr.mxu0 0.0
  %1493 = vmatpush2.msra.mxu0 0.0
  %1494 = vmatprep.subr.mxu0 0.0
  %1495 = vmatpush2.msra.mxu0 0.0
  %1496 = vmatprep.subr.mxu0 0.0
  %1497 = vmatpush2.msra.mxu0 0.0
  %1498 = vmatprep.subr.mxu0 0.0
  %1499 = vmatpush2.msra.mxu0 0.0
  %1500 = vmatprep.subr.mxu0 0.0
  %1501 = vmatpush2.msra.mxu0 0.0
  %1502 = vmatprep.subr.mxu0 0.0
  %1503 = vmatpush2.msra.mxu0 0.0
  %1504 = vmatprep.subr.mxu0 0.0
  %1505 = vmatpush2.msra.mxu0 0.0
  %1506 = vmatprep.subr.mxu0 0.0
  %1507 = vmatpush2.msra.mxu0 0.0
  %1508 = vmatprep.mubr.f32.mxu0 0.0
  %1509 = vmatmul.mubr.f32.gmra.mxu0 %v1418
  %v1510 = vpop.f32.mrf.mxu0
  %v1511 = vadd.f32 0.0, %v1510
  %v1512 = vpop.f32.mrf.mxu0
  %1513 = vmatprep.mubr.f32.mxu0 0.0
  %1514 = vmatmul.mubr.f32.gmra.mxu0 %v1421
  %v1515 = vpop.f32.mrf.mxu0
  %v1516 = vadd.f32 0.0, %v1515
  %v1517 = vpop.f32.mrf.mxu0
  %1518 = vmatprep.mubr.f32.mxu0 0.0
  %1519 = vmatmul.mubr.f32.gmra.mxu0 %v1424
  %v1520 = vpop.f32.mrf.mxu0
  %v1521 = vadd.f32 0.0, %v1520
  %v1522 = vpop.f32.mrf.mxu0
  %1523 = vmatprep.mubr.f32.mxu0 0.0
  %1524 = vmatmul.mubr.f32.gmra.mxu0 %v1427
  %v1525 = vpop.f32.mrf.mxu0
  %v1526 = vadd.f32 0.0, %v1525
  %v1527 = vpop.f32.mrf.mxu0
  %1528 = vmatprep.mubr.f32.mxu0 0.0
  %1529 = vmatmul.mubr.f32.gmra.mxu0 %v1430
  %v1530 = vpop.f32.mrf.mxu0
  %v1531 = vadd.f32 0.0, %v1530
  %v1532 = vpop.f32.mrf.mxu0
  %1533 = vmatprep.mubr.f32.mxu0 0.0
  %1534 = vmatmul.mubr.f32.gmra.mxu0 %v1433
  %v1535 = vpop.f32.mrf.mxu0
  %v1536 = vadd.f32 0.0, %v1535
  %v1537 = vpop.f32.mrf.mxu0
  %1538 = vmatprep.mubr.f32.mxu0 0.0
  %1539 = vmatmul.mubr.f32.gmra.mxu0 %v1436
  %v1540 = vpop.f32.mrf.mxu0
  %v1541 = vadd.f32 0.0, %v1540
  %v1542 = vpop.f32.mrf.mxu0
  %1543 = vmatprep.mubr.f32.mxu0 0.0
  %1544 = vmatmul.mubr.f32.gmra.mxu0 %v1439
  %v1545 = vpop.f32.mrf.mxu0
  %v1546 = vadd.f32 0.0, %v1545
  %v1547 = vpop.f32.mrf.mxu0
  %1548 = vdwg.mxu0
  %v1549 = vadd.f32 %v1297, %v1511
  %v1550 = vadd.f32 %v1298, %v1516
  %v1551 = vadd.f32 %v1299, %v1521
  %v1552 = vadd.f32 %v1300, %v1526
  %v1553 = vadd.f32 %v1301, %v1531
  %v1554 = vadd.f32 %v1302, %v1536
  %v1555 = vadd.f32 %v1303, %v1541
  %v1556 = vadd.f32 %v1304, %v1546
  %s1557 = scalar_lea.vmem %s1, 1536
  %v1558 = vld [vmem:[%s1557] sm:$0xff]
  %v1559 = vld [vmem:[%s1557 + $0x8] sm:$0xff]
  %v1560 = vld [vmem:[%s1557 + $0x10] sm:$0xff]
  %v1561 = vld [vmem:[%s1557 + $0x18] sm:$0xff]
  %v1562 = vld [vmem:[%s1557 + $0x20] sm:$0xff]
  %v1563 = vld [vmem:[%s1557 + $0x28] sm:$0xff]
  %v1564 = vld [vmem:[%s1557 + $0x30] sm:$0xff]
  %v1565 = vld [vmem:[%s1557 + $0x38] sm:$0xff]
  %v1566 = vld [vmem:[%s1557 + $0x40] sm:$0xff]
  %v1567 = vld [vmem:[%s1557 + $0x48] sm:$0xff]
  %v1568 = vld [vmem:[%s1557 + $0x50] sm:$0xff]
  %v1569 = vld [vmem:[%s1557 + $0x58] sm:$0xff]
  %v1570 = vld [vmem:[%s1557 + $0x60] sm:$0xff]
  %v1571 = vld [vmem:[%s1557 + $0x68] sm:$0xff]
  %v1572 = vld [vmem:[%s1557 + $0x70] sm:$0xff]
  %v1573 = vld [vmem:[%s1557 + $0x78] sm:$0xff]
  %v1574 = vld [vmem:[%s1557 + $0x80] sm:$0xff]
  %v1575 = vld [vmem:[%s1557 + $0x88] sm:$0xff]
  %v1576 = vld [vmem:[%s1557 + $0x90] sm:$0xff]
  %v1577 = vld [vmem:[%s1557 + $0x98] sm:$0xff]
  %v1578 = vld [vmem:[%s1557 + $0xa0] sm:$0xff]
  %v1579 = vld [vmem:[%s1557 + $0xa8] sm:$0xff]
  %v1580 = vld [vmem:[%s1557 + $0xb0] sm:$0xff]
  %v1581 = vld [vmem:[%s1557 + $0xb8] sm:$0xff]
  %v1582 = vld [vmem:[%s1557 + $0xc0] sm:$0xff]
  %v1583 = vld [vmem:[%s1557 + $0xc8] sm:$0xff]
  %v1584 = vld [vmem:[%s1557 + $0xd0] sm:$0xff]
  %v1585 = vld [vmem:[%s1557 + $0xd8] sm:$0xff]
  %v1586 = vld [vmem:[%s1557 + $0xe0] sm:$0xff]
  %v1587 = vld [vmem:[%s1557 + $0xe8] sm:$0xff]
  %v1588 = vld [vmem:[%s1557 + $0xf0] sm:$0xff]
  %v1589 = vld [vmem:[%s1557 + $0xf8] sm:$0xff]
  %1590 = vmatprep.subr.mxu0 0.0
  %1591 = vmatpush1.msra.mxu0 %v1573
  %1592 = vmatprep.subr.mxu0 0.0
  %1593 = vmatpush1.msra.mxu0 %v1572
  %1594 = vmatprep.subr.mxu0 0.0
  %1595 = vmatpush1.msra.mxu0 %v1571
  %1596 = vmatprep.subr.mxu0 0.0
  %1597 = vmatpush1.msra.mxu0 %v1570
  %1598 = vmatprep.subr.mxu0 0.0
  %1599 = vmatpush1.msra.mxu0 %v1569
  %1600 = vmatprep.subr.mxu0 0.0
  %1601 = vmatpush1.msra.mxu0 %v1568
  %1602 = vmatprep.subr.mxu0 0.0
  %1603 = vmatpush1.msra.mxu0 %v1567
  %1604 = vmatprep.subr.mxu0 0.0
  %1605 = vmatpush1.msra.mxu0 %v1566
  %1606 = vmatprep.subr.mxu0 0.0
  %1607 = vmatpush1.msra.mxu0 %v1565
  %1608 = vmatprep.subr.mxu0 0.0
  %1609 = vmatpush1.msra.mxu0 %v1564
  %1610 = vmatprep.subr.mxu0 0.0
  %1611 = vmatpush1.msra.mxu0 %v1563
  %1612 = vmatprep.subr.mxu0 0.0
  %1613 = vmatpush1.msra.mxu0 %v1562
  %1614 = vmatprep.subr.mxu0 0.0
  %1615 = vmatpush1.msra.mxu0 %v1561
  %1616 = vmatprep.subr.mxu0 0.0
  %1617 = vmatpush1.msra.mxu0 %v1560
  %1618 = vmatprep.subr.mxu0 0.0
  %1619 = vmatpush1.msra.mxu0 %v1559
  %1620 = vmatprep.subr.mxu0 0.0
  %1621 = vmatpush1.msra.mxu0 %v1558
  %1622 = vmatprep.subr.mxu0 0.0
  %1623 = vmatpush2.msra.mxu0 %v1589
  %1624 = vmatprep.subr.mxu0 0.0
  %1625 = vmatpush2.msra.mxu0 %v1588
  %1626 = vmatprep.subr.mxu0 0.0
  %1627 = vmatpush2.msra.mxu0 %v1587
  %1628 = vmatprep.subr.mxu0 0.0
  %1629 = vmatpush2.msra.mxu0 %v1586
  %1630 = vmatprep.subr.mxu0 0.0
  %1631 = vmatpush2.msra.mxu0 %v1585
  %1632 = vmatprep.subr.mxu0 0.0
  %1633 = vmatpush2.msra.mxu0 %v1584
  %1634 = vmatprep.subr.mxu0 0.0
  %1635 = vmatpush2.msra.mxu0 %v1583
  %1636 = vmatprep.subr.mxu0 0.0
  %1637 = vmatpush2.msra.mxu0 %v1582
  %1638 = vmatprep.subr.mxu0 0.0
  %1639 = vmatpush2.msra.mxu0 %v1581
  %1640 = vmatprep.subr.mxu0 0.0
  %1641 = vmatpush2.msra.mxu0 %v1580
  %1642 = vmatprep.subr.mxu0 0.0
  %1643 = vmatpush2.msra.mxu0 %v1579
  %1644 = vmatprep.subr.mxu0 0.0
  %1645 = vmatpush2.msra.mxu0 %v1578
  %1646 = vmatprep.subr.mxu0 0.0
  %1647 = vmatpush2.msra.mxu0 %v1577
  %1648 = vmatprep.subr.mxu0 0.0
  %1649 = vmatpush2.msra.mxu0 %v1576
  %1650 = vmatprep.subr.mxu0 0.0
  %1651 = vmatpush2.msra.mxu0 %v1575
  %1652 = vmatprep.subr.mxu0 0.0
  %1653 = vmatpush2.msra.mxu0 %v1574
  %1654 = vmatprep.mubr.f32.mxu0 %v36
  %1655 = vmatmul.mubr.f32.gmra.mxu0 %v35
  %v1656 = vpop.f32.mrf.mxu0
  %v1657 = vadd.f32 0.0, %v1656
  %v1658 = vpop.f32.mrf.mxu0
  %1659 = vdwg.mxu0
  %s1660 = scalar_lea.vmem %s2, 384
  %v1661 = vld [vmem:[%s1660] sm:$0xff]
  %v1662 = vld [vmem:[%s1660 + $0x8] sm:$0xff]
  %v1663 = vld [vmem:[%s1660 + $0x10] sm:$0xff]
  %v1664 = vld [vmem:[%s1660 + $0x18] sm:$0xff]
  %v1665 = vld [vmem:[%s1660 + $0x20] sm:$0xff]
  %v1666 = vld [vmem:[%s1660 + $0x28] sm:$0xff]
  %v1667 = vld [vmem:[%s1660 + $0x30] sm:$0xff]
  %v1668 = vld [vmem:[%s1660 + $0x38] sm:$0xff]
  %v1670 = vsel %vm155, %v1661, 0
  %v1673 = vsel %vm155, %v1662, 0
  %v1676 = vsel %vm155, %v1663, 0
  %v1679 = vsel %vm155, %v1664, 0
  %v1682 = vsel %vm155, %v1665, 0
  %v1685 = vsel %vm155, %v1666, 0
  %v1688 = vsel %vm155, %v1667, 0
  %v1691 = vsel %vm155, %v1668, 0
  %v1694 = vsel %vm180, %v1657, 0
  %1696 = vmatprep.subr.mxu0 0.0
  %1697 = vmatpush1.msra.mxu0 0.0
  %1698 = vmatprep.subr.mxu0 0.0
  %1699 = vmatpush1.msra.mxu0 0.0
  %1700 = vmatprep.subr.mxu0 0.0
  %1701 = vmatpush1.msra.mxu0 0.0
  %1702 = vmatprep.subr.mxu0 0.0
  %1703 = vmatpush1.msra.mxu0 0.0
  %1704 = vmatprep.subr.mxu0 0.0
  %1705 = vmatpush1.msra.mxu0 0.0
  %1706 = vmatprep.subr.mxu0 0.0
  %1707 = vmatpush1.msra.mxu0 0.0
  %1708 = vmatprep.subr.mxu0 0.0
  %1709 = vmatpush1.msra.mxu0 0.0
  %1710 = vmatprep.subr.mxu0 0.0
  %1711 = vmatpush1.msra.mxu0 0.0
  %1712 = vmatprep.subr.mxu0 0.0
  %1713 = vmatpush1.msra.mxu0 0.0
  %1714 = vmatprep.subr.mxu0 0.0
  %1715 = vmatpush1.msra.mxu0 0.0
  %1716 = vmatprep.subr.mxu0 0.0
  %1717 = vmatpush1.msra.mxu0 0.0
  %1718 = vmatprep.subr.mxu0 0.0
  %1719 = vmatpush1.msra.mxu0 0.0
  %1720 = vmatprep.subr.mxu0 0.0
  %1721 = vmatpush1.msra.mxu0 0.0
  %1722 = vmatprep.subr.mxu0 0.0
  %1723 = vmatpush1.msra.mxu0 0.0
  %1724 = vmatprep.subr.mxu0 0.0
  %1725 = vmatpush1.msra.mxu0 0.0
  %1726 = vmatprep.subr.mxu0 0.0
  %1727 = vmatpush1.msra.mxu0 %v1694
  %1728 = vmatprep.subr.mxu0 0.0
  %1729 = vmatpush2.msra.mxu0 0.0
  %1730 = vmatprep.subr.mxu0 0.0
  %1731 = vmatpush2.msra.mxu0 0.0
  %1732 = vmatprep.subr.mxu0 0.0
  %1733 = vmatpush2.msra.mxu0 0.0
  %1734 = vmatprep.subr.mxu0 0.0
  %1735 = vmatpush2.msra.mxu0 0.0
  %1736 = vmatprep.subr.mxu0 0.0
  %1737 = vmatpush2.msra.mxu0 0.0
  %1738 = vmatprep.subr.mxu0 0.0
  %1739 = vmatpush2.msra.mxu0 0.0
  %1740 = vmatprep.subr.mxu0 0.0
  %1741 = vmatpush2.msra.mxu0 0.0
  %1742 = vmatprep.subr.mxu0 0.0
  %1743 = vmatpush2.msra.mxu0 0.0
  %1744 = vmatprep.subr.mxu0 0.0
  %1745 = vmatpush2.msra.mxu0 0.0
  %1746 = vmatprep.subr.mxu0 0.0
  %1747 = vmatpush2.msra.mxu0 0.0
  %1748 = vmatprep.subr.mxu0 0.0
  %1749 = vmatpush2.msra.mxu0 0.0
  %1750 = vmatprep.subr.mxu0 0.0
  %1751 = vmatpush2.msra.mxu0 0.0
  %1752 = vmatprep.subr.mxu0 0.0
  %1753 = vmatpush2.msra.mxu0 0.0
  %1754 = vmatprep.subr.mxu0 0.0
  %1755 = vmatpush2.msra.mxu0 0.0
  %1756 = vmatprep.subr.mxu0 0.0
  %1757 = vmatpush2.msra.mxu0 0.0
  %1758 = vmatprep.subr.mxu0 0.0
  %1759 = vmatpush2.msra.mxu0 0.0
  %1760 = vmatprep.mubr.f32.mxu0 0.0
  %1761 = vmatmul.mubr.f32.gmra.mxu0 %v1670
  %v1762 = vpop.f32.mrf.mxu0
  %v1763 = vadd.f32 0.0, %v1762
  %v1764 = vpop.f32.mrf.mxu0
  %1765 = vmatprep.mubr.f32.mxu0 0.0
  %1766 = vmatmul.mubr.f32.gmra.mxu0 %v1673
  %v1767 = vpop.f32.mrf.mxu0
  %v1768 = vadd.f32 0.0, %v1767
  %v1769 = vpop.f32.mrf.mxu0
  %1770 = vmatprep.mubr.f32.mxu0 0.0
  %1771 = vmatmul.mubr.f32.gmra.mxu0 %v1676
  %v1772 = vpop.f32.mrf.mxu0
  %v1773 = vadd.f32 0.0, %v1772
  %v1774 = vpop.f32.mrf.mxu0
  %1775 = vmatprep.mubr.f32.mxu0 0.0
  %1776 = vmatmul.mubr.f32.gmra.mxu0 %v1679
  %v1777 = vpop.f32.mrf.mxu0
  %v1778 = vadd.f32 0.0, %v1777
  %v1779 = vpop.f32.mrf.mxu0
  %1780 = vmatprep.mubr.f32.mxu0 0.0
  %1781 = vmatmul.mubr.f32.gmra.mxu0 %v1682
  %v1782 = vpop.f32.mrf.mxu0
  %v1783 = vadd.f32 0.0, %v1782
  %v1784 = vpop.f32.mrf.mxu0
  %1785 = vmatprep.mubr.f32.mxu0 0.0
  %1786 = vmatmul.mubr.f32.gmra.mxu0 %v1685
  %v1787 = vpop.f32.mrf.mxu0
  %v1788 = vadd.f32 0.0, %v1787
  %v1789 = vpop.f32.mrf.mxu0
  %1790 = vmatprep.mubr.f32.mxu0 0.0
  %1791 = vmatmul.mubr.f32.gmra.mxu0 %v1688
  %v1792 = vpop.f32.mrf.mxu0
  %v1793 = vadd.f32 0.0, %v1792
  %v1794 = vpop.f32.mrf.mxu0
  %1795 = vmatprep.mubr.f32.mxu0 0.0
  %1796 = vmatmul.mubr.f32.gmra.mxu0 %v1691
  %v1797 = vpop.f32.mrf.mxu0
  %v1798 = vadd.f32 0.0, %v1797
  %v1799 = vpop.f32.mrf.mxu0
  %1800 = vdwg.mxu0
  %v1801 = vadd.f32 %v1549, %v1763
  %v1802 = vadd.f32 %v1550, %v1768
  %v1803 = vadd.f32 %v1551, %v1773
  %v1804 = vadd.f32 %v1552, %v1778
  %v1805 = vadd.f32 %v1553, %v1783
  %v1806 = vadd.f32 %v1554, %v1788
  %v1807 = vadd.f32 %v1555, %v1793
  %v1808 = vadd.f32 %v1556, %v1798
  %s1809 = scalar_lea.vmem %s1, 1792
  %v1810 = vld [vmem:[%s1809] sm:$0xff]
  %v1811 = vld [vmem:[%s1809 + $0x8] sm:$0xff]
  %v1812 = vld [vmem:[%s1809 + $0x10] sm:$0xff]
  %v1813 = vld [vmem:[%s1809 + $0x18] sm:$0xff]
  %v1814 = vld [vmem:[%s1809 + $0x20] sm:$0xff]
  %v1815 = vld [vmem:[%s1809 + $0x28] sm:$0xff]
  %v1816 = vld [vmem:[%s1809 + $0x30] sm:$0xff]
  %v1817 = vld [vmem:[%s1809 + $0x38] sm:$0xff]
  %v1818 = vld [vmem:[%s1809 + $0x40] sm:$0xff]
  %v1819 = vld [vmem:[%s1809 + $0x48] sm:$0xff]
  %v1820 = vld [vmem:[%s1809 + $0x50] sm:$0xff]
  %v1821 = vld [vmem:[%s1809 + $0x58] sm:$0xff]
  %v1822 = vld [vmem:[%s1809 + $0x60] sm:$0xff]
  %v1823 = vld [vmem:[%s1809 + $0x68] sm:$0xff]
  %v1824 = vld [vmem:[%s1809 + $0x70] sm:$0xff]
  %v1825 = vld [vmem:[%s1809 + $0x78] sm:$0xff]
  %v1826 = vld [vmem:[%s1809 + $0x80] sm:$0xff]
  %v1827 = vld [vmem:[%s1809 + $0x88] sm:$0xff]
  %v1828 = vld [vmem:[%s1809 + $0x90] sm:$0xff]
  %v1829 = vld [vmem:[%s1809 + $0x98] sm:$0xff]
  %v1830 = vld [vmem:[%s1809 + $0xa0] sm:$0xff]
  %v1831 = vld [vmem:[%s1809 + $0xa8] sm:$0xff]
  %v1832 = vld [vmem:[%s1809 + $0xb0] sm:$0xff]
  %v1833 = vld [vmem:[%s1809 + $0xb8] sm:$0xff]
  %v1834 = vld [vmem:[%s1809 + $0xc0] sm:$0xff]
  %v1835 = vld [vmem:[%s1809 + $0xc8] sm:$0xff]
  %v1836 = vld [vmem:[%s1809 + $0xd0] sm:$0xff]
  %v1837 = vld [vmem:[%s1809 + $0xd8] sm:$0xff]
  %v1838 = vld [vmem:[%s1809 + $0xe0] sm:$0xff]
  %v1839 = vld [vmem:[%s1809 + $0xe8] sm:$0xff]
  %v1840 = vld [vmem:[%s1809 + $0xf0] sm:$0xff]
  %v1841 = vld [vmem:[%s1809 + $0xf8] sm:$0xff]
  %1842 = vmatprep.subr.mxu0 0.0
  %1843 = vmatpush1.msra.mxu0 %v1825
  %1844 = vmatprep.subr.mxu0 0.0
  %1845 = vmatpush1.msra.mxu0 %v1824
  %1846 = vmatprep.subr.mxu0 0.0
  %1847 = vmatpush1.msra.mxu0 %v1823
  %1848 = vmatprep.subr.mxu0 0.0
  %1849 = vmatpush1.msra.mxu0 %v1822
  %1850 = vmatprep.subr.mxu0 0.0
  %1851 = vmatpush1.msra.mxu0 %v1821
  %1852 = vmatprep.subr.mxu0 0.0
  %1853 = vmatpush1.msra.mxu0 %v1820
  %1854 = vmatprep.subr.mxu0 0.0
  %1855 = vmatpush1.msra.mxu0 %v1819
  %1856 = vmatprep.subr.mxu0 0.0
  %1857 = vmatpush1.msra.mxu0 %v1818
  %1858 = vmatprep.subr.mxu0 0.0
  %1859 = vmatpush1.msra.mxu0 %v1817
  %1860 = vmatprep.subr.mxu0 0.0
  %1861 = vmatpush1.msra.mxu0 %v1816
  %1862 = vmatprep.subr.mxu0 0.0
  %1863 = vmatpush1.msra.mxu0 %v1815
  %1864 = vmatprep.subr.mxu0 0.0
  %1865 = vmatpush1.msra.mxu0 %v1814
  %1866 = vmatprep.subr.mxu0 0.0
  %1867 = vmatpush1.msra.mxu0 %v1813
  %1868 = vmatprep.subr.mxu0 0.0
  %1869 = vmatpush1.msra.mxu0 %v1812
  %1870 = vmatprep.subr.mxu0 0.0
  %1871 = vmatpush1.msra.mxu0 %v1811
  %1872 = vmatprep.subr.mxu0 0.0
  %1873 = vmatpush1.msra.mxu0 %v1810
  %1874 = vmatprep.subr.mxu0 0.0
  %1875 = vmatpush2.msra.mxu0 %v1841
  %1876 = vmatprep.subr.mxu0 0.0
  %1877 = vmatpush2.msra.mxu0 %v1840
  %1878 = vmatprep.subr.mxu0 0.0
  %1879 = vmatpush2.msra.mxu0 %v1839
  %1880 = vmatprep.subr.mxu0 0.0
  %1881 = vmatpush2.msra.mxu0 %v1838
  %1882 = vmatprep.subr.mxu0 0.0
  %1883 = vmatpush2.msra.mxu0 %v1837
  %1884 = vmatprep.subr.mxu0 0.0
  %1885 = vmatpush2.msra.mxu0 %v1836
  %1886 = vmatprep.subr.mxu0 0.0
  %1887 = vmatpush2.msra.mxu0 %v1835
  %1888 = vmatprep.subr.mxu0 0.0
  %1889 = vmatpush2.msra.mxu0 %v1834
  %1890 = vmatprep.subr.mxu0 0.0
  %1891 = vmatpush2.msra.mxu0 %v1833
  %1892 = vmatprep.subr.mxu0 0.0
  %1893 = vmatpush2.msra.mxu0 %v1832
  %1894 = vmatprep.subr.mxu0 0.0
  %1895 = vmatpush2.msra.mxu0 %v1831
  %1896 = vmatprep.subr.mxu0 0.0
  %1897 = vmatpush2.msra.mxu0 %v1830
  %1898 = vmatprep.subr.mxu0 0.0
  %1899 = vmatpush2.msra.mxu0 %v1829
  %1900 = vmatprep.subr.mxu0 0.0
  %1901 = vmatpush2.msra.mxu0 %v1828
  %1902 = vmatprep.subr.mxu0 0.0
  %1903 = vmatpush2.msra.mxu0 %v1827
  %1904 = vmatprep.subr.mxu0 0.0
  %1905 = vmatpush2.msra.mxu0 %v1826
  %1906 = vmatprep.mubr.f32.mxu0 %v36
  %1907 = vmatmul.mubr.f32.gmra.mxu0 %v35
  %v1908 = vpop.f32.mrf.mxu0
  %v1909 = vadd.f32 0.0, %v1908
  %v1910 = vpop.f32.mrf.mxu0
  %1911 = vdwg.mxu0
  %s1912 = scalar_lea.vmem %s2, 448
  %v1913 = vld [vmem:[%s1912] sm:$0xff]
  %v1914 = vld [vmem:[%s1912 + $0x8] sm:$0xff]
  %v1915 = vld [vmem:[%s1912 + $0x10] sm:$0xff]
  %v1916 = vld [vmem:[%s1912 + $0x18] sm:$0xff]
  %v1917 = vld [vmem:[%s1912 + $0x20] sm:$0xff]
  %v1918 = vld [vmem:[%s1912 + $0x28] sm:$0xff]
  %v1919 = vld [vmem:[%s1912 + $0x30] sm:$0xff]
  %v1920 = vld [vmem:[%s1912 + $0x38] sm:$0xff]
  %v1922 = vsel %vm155, %v1913, 0
  %v1925 = vsel %vm155, %v1914, 0
  %v1928 = vsel %vm155, %v1915, 0
  %v1931 = vsel %vm155, %v1916, 0
  %v1934 = vsel %vm155, %v1917, 0
  %v1937 = vsel %vm155, %v1918, 0
  %v1940 = vsel %vm155, %v1919, 0
  %v1943 = vsel %vm155, %v1920, 0
  %v1946 = vsel %vm180, %v1909, 0
  %1948 = vmatprep.subr.mxu0 0.0
  %1949 = vmatpush1.msra.mxu0 0.0
  %1950 = vmatprep.subr.mxu0 0.0
  %1951 = vmatpush1.msra.mxu0 0.0
  %1952 = vmatprep.subr.mxu0 0.0
  %1953 = vmatpush1.msra.mxu0 0.0
  %1954 = vmatprep.subr.mxu0 0.0
  %1955 = vmatpush1.msra.mxu0 0.0
  %1956 = vmatprep.subr.mxu0 0.0
  %1957 = vmatpush1.msra.mxu0 0.0
  %1958 = vmatprep.subr.mxu0 0.0
  %1959 = vmatpush1.msra.mxu0 0.0
  %1960 = vmatprep.subr.mxu0 0.0
  %1961 = vmatpush1.msra.mxu0 0.0
  %1962 = vmatprep.subr.mxu0 0.0
  %1963 = vmatpush1.msra.mxu0 0.0
  %1964 = vmatprep.subr.mxu0 0.0
  %1965 = vmatpush1.msra.mxu0 0.0
  %1966 = vmatprep.subr.mxu0 0.0
  %1967 = vmatpush1.msra.mxu0 0.0
  %1968 = vmatprep.subr.mxu0 0.0
  %1969 = vmatpush1.msra.mxu0 0.0
  %1970 = vmatprep.subr.mxu0 0.0
  %1971 = vmatpush1.msra.mxu0 0.0
  %1972 = vmatprep.subr.mxu0 0.0
  %1973 = vmatpush1.msra.mxu0 0.0
  %1974 = vmatprep.subr.mxu0 0.0
  %1975 = vmatpush1.msra.mxu0 0.0
  %1976 = vmatprep.subr.mxu0 0.0
  %1977 = vmatpush1.msra.mxu0 0.0
  %1978 = vmatprep.subr.mxu0 0.0
  %1979 = vmatpush1.msra.mxu0 %v1946
  %1980 = vmatprep.subr.mxu0 0.0
  %1981 = vmatpush2.msra.mxu0 0.0
  %1982 = vmatprep.subr.mxu0 0.0
  %1983 = vmatpush2.msra.mxu0 0.0
  %1984 = vmatprep.subr.mxu0 0.0
  %1985 = vmatpush2.msra.mxu0 0.0
  %1986 = vmatprep.subr.mxu0 0.0
  %1987 = vmatpush2.msra.mxu0 0.0
  %1988 = vmatprep.subr.mxu0 0.0
  %1989 = vmatpush2.msra.mxu0 0.0
  %1990 = vmatprep.subr.mxu0 0.0
  %1991 = vmatpush2.msra.mxu0 0.0
  %1992 = vmatprep.subr.mxu0 0.0
  %1993 = vmatpush2.msra.mxu0 0.0
  %1994 = vmatprep.subr.mxu0 0.0
  %1995 = vmatpush2.msra.mxu0 0.0
  %1996 = vmatprep.subr.mxu0 0.0
  %1997 = vmatpush2.msra.mxu0 0.0
  %1998 = vmatprep.subr.mxu0 0.0
  %1999 = vmatpush2.msra.mxu0 0.0
  %2000 = vmatprep.subr.mxu0 0.0
  %2001 = vmatpush2.msra.mxu0 0.0
  %2002 = vmatprep.subr.mxu0 0.0
  %2003 = vmatpush2.msra.mxu0 0.0
  %2004 = vmatprep.subr.mxu0 0.0
  %2005 = vmatpush2.msra.mxu0 0.0
  %2006 = vmatprep.subr.mxu0 0.0
  %2007 = vmatpush2.msra.mxu0 0.0
  %2008 = vmatprep.subr.mxu0 0.0
  %2009 = vmatpush2.msra.mxu0 0.0
  %2010 = vmatprep.subr.mxu0 0.0
  %2011 = vmatpush2.msra.mxu0 0.0
  %2012 = vmatprep.mubr.f32.mxu0 0.0
  %2013 = vmatmul.mubr.f32.gmra.mxu0 %v1922
  %v2014 = vpop.f32.mrf.mxu0
  %v2015 = vadd.f32 0.0, %v2014
  %v2016 = vpop.f32.mrf.mxu0
  %2017 = vmatprep.mubr.f32.mxu0 0.0
  %2018 = vmatmul.mubr.f32.gmra.mxu0 %v1925
  %v2019 = vpop.f32.mrf.mxu0
  %v2020 = vadd.f32 0.0, %v2019
  %v2021 = vpop.f32.mrf.mxu0
  %2022 = vmatprep.mubr.f32.mxu0 0.0
  %2023 = vmatmul.mubr.f32.gmra.mxu0 %v1928
  %v2024 = vpop.f32.mrf.mxu0
  %v2025 = vadd.f32 0.0, %v2024
  %v2026 = vpop.f32.mrf.mxu0
  %2027 = vmatprep.mubr.f32.mxu0 0.0
  %2028 = vmatmul.mubr.f32.gmra.mxu0 %v1931
  %v2029 = vpop.f32.mrf.mxu0
  %v2030 = vadd.f32 0.0, %v2029
  %v2031 = vpop.f32.mrf.mxu0
  %2032 = vmatprep.mubr.f32.mxu0 0.0
  %2033 = vmatmul.mubr.f32.gmra.mxu0 %v1934
  %v2034 = vpop.f32.mrf.mxu0
  %v2035 = vadd.f32 0.0, %v2034
  %v2036 = vpop.f32.mrf.mxu0
  %2037 = vmatprep.mubr.f32.mxu0 0.0
  %2038 = vmatmul.mubr.f32.gmra.mxu0 %v1937
  %v2039 = vpop.f32.mrf.mxu0
  %v2040 = vadd.f32 0.0, %v2039
  %v2041 = vpop.f32.mrf.mxu0
  %2042 = vmatprep.mubr.f32.mxu0 0.0
  %2043 = vmatmul.mubr.f32.gmra.mxu0 %v1940
  %v2044 = vpop.f32.mrf.mxu0
  %v2045 = vadd.f32 0.0, %v2044
  %v2046 = vpop.f32.mrf.mxu0
  %2047 = vmatprep.mubr.f32.mxu0 0.0
  %2048 = vmatmul.mubr.f32.gmra.mxu0 %v1943
  %v2049 = vpop.f32.mrf.mxu0
  %v2050 = vadd.f32 0.0, %v2049
  %v2051 = vpop.f32.mrf.mxu0
  %2052 = vdwg.mxu0
  %v2053 = vadd.f32 %v1801, %v2015
  %v2054 = vadd.f32 %v1802, %v2020
  %v2055 = vadd.f32 %v1803, %v2025
  %v2056 = vadd.f32 %v1804, %v2030
  %v2057 = vadd.f32 %v1805, %v2035
  %v2058 = vadd.f32 %v1806, %v2040
  %v2059 = vadd.f32 %v1807, %v2045
  %v2060 = vadd.f32 %v1808, %v2050
  %s2061 = scalar_lea.vmem %s1, 2048
  %v2062 = vld [vmem:[%s2061] sm:$0xff]
  %v2063 = vld [vmem:[%s2061 + $0x8] sm:$0xff]
  %v2064 = vld [vmem:[%s2061 + $0x10] sm:$0xff]
  %v2065 = vld [vmem:[%s2061 + $0x18] sm:$0xff]
  %v2066 = vld [vmem:[%s2061 + $0x20] sm:$0xff]
  %v2067 = vld [vmem:[%s2061 + $0x28] sm:$0xff]
  %v2068 = vld [vmem:[%s2061 + $0x30] sm:$0xff]
  %v2069 = vld [vmem:[%s2061 + $0x38] sm:$0xff]
  %v2070 = vld [vmem:[%s2061 + $0x40] sm:$0xff]
  %v2071 = vld [vmem:[%s2061 + $0x48] sm:$0xff]
  %v2072 = vld [vmem:[%s2061 + $0x50] sm:$0xff]
  %v2073 = vld [vmem:[%s2061 + $0x58] sm:$0xff]
  %v2074 = vld [vmem:[%s2061 + $0x60] sm:$0xff]
  %v2075 = vld [vmem:[%s2061 + $0x68] sm:$0xff]
  %v2076 = vld [vmem:[%s2061 + $0x70] sm:$0xff]
  %v2077 = vld [vmem:[%s2061 + $0x78] sm:$0xff]
  %v2078 = vld [vmem:[%s2061 + $0x80] sm:$0xff]
  %v2079 = vld [vmem:[%s2061 + $0x88] sm:$0xff]
  %v2080 = vld [vmem:[%s2061 + $0x90] sm:$0xff]
  %v2081 = vld [vmem:[%s2061 + $0x98] sm:$0xff]
  %v2082 = vld [vmem:[%s2061 + $0xa0] sm:$0xff]
  %v2083 = vld [vmem:[%s2061 + $0xa8] sm:$0xff]
  %v2084 = vld [vmem:[%s2061 + $0xb0] sm:$0xff]
  %v2085 = vld [vmem:[%s2061 + $0xb8] sm:$0xff]
  %v2086 = vld [vmem:[%s2061 + $0xc0] sm:$0xff]
  %v2087 = vld [vmem:[%s2061 + $0xc8] sm:$0xff]
  %v2088 = vld [vmem:[%s2061 + $0xd0] sm:$0xff]
  %v2089 = vld [vmem:[%s2061 + $0xd8] sm:$0xff]
  %v2090 = vld [vmem:[%s2061 + $0xe0] sm:$0xff]
  %v2091 = vld [vmem:[%s2061 + $0xe8] sm:$0xff]
  %v2092 = vld [vmem:[%s2061 + $0xf0] sm:$0xff]
  %v2093 = vld [vmem:[%s2061 + $0xf8] sm:$0xff]
  %2094 = vmatprep.subr.mxu0 0.0
  %2095 = vmatpush1.msra.mxu0 %v2077
  %2096 = vmatprep.subr.mxu0 0.0
  %2097 = vmatpush1.msra.mxu0 %v2076
  %2098 = vmatprep.subr.mxu0 0.0
  %2099 = vmatpush1.msra.mxu0 %v2075
  %2100 = vmatprep.subr.mxu0 0.0
  %2101 = vmatpush1.msra.mxu0 %v2074
  %2102 = vmatprep.subr.mxu0 0.0
  %2103 = vmatpush1.msra.mxu0 %v2073
  %2104 = vmatprep.subr.mxu0 0.0
  %2105 = vmatpush1.msra.mxu0 %v2072
  %2106 = vmatprep.subr.mxu0 0.0
  %2107 = vmatpush1.msra.mxu0 %v2071
  %2108 = vmatprep.subr.mxu0 0.0
  %2109 = vmatpush1.msra.mxu0 %v2070
  %2110 = vmatprep.subr.mxu0 0.0
  %2111 = vmatpush1.msra.mxu0 %v2069
  %2112 = vmatprep.subr.mxu0 0.0
  %2113 = vmatpush1.msra.mxu0 %v2068
  %2114 = vmatprep.subr.mxu0 0.0
  %2115 = vmatpush1.msra.mxu0 %v2067
  %2116 = vmatprep.subr.mxu0 0.0
  %2117 = vmatpush1.msra.mxu0 %v2066
  %2118 = vmatprep.subr.mxu0 0.0
  %2119 = vmatpush1.msra.mxu0 %v2065
  %2120 = vmatprep.subr.mxu0 0.0
  %2121 = vmatpush1.msra.mxu0 %v2064
  %2122 = vmatprep.subr.mxu0 0.0
  %2123 = vmatpush1.msra.mxu0 %v2063
  %2124 = vmatprep.subr.mxu0 0.0
  %2125 = vmatpush1.msra.mxu0 %v2062
  %2126 = vmatprep.subr.mxu0 0.0
  %2127 = vmatpush2.msra.mxu0 %v2093
  %2128 = vmatprep.subr.mxu0 0.0
  %2129 = vmatpush2.msra.mxu0 %v2092
  %2130 = vmatprep.subr.mxu0 0.0
  %2131 = vmatpush2.msra.mxu0 %v2091
  %2132 = vmatprep.subr.mxu0 0.0
  %2133 = vmatpush2.msra.mxu0 %v2090
  %2134 = vmatprep.subr.mxu0 0.0
  %2135 = vmatpush2.msra.mxu0 %v2089
  %2136 = vmatprep.subr.mxu0 0.0
  %2137 = vmatpush2.msra.mxu0 %v2088
  %2138 = vmatprep.subr.mxu0 0.0
  %2139 = vmatpush2.msra.mxu0 %v2087
  %2140 = vmatprep.subr.mxu0 0.0
  %2141 = vmatpush2.msra.mxu0 %v2086
  %2142 = vmatprep.subr.mxu0 0.0
  %2143 = vmatpush2.msra.mxu0 %v2085
  %2144 = vmatprep.subr.mxu0 0.0
  %2145 = vmatpush2.msra.mxu0 %v2084
  %2146 = vmatprep.subr.mxu0 0.0
  %2147 = vmatpush2.msra.mxu0 %v2083
  %2148 = vmatprep.subr.mxu0 0.0
  %2149 = vmatpush2.msra.mxu0 %v2082
  %2150 = vmatprep.subr.mxu0 0.0
  %2151 = vmatpush2.msra.mxu0 %v2081
  %2152 = vmatprep.subr.mxu0 0.0
  %2153 = vmatpush2.msra.mxu0 %v2080
  %2154 = vmatprep.subr.mxu0 0.0
  %2155 = vmatpush2.msra.mxu0 %v2079
  %2156 = vmatprep.subr.mxu0 0.0
  %2157 = vmatpush2.msra.mxu0 %v2078
  %2158 = vmatprep.mubr.f32.mxu0 %v36
  %2159 = vmatmul.mubr.f32.gmra.mxu0 %v35
  %v2160 = vpop.f32.mrf.mxu0
  %v2161 = vadd.f32 0.0, %v2160
  %v2162 = vpop.f32.mrf.mxu0
  %2163 = vdwg.mxu0
  %s2164 = scalar_lea.vmem %s2, 512
  %v2165 = vld [vmem:[%s2164] sm:$0xff]
  %v2166 = vld [vmem:[%s2164 + $0x8] sm:$0xff]
  %v2167 = vld [vmem:[%s2164 + $0x10] sm:$0xff]
  %v2168 = vld [vmem:[%s2164 + $0x18] sm:$0xff]
  %v2169 = vld [vmem:[%s2164 + $0x20] sm:$0xff]
  %v2170 = vld [vmem:[%s2164 + $0x28] sm:$0xff]
  %v2171 = vld [vmem:[%s2164 + $0x30] sm:$0xff]
  %v2172 = vld [vmem:[%s2164 + $0x38] sm:$0xff]
  %v2174 = vsel %vm155, %v2165, 0
  %v2177 = vsel %vm155, %v2166, 0
  %v2180 = vsel %vm155, %v2167, 0
  %v2183 = vsel %vm155, %v2168, 0
  %v2186 = vsel %vm155, %v2169, 0
  %v2189 = vsel %vm155, %v2170, 0
  %v2192 = vsel %vm155, %v2171, 0
  %v2195 = vsel %vm155, %v2172, 0
  %v2198 = vsel %vm180, %v2161, 0
  %2200 = vmatprep.subr.mxu0 0.0
  %2201 = vmatpush1.msra.mxu0 0.0
  %2202 = vmatprep.subr.mxu0 0.0
  %2203 = vmatpush1.msra.mxu0 0.0
  %2204 = vmatprep.subr.mxu0 0.0
  %2205 = vmatpush1.msra.mxu0 0.0
  %2206 = vmatprep.subr.mxu0 0.0
  %2207 = vmatpush1.msra.mxu0 0.0
  %2208 = vmatprep.subr.mxu0 0.0
  %2209 = vmatpush1.msra.mxu0 0.0
  %2210 = vmatprep.subr.mxu0 0.0
  %2211 = vmatpush1.msra.mxu0 0.0
  %2212 = vmatprep.subr.mxu0 0.0
  %2213 = vmatpush1.msra.mxu0 0.0
  %2214 = vmatprep.subr.mxu0 0.0
  %2215 = vmatpush1.msra.mxu0 0.0
  %2216 = vmatprep.subr.mxu0 0.0
  %2217 = vmatpush1.msra.mxu0 0.0
  %2218 = vmatprep.subr.mxu0 0.0
  %2219 = vmatpush1.msra.mxu0 0.0
  %2220 = vmatprep.subr.mxu0 0.0
  %2221 = vmatpush1.msra.mxu0 0.0
  %2222 = vmatprep.subr.mxu0 0.0
  %2223 = vmatpush1.msra.mxu0 0.0
  %2224 = vmatprep.subr.mxu0 0.0
  %2225 = vmatpush1.msra.mxu0 0.0
  %2226 = vmatprep.subr.mxu0 0.0
  %2227 = vmatpush1.msra.mxu0 0.0
  %2228 = vmatprep.subr.mxu0 0.0
  %2229 = vmatpush1.msra.mxu0 0.0
  %2230 = vmatprep.subr.mxu0 0.0
  %2231 = vmatpush1.msra.mxu0 %v2198
  %2232 = vmatprep.subr.mxu0 0.0
  %2233 = vmatpush2.msra.mxu0 0.0
  %2234 = vmatprep.subr.mxu0 0.0
  %2235 = vmatpush2.msra.mxu0 0.0
  %2236 = vmatprep.subr.mxu0 0.0
  %2237 = vmatpush2.msra.mxu0 0.0
  %2238 = vmatprep.subr.mxu0 0.0
  %2239 = vmatpush2.msra.mxu0 0.0
  %2240 = vmatprep.subr.mxu0 0.0
  %2241 = vmatpush2.msra.mxu0 0.0
  %2242 = vmatprep.subr.mxu0 0.0
  %2243 = vmatpush2.msra.mxu0 0.0
  %2244 = vmatprep.subr.mxu0 0.0
  %2245 = vmatpush2.msra.mxu0 0.0
  %2246 = vmatprep.subr.mxu0 0.0
  %2247 = vmatpush2.msra.mxu0 0.0
  %2248 = vmatprep.subr.mxu0 0.0
  %2249 = vmatpush2.msra.mxu0 0.0
  %2250 = vmatprep.subr.mxu0 0.0
  %2251 = vmatpush2.msra.mxu0 0.0
  %2252 = vmatprep.subr.mxu0 0.0
  %2253 = vmatpush2.msra.mxu0 0.0
  %2254 = vmatprep.subr.mxu0 0.0
  %2255 = vmatpush2.msra.mxu0 0.0
  %2256 = vmatprep.subr.mxu0 0.0
  %2257 = vmatpush2.msra.mxu0 0.0
  %2258 = vmatprep.subr.mxu0 0.0
  %2259 = vmatpush2.msra.mxu0 0.0
  %2260 = vmatprep.subr.mxu0 0.0
  %2261 = vmatpush2.msra.mxu0 0.0
  %2262 = vmatprep.subr.mxu0 0.0
  %2263 = vmatpush2.msra.mxu0 0.0
  %2264 = vmatprep.mubr.f32.mxu0 0.0
  %2265 = vmatmul.mubr.f32.gmra.mxu0 %v2174
  %v2266 = vpop.f32.mrf.mxu0
  %v2267 = vadd.f32 0.0, %v2266
  %v2268 = vpop.f32.mrf.mxu0
  %2269 = vmatprep.mubr.f32.mxu0 0.0
  %2270 = vmatmul.mubr.f32.gmra.mxu0 %v2177
  %v2271 = vpop.f32.mrf.mxu0
  %v2272 = vadd.f32 0.0, %v2271
  %v2273 = vpop.f32.mrf.mxu0
  %2274 = vmatprep.mubr.f32.mxu0 0.0
  %2275 = vmatmul.mubr.f32.gmra.mxu0 %v2180
  %v2276 = vpop.f32.mrf.mxu0
  %v2277 = vadd.f32 0.0, %v2276
  %v2278 = vpop.f32.mrf.mxu0
  %2279 = vmatprep.mubr.f32.mxu0 0.0
  %2280 = vmatmul.mubr.f32.gmra.mxu0 %v2183
  %v2281 = vpop.f32.mrf.mxu0
  %v2282 = vadd.f32 0.0, %v2281
  %v2283 = vpop.f32.mrf.mxu0
  %2284 = vmatprep.mubr.f32.mxu0 0.0
  %2285 = vmatmul.mubr.f32.gmra.mxu0 %v2186
  %v2286 = vpop.f32.mrf.mxu0
  %v2287 = vadd.f32 0.0, %v2286
  %v2288 = vpop.f32.mrf.mxu0
  %2289 = vmatprep.mubr.f32.mxu0 0.0
  %2290 = vmatmul.mubr.f32.gmra.mxu0 %v2189
  %v2291 = vpop.f32.mrf.mxu0
  %v2292 = vadd.f32 0.0, %v2291
  %v2293 = vpop.f32.mrf.mxu0
  %2294 = vmatprep.mubr.f32.mxu0 0.0
  %2295 = vmatmul.mubr.f32.gmra.mxu0 %v2192
  %v2296 = vpop.f32.mrf.mxu0
  %v2297 = vadd.f32 0.0, %v2296
  %v2298 = vpop.f32.mrf.mxu0
  %2299 = vmatprep.mubr.f32.mxu0 0.0
  %2300 = vmatmul.mubr.f32.gmra.mxu0 %v2195
  %v2301 = vpop.f32.mrf.mxu0
  %v2302 = vadd.f32 0.0, %v2301
  %v2303 = vpop.f32.mrf.mxu0
  %2304 = vdwg.mxu0
  %v2305 = vadd.f32 %v2053, %v2267
  %v2306 = vadd.f32 %v2054, %v2272
  %v2307 = vadd.f32 %v2055, %v2277
  %v2308 = vadd.f32 %v2056, %v2282
  %v2309 = vadd.f32 %v2057, %v2287
  %v2310 = vadd.f32 %v2058, %v2292
  %v2311 = vadd.f32 %v2059, %v2297
  %v2312 = vadd.f32 %v2060, %v2302
  %v2313 = vmax.f32 %v2305, 0.0
  %v2314 = vmax.f32 %v2306, 0.0
  %v2315 = vmax.f32 %v2307, 0.0
  %v2316 = vmax.f32 %v2308, 0.0
  %v2317 = vmax.f32 %v2309, 0.0
  %v2318 = vmax.f32 %v2310, 0.0
  %v2319 = vmax.f32 %v2311, 0.0
  %v2320 = vmax.f32 %v2312, 0.0
  %v2321 = vld [vmem:[%s4] sm:$0xff]
  %v2322 = vld [vmem:[%s4 + $0x8] sm:$0xff]
  %v2323 = vld [vmem:[%s4 + $0x10] sm:$0xff]
  %v2324 = vld [vmem:[%s4 + $0x18] sm:$0xff]
  %v2325 = vld [vmem:[%s4 + $0x20] sm:$0xff]
  %v2326 = vld [vmem:[%s4 + $0x28] sm:$0xff]
  %v2327 = vld [vmem:[%s4 + $0x30] sm:$0xff]
  %v2328 = vld [vmem:[%s4 + $0x38] sm:$0xff]
  %v2329 = vld [vmem:[%s4 + $0x40] sm:$0xff]
  %v2330 = vld [vmem:[%s4 + $0x48] sm:$0xff]
  %v2331 = vld [vmem:[%s4 + $0x50] sm:$0xff]
  %v2332 = vld [vmem:[%s4 + $0x58] sm:$0xff]
  %v2333 = vld [vmem:[%s4 + $0x60] sm:$0xff]
  %v2334 = vld [vmem:[%s4 + $0x68] sm:$0xff]
  %v2335 = vld [vmem:[%s4 + $0x70] sm:$0xff]
  %v2336 = vld [vmem:[%s4 + $0x78] sm:$0xff]
  %v2337 = vld [vmem:[%s4 + $0x80] sm:$0xff]
  %v2338 = vld [vmem:[%s4 + $0x88] sm:$0xff]
  %v2339 = vld [vmem:[%s4 + $0x90] sm:$0xff]
  %v2340 = vld [vmem:[%s4 + $0x98] sm:$0xff]
  %v2341 = vld [vmem:[%s4 + $0xa0] sm:$0xff]
  %v2342 = vld [vmem:[%s4 + $0xa8] sm:$0xff]
  %v2343 = vld [vmem:[%s4 + $0xb0] sm:$0xff]
  %v2344 = vld [vmem:[%s4 + $0xb8] sm:$0xff]
  %v2345 = vld [vmem:[%s4 + $0xc0] sm:$0xff]
  %v2346 = vld [vmem:[%s4 + $0xc8] sm:$0xff]
  %v2347 = vld [vmem:[%s4 + $0xd0] sm:$0xff]
  %v2348 = vld [vmem:[%s4 + $0xd8] sm:$0xff]
  %v2349 = vld [vmem:[%s4 + $0xe0] sm:$0xff]
  %v2350 = vld [vmem:[%s4 + $0xe8] sm:$0xff]
  %v2351 = vld [vmem:[%s4 + $0xf0] sm:$0xff]
  %v2352 = vld [vmem:[%s4 + $0xf8] sm:$0xff]
  %v2353 = vld [vmem:[%s4 + $0x100] sm:$0xff]
  %v2354 = vld [vmem:[%s4 + $0x108] sm:$0xff]
  %v2355 = vld [vmem:[%s4 + $0x110] sm:$0xff]
  %v2356 = vld [vmem:[%s4 + $0x118] sm:$0xff]
  %v2357 = vld [vmem:[%s5] sm:$0xff]
  %v2358 = vld [vmem:[%s5 + $0x8] sm:$0xff]
  %v2359 = vld [vmem:[%s5 + $0x10] sm:$0xff]
  %v2360 = vld [vmem:[%s5 + $0x18] sm:$0xff]
  %v2361 = vld [vmem:[%s5 + $0x20] sm:$0xff]
  %v2362 = vld [vmem:[%s5 + $0x28] sm:$0xff]
  %v2363 = vld [vmem:[%s5 + $0x30] sm:$0xff]
  %v2364 = vld [vmem:[%s5 + $0x38] sm:$0xff]
  %v2365 = vld [vmem:[%s5 + $0x40] sm:$0xff]
  %v2366 = vld [vmem:[%s5 + $0x48] sm:$0xff]
  %v2367 = vld [vmem:[%s5 + $0x50] sm:$0xff]
  %v2368 = vld [vmem:[%s5 + $0x58] sm:$0xff]
  %v2369 = vld [vmem:[%s5 + $0x60] sm:$0xff]
  %v2370 = vld [vmem:[%s5 + $0x68] sm:$0xff]
  %v2371 = vld [vmem:[%s5 + $0x70] sm:$0xff]
  %v2372 = vld [vmem:[%s5 + $0x78] sm:$0xff]
  %v2373 = vld [vmem:[%s5 + $0x80] sm:$0xff]
  %v2374 = vld [vmem:[%s5 + $0x88] sm:$0xff]
  %v2375 = vld [vmem:[%s5 + $0x90] sm:$0xff]
  %v2376 = vld [vmem:[%s5 + $0x98] sm:$0xff]
  %v2377 = vld [vmem:[%s5 + $0xa0] sm:$0xff]
  %v2378 = vld [vmem:[%s5 + $0xa8] sm:$0xff]
  %v2379 = vld [vmem:[%s5 + $0xb0] sm:$0xff]
  %v2380 = vld [vmem:[%s5 + $0xb8] sm:$0xff]
  %v2381 = vld [vmem:[%s5 + $0xc0] sm:$0xff]
  %v2382 = vld [vmem:[%s5 + $0xc8] sm:$0xff]
  %v2383 = vld [vmem:[%s5 + $0xd0] sm:$0xff]
  %v2384 = vld [vmem:[%s5 + $0xd8] sm:$0xff]
  %v2385 = vld [vmem:[%s5 + $0xe0] sm:$0xff]
  %v2386 = vld [vmem:[%s5 + $0xe8] sm:$0xff]
  %v2387 = vld [vmem:[%s5 + $0xf0] sm:$0xff]
  %v2388 = vld [vmem:[%s5 + $0xf8] sm:$0xff]
  %v2389 = vld [vmem:[%s5 + $0x100] sm:$0xff]
  %v2390 = vld [vmem:[%s5 + $0x108] sm:$0xff]
  %v2391 = vld [vmem:[%s5 + $0x110] sm:$0xff]
  %v2392 = vld [vmem:[%s5 + $0x118] sm:$0xff]
  %2394 = vset.pattern.permute.xlu0 0
  %2395 = vperm.xlu0 %2394, %v2357
  %v2396 = vpop.permute.xlu0 %2395
  %2399 = vset.pattern.permute.xlu0 0
  %2400 = vperm.xlu0 %2399, %v2358
  %v2401 = vpop.permute.xlu0 %2400
  %2404 = vset.pattern.permute.xlu0 0
  %2405 = vperm.xlu0 %2404, %v2359
  %v2406 = vpop.permute.xlu0 %2405
  %2409 = vset.pattern.permute.xlu0 0
  %2410 = vperm.xlu0 %2409, %v2360
  %v2411 = vpop.permute.xlu0 %2410
  %2414 = vset.pattern.permute.xlu0 0
  %2415 = vperm.xlu0 %2414, %v2361
  %v2416 = vpop.permute.xlu0 %2415
  %2419 = vset.pattern.permute.xlu0 0
  %2420 = vperm.xlu0 %2419, %v2362
  %v2421 = vpop.permute.xlu0 %2420
  %2424 = vset.pattern.permute.xlu0 0
  %2425 = vperm.xlu0 %2424, %v2363
  %v2426 = vpop.permute.xlu0 %2425
  %2429 = vset.pattern.permute.xlu0 0
  %2430 = vperm.xlu0 %2429, %v2364
  %v2431 = vpop.permute.xlu0 %2430
  %2434 = vset.pattern.permute.xlu0 0
  %2435 = vperm.xlu0 %2434, %v2365
  %v2436 = vpop.permute.xlu0 %2435
  %2439 = vset.pattern.permute.xlu0 0
  %2440 = vperm.xlu0 %2439, %v2366
  %v2441 = vpop.permute.xlu0 %2440
  %2444 = vset.pattern.permute.xlu0 0
  %2445 = vperm.xlu0 %2444, %v2367
  %v2446 = vpop.permute.xlu0 %2445
  %2449 = vset.pattern.permute.xlu0 0
  %2450 = vperm.xlu0 %2449, %v2368
  %v2451 = vpop.permute.xlu0 %2450
  %2454 = vset.pattern.permute.xlu0 0
  %2455 = vperm.xlu0 %2454, %v2369
  %v2456 = vpop.permute.xlu0 %2455
  %2459 = vset.pattern.permute.xlu0 0
  %2460 = vperm.xlu0 %2459, %v2370
  %v2461 = vpop.permute.xlu0 %2460
  %2464 = vset.pattern.permute.xlu0 0
  %2465 = vperm.xlu0 %2464, %v2371
  %v2466 = vpop.permute.xlu0 %2465
  %2469 = vset.pattern.permute.xlu0 0
  %2470 = vperm.xlu0 %2469, %v2372
  %v2471 = vpop.permute.xlu0 %2470
  %2474 = vset.pattern.permute.xlu0 0
  %2475 = vperm.xlu0 %2474, %v2373
  %v2476 = vpop.permute.xlu0 %2475
  %2479 = vset.pattern.permute.xlu0 0
  %2480 = vperm.xlu0 %2479, %v2374
  %v2481 = vpop.permute.xlu0 %2480
  %2484 = vset.pattern.permute.xlu0 0
  %2485 = vperm.xlu0 %2484, %v2375
  %v2486 = vpop.permute.xlu0 %2485
  %2489 = vset.pattern.permute.xlu0 0
  %2490 = vperm.xlu0 %2489, %v2376
  %v2491 = vpop.permute.xlu0 %2490
  %2494 = vset.pattern.permute.xlu0 0
  %2495 = vperm.xlu0 %2494, %v2377
  %v2496 = vpop.permute.xlu0 %2495
  %2499 = vset.pattern.permute.xlu0 0
  %2500 = vperm.xlu0 %2499, %v2378
  %v2501 = vpop.permute.xlu0 %2500
  %2504 = vset.pattern.permute.xlu0 0
  %2505 = vperm.xlu0 %2504, %v2379
  %v2506 = vpop.permute.xlu0 %2505
  %2509 = vset.pattern.permute.xlu0 0
  %2510 = vperm.xlu0 %2509, %v2380
  %v2511 = vpop.permute.xlu0 %2510
  %2514 = vset.pattern.permute.xlu0 0
  %2515 = vperm.xlu0 %2514, %v2381
  %v2516 = vpop.permute.xlu0 %2515
  %2519 = vset.pattern.permute.xlu0 0
  %2520 = vperm.xlu0 %2519, %v2382
  %v2521 = vpop.permute.xlu0 %2520
  %2524 = vset.pattern.permute.xlu0 0
  %2525 = vperm.xlu0 %2524, %v2383
  %v2526 = vpop.permute.xlu0 %2525
  %2529 = vset.pattern.permute.xlu0 0
  %2530 = vperm.xlu0 %2529, %v2384
  %v2531 = vpop.permute.xlu0 %2530
  %2534 = vset.pattern.permute.xlu0 0
  %2535 = vperm.xlu0 %2534, %v2385
  %v2536 = vpop.permute.xlu0 %2535
  %2539 = vset.pattern.permute.xlu0 0
  %2540 = vperm.xlu0 %2539, %v2386
  %v2541 = vpop.permute.xlu0 %2540
  %2544 = vset.pattern.permute.xlu0 0
  %2545 = vperm.xlu0 %2544, %v2387
  %v2546 = vpop.permute.xlu0 %2545
  %2549 = vset.pattern.permute.xlu0 0
  %2550 = vperm.xlu0 %2549, %v2388
  %v2551 = vpop.permute.xlu0 %2550
  %2554 = vset.pattern.permute.xlu0 0
  %2555 = vperm.xlu0 %2554, %v2389
  %v2556 = vpop.permute.xlu0 %2555
  %2559 = vset.pattern.permute.xlu0 0
  %2560 = vperm.xlu0 %2559, %v2390
  %v2561 = vpop.permute.xlu0 %2560
  %2564 = vset.pattern.permute.xlu0 0
  %2565 = vperm.xlu0 %2564, %v2391
  %v2566 = vpop.permute.xlu0 %2565
  %2569 = vset.pattern.permute.xlu0 0
  %2570 = vperm.xlu0 %2569, %v2392
  %v2571 = vpop.permute.xlu0 %2570
  %vm2573 = vcmask 523264
  %v2575 = vsel %vm2573, %v2321, 0
  %v2578 = vsel %vm2573, %v2322, 0
  %v2581 = vsel %vm2573, %v2323, 0
  %v2584 = vsel %vm2573, %v2324, 0
  %v2587 = vsel %vm2573, %v2325, 0
  %v2590 = vsel %vm2573, %v2326, 0
  %v2593 = vsel %vm2573, %v2327, 0
  %v2596 = vsel %vm2573, %v2328, 0
  %v2599 = vsel %vm2573, %v2329, 0
  %v2602 = vsel %vm2573, %v2330, 0
  %v2605 = vsel %vm2573, %v2331, 0
  %v2608 = vsel %vm2573, %v2332, 0
  %v2611 = vsel %vm2573, %v2333, 0
  %v2614 = vsel %vm2573, %v2334, 0
  %v2617 = vsel %vm2573, %v2335, 0
  %v2620 = vsel %vm2573, %v2336, 0
  %v2623 = vsel %vm2573, %v2337, 0
  %v2626 = vsel %vm2573, %v2338, 0
  %v2629 = vsel %vm2573, %v2339, 0
  %v2632 = vsel %vm2573, %v2340, 0
  %v2635 = vsel %vm2573, %v2341, 0
  %v2638 = vsel %vm2573, %v2342, 0
  %v2641 = vsel %vm2573, %v2343, 0
  %v2644 = vsel %vm2573, %v2344, 0
  %v2647 = vsel %vm2573, %v2345, 0
  %v2650 = vsel %vm2573, %v2346, 0
  %v2653 = vsel %vm2573, %v2347, 0
  %v2656 = vsel %vm2573, %v2348, 0
  %v2659 = vsel %vm2573, %v2349, 0
  %v2662 = vsel %vm2573, %v2350, 0
  %v2665 = vsel %vm2573, %v2351, 0
  %v2668 = vsel %vm2573, %v2352, 0
  %v2671 = vsel %vm2573, %v2353, 0
  %v2674 = vsel %vm2573, %v2354, 0
  %v2677 = vsel %vm2573, %v2355, 0
  %v2680 = vsel %vm2573, %v2356, 0
  %2682 = vmatprep.subr.mxu0 0.0
  %2683 = vmatpush1.msra.mxu0 0.0
  %2684 = vmatprep.subr.mxu0 0.0
  %2685 = vmatpush1.msra.mxu0 0.0
  %2686 = vmatprep.subr.mxu0 0.0
  %2687 = vmatpush1.msra.mxu0 0.0
  %2688 = vmatprep.subr.mxu0 0.0
  %2689 = vmatpush1.msra.mxu0 0.0
  %2690 = vmatprep.subr.mxu0 0.0
  %2691 = vmatpush1.msra.mxu0 0.0
  %2692 = vmatprep.subr.mxu0 0.0
  %2693 = vmatpush1.msra.mxu0 0.0
  %2694 = vmatprep.subr.mxu0 0.0
  %2695 = vmatpush1.msra.mxu0 0.0
  %2696 = vmatprep.subr.mxu0 0.0
  %2697 = vmatpush1.msra.mxu0 0.0
  %2698 = vmatprep.subr.mxu0 0.0
  %2699 = vmatpush1.msra.mxu0 %v2320
  %2700 = vmatprep.subr.mxu0 0.0
  %2701 = vmatpush1.msra.mxu0 %v2319
  %2702 = vmatprep.subr.mxu0 0.0
  %2703 = vmatpush1.msra.mxu0 %v2318
  %2704 = vmatprep.subr.mxu0 0.0
  %2705 = vmatpush1.msra.mxu0 %v2317
  %2706 = vmatprep.subr.mxu0 0.0
  %2707 = vmatpush1.msra.mxu0 %v2316
  %2708 = vmatprep.subr.mxu0 0.0
  %2709 = vmatpush1.msra.mxu0 %v2315
  %2710 = vmatprep.subr.mxu0 0.0
  %2711 = vmatpush1.msra.mxu0 %v2314
  %2712 = vmatprep.subr.mxu0 0.0
  %2713 = vmatpush1.msra.mxu0 %v2313
  %2714 = vmatprep.subr.mxu0 0.0
  %2715 = vmatpush2.msra.mxu0 0.0
  %2716 = vmatprep.subr.mxu0 0.0
  %2717 = vmatpush2.msra.mxu0 0.0
  %2718 = vmatprep.subr.mxu0 0.0
  %2719 = vmatpush2.msra.mxu0 0.0
  %2720 = vmatprep.subr.mxu0 0.0
  %2721 = vmatpush2.msra.mxu0 0.0
  %2722 = vmatprep.subr.mxu0 0.0
  %2723 = vmatpush2.msra.mxu0 0.0
  %2724 = vmatprep.subr.mxu0 0.0
  %2725 = vmatpush2.msra.mxu0 0.0
  %2726 = vmatprep.subr.mxu0 0.0
  %2727 = vmatpush2.msra.mxu0 0.0
  %2728 = vmatprep.subr.mxu0 0.0
  %2729 = vmatpush2.msra.mxu0 0.0
  %2730 = vmatprep.subr.mxu0 0.0
  %2731 = vmatpush2.msra.mxu0 0.0
  %2732 = vmatprep.subr.mxu0 0.0
  %2733 = vmatpush2.msra.mxu0 0.0
  %2734 = vmatprep.subr.mxu0 0.0
  %2735 = vmatpush2.msra.mxu0 0.0
  %2736 = vmatprep.subr.mxu0 0.0
  %2737 = vmatpush2.msra.mxu0 0.0
  %2738 = vmatprep.subr.mxu0 0.0
  %2739 = vmatpush2.msra.mxu0 0.0
  %2740 = vmatprep.subr.mxu0 0.0
  %2741 = vmatpush2.msra.mxu0 0.0
  %2742 = vmatprep.subr.mxu0 0.0
  %2743 = vmatpush2.msra.mxu0 0.0
  %2744 = vmatprep.subr.mxu0 0.0
  %2745 = vmatpush2.msra.mxu0 0.0
  %2746 = vmatprep.mubr.f32.mxu0 0.0
  %2747 = vmatmul.mubr.f32.gmra.mxu0 %v2575
  %v2748 = vpop.f32.mrf.mxu0
  %v2749 = vadd.f32 %v2396, %v2748
  %v2750 = vpop.f32.mrf.mxu0
  %2751 = vmatprep.mubr.f32.mxu0 0.0
  %2752 = vmatmul.mubr.f32.gmra.mxu0 %v2578
  %v2753 = vpop.f32.mrf.mxu0
  %v2754 = vadd.f32 %v2401, %v2753
  %v2755 = vpop.f32.mrf.mxu0
  %2756 = vmatprep.mubr.f32.mxu0 0.0
  %2757 = vmatmul.mubr.f32.gmra.mxu0 %v2581
  %v2758 = vpop.f32.mrf.mxu0
  %v2759 = vadd.f32 %v2406, %v2758
  %v2760 = vpop.f32.mrf.mxu0
  %2761 = vmatprep.mubr.f32.mxu0 0.0
  %2762 = vmatmul.mubr.f32.gmra.mxu0 %v2584
  %v2763 = vpop.f32.mrf.mxu0
  %v2764 = vadd.f32 %v2411, %v2763
  %v2765 = vpop.f32.mrf.mxu0
  %2766 = vmatprep.mubr.f32.mxu0 0.0
  %2767 = vmatmul.mubr.f32.gmra.mxu0 %v2587
  %v2768 = vpop.f32.mrf.mxu0
  %v2769 = vadd.f32 %v2416, %v2768
  %v2770 = vpop.f32.mrf.mxu0
  %2771 = vmatprep.mubr.f32.mxu0 0.0
  %2772 = vmatmul.mubr.f32.gmra.mxu0 %v2590
  %v2773 = vpop.f32.mrf.mxu0
  %v2774 = vadd.f32 %v2421, %v2773
  %v2775 = vpop.f32.mrf.mxu0
  %2776 = vmatprep.mubr.f32.mxu0 0.0
  %2777 = vmatmul.mubr.f32.gmra.mxu0 %v2593
  %v2778 = vpop.f32.mrf.mxu0
  %v2779 = vadd.f32 %v2426, %v2778
  %v2780 = vpop.f32.mrf.mxu0
  %2781 = vmatprep.mubr.f32.mxu0 0.0
  %2782 = vmatmul.mubr.f32.gmra.mxu0 %v2596
  %v2783 = vpop.f32.mrf.mxu0
  %v2784 = vadd.f32 %v2431, %v2783
  %v2785 = vpop.f32.mrf.mxu0
  %2786 = vmatprep.mubr.f32.mxu0 0.0
  %2787 = vmatmul.mubr.f32.gmra.mxu0 %v2599
  %v2788 = vpop.f32.mrf.mxu0
  %v2789 = vadd.f32 %v2436, %v2788
  %v2790 = vpop.f32.mrf.mxu0
  %2791 = vmatprep.mubr.f32.mxu0 0.0
  %2792 = vmatmul.mubr.f32.gmra.mxu0 %v2602
  %v2793 = vpop.f32.mrf.mxu0
  %v2794 = vadd.f32 %v2441, %v2793
  %v2795 = vpop.f32.mrf.mxu0
  %2796 = vmatprep.mubr.f32.mxu0 0.0
  %2797 = vmatmul.mubr.f32.gmra.mxu0 %v2605
  %v2798 = vpop.f32.mrf.mxu0
  %v2799 = vadd.f32 %v2446, %v2798
  %v2800 = vpop.f32.mrf.mxu0
  %2801 = vmatprep.mubr.f32.mxu0 0.0
  %2802 = vmatmul.mubr.f32.gmra.mxu0 %v2608
  %v2803 = vpop.f32.mrf.mxu0
  %v2804 = vadd.f32 %v2451, %v2803
  %v2805 = vpop.f32.mrf.mxu0
  %2806 = vmatprep.mubr.f32.mxu0 0.0
  %2807 = vmatmul.mubr.f32.gmra.mxu0 %v2611
  %v2808 = vpop.f32.mrf.mxu0
  %v2809 = vadd.f32 %v2456, %v2808
  %v2810 = vpop.f32.mrf.mxu0
  %2811 = vmatprep.mubr.f32.mxu0 0.0
  %2812 = vmatmul.mubr.f32.gmra.mxu0 %v2614
  %v2813 = vpop.f32.mrf.mxu0
  %v2814 = vadd.f32 %v2461, %v2813
  %v2815 = vpop.f32.mrf.mxu0
  %2816 = vmatprep.mubr.f32.mxu0 0.0
  %2817 = vmatmul.mubr.f32.gmra.mxu0 %v2617
  %v2818 = vpop.f32.mrf.mxu0
  %v2819 = vadd.f32 %v2466, %v2818
  %v2820 = vpop.f32.mrf.mxu0
  %2821 = vmatprep.mubr.f32.mxu0 0.0
  %2822 = vmatmul.mubr.f32.gmra.mxu0 %v2620
  %v2823 = vpop.f32.mrf.mxu0
  %v2824 = vadd.f32 %v2471, %v2823
  %v2825 = vpop.f32.mrf.mxu0
  %2826 = vmatprep.mubr.f32.mxu0 0.0
  %2827 = vmatmul.mubr.f32.gmra.mxu0 %v2623
  %v2828 = vpop.f32.mrf.mxu0
  %v2829 = vadd.f32 %v2476, %v2828
  %v2830 = vpop.f32.mrf.mxu0
  %2831 = vmatprep.mubr.f32.mxu0 0.0
  %2832 = vmatmul.mubr.f32.gmra.mxu0 %v2626
  %v2833 = vpop.f32.mrf.mxu0
  %v2834 = vadd.f32 %v2481, %v2833
  %v2835 = vpop.f32.mrf.mxu0
  %2836 = vmatprep.mubr.f32.mxu0 0.0
  %2837 = vmatmul.mubr.f32.gmra.mxu0 %v2629
  %v2838 = vpop.f32.mrf.mxu0
  %v2839 = vadd.f32 %v2486, %v2838
  %v2840 = vpop.f32.mrf.mxu0
  %2841 = vmatprep.mubr.f32.mxu0 0.0
  %2842 = vmatmul.mubr.f32.gmra.mxu0 %v2632
  %v2843 = vpop.f32.mrf.mxu0
  %v2844 = vadd.f32 %v2491, %v2843
  %v2845 = vpop.f32.mrf.mxu0
  %2846 = vmatprep.mubr.f32.mxu0 0.0
  %2847 = vmatmul.mubr.f32.gmra.mxu0 %v2635
  %v2848 = vpop.f32.mrf.mxu0
  %v2849 = vadd.f32 %v2496, %v2848
  %v2850 = vpop.f32.mrf.mxu0
  %2851 = vmatprep.mubr.f32.mxu0 0.0
  %2852 = vmatmul.mubr.f32.gmra.mxu0 %v2638
  %v2853 = vpop.f32.mrf.mxu0
  %v2854 = vadd.f32 %v2501, %v2853
  %v2855 = vpop.f32.mrf.mxu0
  %2856 = vmatprep.mubr.f32.mxu0 0.0
  %2857 = vmatmul.mubr.f32.gmra.mxu0 %v2641
  %v2858 = vpop.f32.mrf.mxu0
  %v2859 = vadd.f32 %v2506, %v2858
  %v2860 = vpop.f32.mrf.mxu0
  %2861 = vmatprep.mubr.f32.mxu0 0.0
  %2862 = vmatmul.mubr.f32.gmra.mxu0 %v2644
  %v2863 = vpop.f32.mrf.mxu0
  %v2864 = vadd.f32 %v2511, %v2863
  %v2865 = vpop.f32.mrf.mxu0
  %2866 = vmatprep.mubr.f32.mxu0 0.0
  %2867 = vmatmul.mubr.f32.gmra.mxu0 %v2647
  %v2868 = vpop.f32.mrf.mxu0
  %v2869 = vadd.f32 %v2516, %v2868
  %v2870 = vpop.f32.mrf.mxu0
  %2871 = vmatprep.mubr.f32.mxu0 0.0
  %2872 = vmatmul.mubr.f32.gmra.mxu0 %v2650
  %v2873 = vpop.f32.mrf.mxu0
  %v2874 = vadd.f32 %v2521, %v2873
  %v2875 = vpop.f32.mrf.mxu0
  %2876 = vmatprep.mubr.f32.mxu0 0.0
  %2877 = vmatmul.mubr.f32.gmra.mxu0 %v2653
  %v2878 = vpop.f32.mrf.mxu0
  %v2879 = vadd.f32 %v2526, %v2878
  %v2880 = vpop.f32.mrf.mxu0
  %2881 = vmatprep.mubr.f32.mxu0 0.0
  %2882 = vmatmul.mubr.f32.gmra.mxu0 %v2656
  %v2883 = vpop.f32.mrf.mxu0
  %v2884 = vadd.f32 %v2531, %v2883
  %v2885 = vpop.f32.mrf.mxu0
  %2886 = vmatprep.mubr.f32.mxu0 0.0
  %2887 = vmatmul.mubr.f32.gmra.mxu0 %v2659
  %v2888 = vpop.f32.mrf.mxu0
  %v2889 = vadd.f32 %v2536, %v2888
  %v2890 = vpop.f32.mrf.mxu0
  %2891 = vmatprep.mubr.f32.mxu0 0.0
  %2892 = vmatmul.mubr.f32.gmra.mxu0 %v2662
  %v2893 = vpop.f32.mrf.mxu0
  %v2894 = vadd.f32 %v2541, %v2893
  %v2895 = vpop.f32.mrf.mxu0
  %2896 = vmatprep.mubr.f32.mxu0 0.0
  %2897 = vmatmul.mubr.f32.gmra.mxu0 %v2665
  %v2898 = vpop.f32.mrf.mxu0
  %v2899 = vadd.f32 %v2546, %v2898
  %v2900 = vpop.f32.mrf.mxu0
  %2901 = vmatprep.mubr.f32.mxu0 0.0
  %2902 = vmatmul.mubr.f32.gmra.mxu0 %v2668
  %v2903 = vpop.f32.mrf.mxu0
  %v2904 = vadd.f32 %v2551, %v2903
  %v2905 = vpop.f32.mrf.mxu0
  %2906 = vmatprep.mubr.f32.mxu0 0.0
  %2907 = vmatmul.mubr.f32.gmra.mxu0 %v2671
  %v2908 = vpop.f32.mrf.mxu0
  %v2909 = vadd.f32 %v2556, %v2908
  %v2910 = vpop.f32.mrf.mxu0
  %2911 = vmatprep.mubr.f32.mxu0 0.0
  %2912 = vmatmul.mubr.f32.gmra.mxu0 %v2674
  %v2913 = vpop.f32.mrf.mxu0
  %v2914 = vadd.f32 %v2561, %v2913
  %v2915 = vpop.f32.mrf.mxu0
  %2916 = vmatprep.mubr.f32.mxu0 0.0
  %2917 = vmatmul.mubr.f32.gmra.mxu0 %v2677
  %v2918 = vpop.f32.mrf.mxu0
  %v2919 = vadd.f32 %v2566, %v2918
  %v2920 = vpop.f32.mrf.mxu0
  %2921 = vmatprep.mubr.f32.mxu0 0.0
  %2922 = vmatmul.mubr.f32.gmra.mxu0 %v2680
  %v2923 = vpop.f32.mrf.mxu0
  %v2924 = vadd.f32 %v2571, %v2923
  %v2925 = vpop.f32.mrf.mxu0
  %2926 = vdwg.mxu0
  %v2927 = vld [vmem:[%s6] sm:$0xff]
  %v2928 = vld [vmem:[%s6 + $0x8] sm:$0xff]
  %v2929 = vld [vmem:[%s6 + $0x10] sm:$0xff]
  %v2930 = vld [vmem:[%s6 + $0x18] sm:$0xff]
  %v2931 = vld [vmem:[%s6 + $0x20] sm:$0xff]
  %v2932 = vld [vmem:[%s6 + $0x28] sm:$0xff]
  %v2933 = vld [vmem:[%s6 + $0x30] sm:$0xff]
  %v2934 = vld [vmem:[%s6 + $0x38] sm:$0xff]
  %v2935 = vld [vmem:[%s7] sm:$0x1]
  %v2937 = vlaneseq
  %v2938 = vshrl.u32 %v2937, 7
  %v2939 = vsub.s32 0, %v2938
  %v2940 = vrot.slane %v2935, %v2939
  %v2943 = vsel %vm2573, %v2749, 0
  %v2946 = vsel %vm2573, %v2754, 0
  %v2949 = vsel %vm2573, %v2759, 0
  %v2952 = vsel %vm2573, %v2764, 0
  %v2955 = vsel %vm2573, %v2769, 0
  %v2958 = vsel %vm2573, %v2774, 0
  %v2961 = vsel %vm2573, %v2779, 0
  %v2964 = vsel %vm2573, %v2784, 0
  %v2967 = vsel %vm2573, %v2789, 0
  %v2970 = vsel %vm2573, %v2794, 0
  %v2973 = vsel %vm2573, %v2799, 0
  %v2976 = vsel %vm2573, %v2804, 0
  %v2979 = vsel %vm2573, %v2809, 0
  %v2982 = vsel %vm2573, %v2814, 0
  %v2985 = vsel %vm2573, %v2819, 0
  %v2988 = vsel %vm2573, %v2824, 0
  %v2991 = vsel %vm2573, %v2829, 0
  %v2994 = vsel %vm2573, %v2834, 0
  %v2997 = vsel %vm2573, %v2839, 0
  %v3000 = vsel %vm2573, %v2844, 0
  %v3003 = vsel %vm2573, %v2849, 0
  %v3006 = vsel %vm2573, %v2854, 0
  %v3009 = vsel %vm2573, %v2859, 0
  %v3012 = vsel %vm2573, %v2864, 0
  %v3015 = vsel %vm2573, %v2869, 0
  %v3018 = vsel %vm2573, %v2874, 0
  %v3021 = vsel %vm2573, %v2879, 0
  %v3024 = vsel %vm2573, %v2884, 0
  %v3027 = vsel %vm2573, %v2889, 0
  %v3030 = vsel %vm2573, %v2894, 0
  %v3033 = vsel %vm2573, %v2899, 0
  %v3036 = vsel %vm2573, %v2904, 0
  %v3039 = vsel %vm2573, %v2909, 0
  %v3042 = vsel %vm2573, %v2914, 0
  %v3045 = vsel %vm2573, %v2919, 0
  %v3048 = vsel %vm2573, %v2924, 0
  %3050 = vmatprep.subr.mxu0 0.0
  %3051 = vmatpush1.msra.mxu0 0.0
  %3052 = vmatprep.subr.mxu0 0.0
  %3053 = vmatpush1.msra.mxu0 0.0
  %3054 = vmatprep.subr.mxu0 0.0
  %3055 = vmatpush1.msra.mxu0 0.0
  %3056 = vmatprep.subr.mxu0 0.0
  %3057 = vmatpush1.msra.mxu0 0.0
  %3058 = vmatprep.subr.mxu0 0.0
  %3059 = vmatpush1.msra.mxu0 0.0
  %3060 = vmatprep.subr.mxu0 0.0
  %3061 = vmatpush1.msra.mxu0 0.0
  %3062 = vmatprep.subr.mxu0 0.0
  %3063 = vmatpush1.msra.mxu0 0.0
  %3064 = vmatprep.subr.mxu0 0.0
  %3065 = vmatpush1.msra.mxu0 0.0
  %3066 = vmatprep.subr.mxu0 0.0
  %3067 = vmatpush1.msra.mxu0 %v2934
  %3068 = vmatprep.subr.mxu0 0.0
  %3069 = vmatpush1.msra.mxu0 %v2933
  %3070 = vmatprep.subr.mxu0 0.0
  %3071 = vmatpush1.msra.mxu0 %v2932
  %3072 = vmatprep.subr.mxu0 0.0
  %3073 = vmatpush1.msra.mxu0 %v2931
  %3074 = vmatprep.subr.mxu0 0.0
  %3075 = vmatpush1.msra.mxu0 %v2930
  %3076 = vmatprep.subr.mxu0 0.0
  %3077 = vmatpush1.msra.mxu0 %v2929
  %3078 = vmatprep.subr.mxu0 0.0
  %3079 = vmatpush1.msra.mxu0 %v2928
  %3080 = vmatprep.subr.mxu0 0.0
  %3081 = vmatpush1.msra.mxu0 %v2927
  %3082 = vmatprep.subr.mxu0 0.0
  %3083 = vmatpush2.msra.mxu0 0.0
  %3084 = vmatprep.subr.mxu0 0.0
  %3085 = vmatpush2.msra.mxu0 0.0
  %3086 = vmatprep.subr.mxu0 0.0
  %3087 = vmatpush2.msra.mxu0 0.0
  %3088 = vmatprep.subr.mxu0 0.0
  %3089 = vmatpush2.msra.mxu0 0.0
  %3090 = vmatprep.subr.mxu0 0.0
  %3091 = vmatpush2.msra.mxu0 0.0
  %3092 = vmatprep.subr.mxu0 0.0
  %3093 = vmatpush2.msra.mxu0 0.0
  %3094 = vmatprep.subr.mxu0 0.0
  %3095 = vmatpush2.msra.mxu0 0.0
  %3096 = vmatprep.subr.mxu0 0.0
  %3097 = vmatpush2.msra.mxu0 0.0
  %3098 = vmatprep.subr.mxu0 0.0
  %3099 = vmatpush2.msra.mxu0 0.0
  %3100 = vmatprep.subr.mxu0 0.0
  %3101 = vmatpush2.msra.mxu0 0.0
  %3102 = vmatprep.subr.mxu0 0.0
  %3103 = vmatpush2.msra.mxu0 0.0
  %3104 = vmatprep.subr.mxu0 0.0
  %3105 = vmatpush2.msra.mxu0 0.0
  %3106 = vmatprep.subr.mxu0 0.0
  %3107 = vmatpush2.msra.mxu0 0.0
  %3108 = vmatprep.subr.mxu0 0.0
  %3109 = vmatpush2.msra.mxu0 0.0
  %3110 = vmatprep.subr.mxu0 0.0
  %3111 = vmatpush2.msra.mxu0 0.0
  %3112 = vmatprep.subr.mxu0 0.0
  %3113 = vmatpush2.msra.mxu0 0.0
  %3114 = vmatprep.mubr.f32.mxu0 0.0
  %3115 = vmatmul.mubr.f32.gmra.mxu0 %v2943
  %v3116 = vpop.f32.mrf.mxu0
  %v3117 = vadd.f32 %v2940, %v3116
  %v3118 = vpop.f32.mrf.mxu0
  %3119 = vmatprep.mubr.f32.mxu0 0.0
  %3120 = vmatmul.mubr.f32.gmra.mxu0 %v2946
  %v3121 = vpop.f32.mrf.mxu0
  %v3122 = vadd.f32 %v2940, %v3121
  %v3123 = vpop.f32.mrf.mxu0
  %3124 = vmatprep.mubr.f32.mxu0 0.0
  %3125 = vmatmul.mubr.f32.gmra.mxu0 %v2949
  %v3126 = vpop.f32.mrf.mxu0
  %v3127 = vadd.f32 %v2940, %v3126
  %v3128 = vpop.f32.mrf.mxu0
  %3129 = vmatprep.mubr.f32.mxu0 0.0
  %3130 = vmatmul.mubr.f32.gmra.mxu0 %v2952
  %v3131 = vpop.f32.mrf.mxu0
  %v3132 = vadd.f32 %v2940, %v3131
  %v3133 = vpop.f32.mrf.mxu0
  %3134 = vmatprep.mubr.f32.mxu0 0.0
  %3135 = vmatmul.mubr.f32.gmra.mxu0 %v2955
  %v3136 = vpop.f32.mrf.mxu0
  %v3137 = vadd.f32 %v2940, %v3136
  %v3138 = vpop.f32.mrf.mxu0
  %3139 = vmatprep.mubr.f32.mxu0 0.0
  %3140 = vmatmul.mubr.f32.gmra.mxu0 %v2958
  %v3141 = vpop.f32.mrf.mxu0
  %v3142 = vadd.f32 %v2940, %v3141
  %v3143 = vpop.f32.mrf.mxu0
  %3144 = vmatprep.mubr.f32.mxu0 0.0
  %3145 = vmatmul.mubr.f32.gmra.mxu0 %v2961
  %v3146 = vpop.f32.mrf.mxu0
  %v3147 = vadd.f32 %v2940, %v3146
  %v3148 = vpop.f32.mrf.mxu0
  %3149 = vmatprep.mubr.f32.mxu0 0.0
  %3150 = vmatmul.mubr.f32.gmra.mxu0 %v2964
  %v3151 = vpop.f32.mrf.mxu0
  %v3152 = vadd.f32 %v2940, %v3151
  %v3153 = vpop.f32.mrf.mxu0
  %3154 = vmatprep.mubr.f32.mxu0 0.0
  %3155 = vmatmul.mubr.f32.gmra.mxu0 %v2967
  %v3156 = vpop.f32.mrf.mxu0
  %v3157 = vadd.f32 %v2940, %v3156
  %v3158 = vpop.f32.mrf.mxu0
  %3159 = vmatprep.mubr.f32.mxu0 0.0
  %3160 = vmatmul.mubr.f32.gmra.mxu0 %v2970
  %v3161 = vpop.f32.mrf.mxu0
  %v3162 = vadd.f32 %v2940, %v3161
  %v3163 = vpop.f32.mrf.mxu0
  %3164 = vmatprep.mubr.f32.mxu0 0.0
  %3165 = vmatmul.mubr.f32.gmra.mxu0 %v2973
  %v3166 = vpop.f32.mrf.mxu0
  %v3167 = vadd.f32 %v2940, %v3166
  %v3168 = vpop.f32.mrf.mxu0
  %3169 = vmatprep.mubr.f32.mxu0 0.0
  %3170 = vmatmul.mubr.f32.gmra.mxu0 %v2976
  %v3171 = vpop.f32.mrf.mxu0
  %v3172 = vadd.f32 %v2940, %v3171
  %v3173 = vpop.f32.mrf.mxu0
  %3174 = vmatprep.mubr.f32.mxu0 0.0
  %3175 = vmatmul.mubr.f32.gmra.mxu0 %v2979
  %v3176 = vpop.f32.mrf.mxu0
  %v3177 = vadd.f32 %v2940, %v3176
  %v3178 = vpop.f32.mrf.mxu0
  %3179 = vmatprep.mubr.f32.mxu0 0.0
  %3180 = vmatmul.mubr.f32.gmra.mxu0 %v2982
  %v3181 = vpop.f32.mrf.mxu0
  %v3182 = vadd.f32 %v2940, %v3181
  %v3183 = vpop.f32.mrf.mxu0
  %3184 = vmatprep.mubr.f32.mxu0 0.0
  %3185 = vmatmul.mubr.f32.gmra.mxu0 %v2985
  %v3186 = vpop.f32.mrf.mxu0
  %v3187 = vadd.f32 %v2940, %v3186
  %v3188 = vpop.f32.mrf.mxu0
  %3189 = vmatprep.mubr.f32.mxu0 0.0
  %3190 = vmatmul.mubr.f32.gmra.mxu0 %v2988
  %v3191 = vpop.f32.mrf.mxu0
  %v3192 = vadd.f32 %v2940, %v3191
  %v3193 = vpop.f32.mrf.mxu0
  %3194 = vmatprep.mubr.f32.mxu0 0.0
  %3195 = vmatmul.mubr.f32.gmra.mxu0 %v2991
  %v3196 = vpop.f32.mrf.mxu0
  %v3197 = vadd.f32 %v2940, %v3196
  %v3198 = vpop.f32.mrf.mxu0
  %3199 = vmatprep.mubr.f32.mxu0 0.0
  %3200 = vmatmul.mubr.f32.gmra.mxu0 %v2994
  %v3201 = vpop.f32.mrf.mxu0
  %v3202 = vadd.f32 %v2940, %v3201
  %v3203 = vpop.f32.mrf.mxu0
  %3204 = vmatprep.mubr.f32.mxu0 0.0
  %3205 = vmatmul.mubr.f32.gmra.mxu0 %v2997
  %v3206 = vpop.f32.mrf.mxu0
  %v3207 = vadd.f32 %v2940, %v3206
  %v3208 = vpop.f32.mrf.mxu0
  %3209 = vmatprep.mubr.f32.mxu0 0.0
  %3210 = vmatmul.mubr.f32.gmra.mxu0 %v3000
  %v3211 = vpop.f32.mrf.mxu0
  %v3212 = vadd.f32 %v2940, %v3211
  %v3213 = vpop.f32.mrf.mxu0
  %3214 = vmatprep.mubr.f32.mxu0 0.0
  %3215 = vmatmul.mubr.f32.gmra.mxu0 %v3003
  %v3216 = vpop.f32.mrf.mxu0
  %v3217 = vadd.f32 %v2940, %v3216
  %v3218 = vpop.f32.mrf.mxu0
  %3219 = vmatprep.mubr.f32.mxu0 0.0
  %3220 = vmatmul.mubr.f32.gmra.mxu0 %v3006
  %v3221 = vpop.f32.mrf.mxu0
  %v3222 = vadd.f32 %v2940, %v3221
  %v3223 = vpop.f32.mrf.mxu0
  %3224 = vmatprep.mubr.f32.mxu0 0.0
  %3225 = vmatmul.mubr.f32.gmra.mxu0 %v3009
  %v3226 = vpop.f32.mrf.mxu0
  %v3227 = vadd.f32 %v2940, %v3226
  %v3228 = vpop.f32.mrf.mxu0
  %3229 = vmatprep.mubr.f32.mxu0 0.0
  %3230 = vmatmul.mubr.f32.gmra.mxu0 %v3012
  %v3231 = vpop.f32.mrf.mxu0
  %v3232 = vadd.f32 %v2940, %v3231
  %v3233 = vpop.f32.mrf.mxu0
  %3234 = vmatprep.mubr.f32.mxu0 0.0
  %3235 = vmatmul.mubr.f32.gmra.mxu0 %v3015
  %v3236 = vpop.f32.mrf.mxu0
  %v3237 = vadd.f32 %v2940, %v3236
  %v3238 = vpop.f32.mrf.mxu0
  %3239 = vmatprep.mubr.f32.mxu0 0.0
  %3240 = vmatmul.mubr.f32.gmra.mxu0 %v3018
  %v3241 = vpop.f32.mrf.mxu0
  %v3242 = vadd.f32 %v2940, %v3241
  %v3243 = vpop.f32.mrf.mxu0
  %3244 = vmatprep.mubr.f32.mxu0 0.0
  %3245 = vmatmul.mubr.f32.gmra.mxu0 %v3021
  %v3246 = vpop.f32.mrf.mxu0
  %v3247 = vadd.f32 %v2940, %v3246
  %v3248 = vpop.f32.mrf.mxu0
  %3249 = vmatprep.mubr.f32.mxu0 0.0
  %3250 = vmatmul.mubr.f32.gmra.mxu0 %v3024
  %v3251 = vpop.f32.mrf.mxu0
  %v3252 = vadd.f32 %v2940, %v3251
  %v3253 = vpop.f32.mrf.mxu0
  %3254 = vmatprep.mubr.f32.mxu0 0.0
  %3255 = vmatmul.mubr.f32.gmra.mxu0 %v3027
  %v3256 = vpop.f32.mrf.mxu0
  %v3257 = vadd.f32 %v2940, %v3256
  %v3258 = vpop.f32.mrf.mxu0
  %3259 = vmatprep.mubr.f32.mxu0 0.0
  %3260 = vmatmul.mubr.f32.gmra.mxu0 %v3030
  %v3261 = vpop.f32.mrf.mxu0
  %v3262 = vadd.f32 %v2940, %v3261
  %v3263 = vpop.f32.mrf.mxu0
  %3264 = vmatprep.mubr.f32.mxu0 0.0
  %3265 = vmatmul.mubr.f32.gmra.mxu0 %v3033
  %v3266 = vpop.f32.mrf.mxu0
  %v3267 = vadd.f32 %v2940, %v3266
  %v3268 = vpop.f32.mrf.mxu0
  %3269 = vmatprep.mubr.f32.mxu0 0.0
  %3270 = vmatmul.mubr.f32.gmra.mxu0 %v3036
  %v3271 = vpop.f32.mrf.mxu0
  %v3272 = vadd.f32 %v2940, %v3271
  %v3273 = vpop.f32.mrf.mxu0
  %3274 = vmatprep.mubr.f32.mxu0 0.0
  %3275 = vmatmul.mubr.f32.gmra.mxu0 %v3039
  %v3276 = vpop.f32.mrf.mxu0
  %v3277 = vadd.f32 %v2940, %v3276
  %v3278 = vpop.f32.mrf.mxu0
  %3279 = vmatprep.mubr.f32.mxu0 0.0
  %3280 = vmatmul.mubr.f32.gmra.mxu0 %v3042
  %v3281 = vpop.f32.mrf.mxu0
  %v3282 = vadd.f32 %v2940, %v3281
  %v3283 = vpop.f32.mrf.mxu0
  %3284 = vmatprep.mubr.f32.mxu0 0.0
  %3285 = vmatmul.mubr.f32.gmra.mxu0 %v3045
  %v3286 = vpop.f32.mrf.mxu0
  %v3287 = vadd.f32 %v2940, %v3286
  %v3288 = vpop.f32.mrf.mxu0
  %3289 = vmatprep.mubr.f32.mxu0 0.0
  %3290 = vmatmul.mubr.f32.gmra.mxu0 %v3048
  %v3291 = vpop.f32.mrf.mxu0
  %v3292 = vadd.f32 %v2940, %v3291
  %v3293 = vpop.f32.mrf.mxu0
  %3294 = vdwg.mxu0
  %v3295 = vmax.f32 %v3117, 0.0
  %v3296 = vmax.f32 %v3122, 0.0
  %v3297 = vmax.f32 %v3127, 0.0
  %v3298 = vmax.f32 %v3132, 0.0
  %v3299 = vmax.f32 %v3137, 0.0
  %v3300 = vmax.f32 %v3142, 0.0
  %v3301 = vmax.f32 %v3147, 0.0
  %v3302 = vmax.f32 %v3152, 0.0
  %v3303 = vmax.f32 %v3157, 0.0
  %v3304 = vmax.f32 %v3162, 0.0
  %v3305 = vmax.f32 %v3167, 0.0
  %v3306 = vmax.f32 %v3172, 0.0
  %v3307 = vmax.f32 %v3177, 0.0
  %v3308 = vmax.f32 %v3182, 0.0
  %v3309 = vmax.f32 %v3187, 0.0
  %v3310 = vmax.f32 %v3192, 0.0
  %v3311 = vmax.f32 %v3197, 0.0
  %v3312 = vmax.f32 %v3202, 0.0
  %v3313 = vmax.f32 %v3207, 0.0
  %v3314 = vmax.f32 %v3212, 0.0
  %v3315 = vmax.f32 %v3217, 0.0
  %v3316 = vmax.f32 %v3222, 0.0
  %v3317 = vmax.f32 %v3227, 0.0
  %v3318 = vmax.f32 %v3232, 0.0
  %v3319 = vmax.f32 %v3237, 0.0
  %v3320 = vmax.f32 %v3242, 0.0
  %v3321 = vmax.f32 %v3247, 0.0
  %v3322 = vmax.f32 %v3252, 0.0
  %v3323 = vmax.f32 %v3257, 0.0
  %v3324 = vmax.f32 %v3262, 0.0
  %v3325 = vmax.f32 %v3267, 0.0
  %v3326 = vmax.f32 %v3272, 0.0
  %v3327 = vmax.f32 %v3277, 0.0
  %v3328 = vmax.f32 %v3282, 0.0
  %v3329 = vmax.f32 %v3287, 0.0
  %v3330 = vmax.f32 %v3292, 0.0
  %v3331 = vld [vmem:[%s8] sm:$0xff]
  %v3332 = vld [vmem:[%s8 + $0x8] sm:$0xff]
  %v3333 = vld [vmem:[%s8 + $0x10] sm:$0xff]
  %v3334 = vld [vmem:[%s8 + $0x18] sm:$0xff]
  %v3335 = vld [vmem:[%s9] sm:$0x1]
  %v3337 = vlaneseq
  %v3338 = vshrl.u32 %v3337, 7
  %v3339 = vsub.s32 0, %v3338
  %v3340 = vrot.slane %v3335, %v3339
  %vm3342 = vcmask 261120
  %v3344 = vsel %vm3342, %v3295, 0
  %v3347 = vsel %vm3342, %v3296, 0
  %v3350 = vsel %vm3342, %v3297, 0
  %v3353 = vsel %vm3342, %v3298, 0
  %v3356 = vsel %vm3342, %v3299, 0
  %v3359 = vsel %vm3342, %v3300, 0
  %v3362 = vsel %vm3342, %v3301, 0
  %v3365 = vsel %vm3342, %v3302, 0
  %v3368 = vsel %vm3342, %v3303, 0
  %v3371 = vsel %vm3342, %v3304, 0
  %v3374 = vsel %vm3342, %v3305, 0
  %v3377 = vsel %vm3342, %v3306, 0
  %v3380 = vsel %vm3342, %v3307, 0
  %v3383 = vsel %vm3342, %v3308, 0
  %v3386 = vsel %vm3342, %v3309, 0
  %v3389 = vsel %vm3342, %v3310, 0
  %v3392 = vsel %vm3342, %v3311, 0
  %v3395 = vsel %vm3342, %v3312, 0
  %v3398 = vsel %vm3342, %v3313, 0
  %v3401 = vsel %vm3342, %v3314, 0
  %v3404 = vsel %vm3342, %v3315, 0
  %v3407 = vsel %vm3342, %v3316, 0
  %v3410 = vsel %vm3342, %v3317, 0
  %v3413 = vsel %vm3342, %v3318, 0
  %v3416 = vsel %vm3342, %v3319, 0
  %v3419 = vsel %vm3342, %v3320, 0
  %v3422 = vsel %vm3342, %v3321, 0
  %v3425 = vsel %vm3342, %v3322, 0
  %v3428 = vsel %vm3342, %v3323, 0
  %v3431 = vsel %vm3342, %v3324, 0
  %v3434 = vsel %vm3342, %v3325, 0
  %v3437 = vsel %vm3342, %v3326, 0
  %v3440 = vsel %vm3342, %v3327, 0
  %v3443 = vsel %vm3342, %v3328, 0
  %v3446 = vsel %vm3342, %v3329, 0
  %v3449 = vsel %vm3342, %v3330, 0
  %3451 = vmatprep.subr.mxu0 0.0
  %3452 = vmatpush1.msra.mxu0 0.0
  %3453 = vmatprep.subr.mxu0 0.0
  %3454 = vmatpush1.msra.mxu0 0.0
  %3455 = vmatprep.subr.mxu0 0.0
  %3456 = vmatpush1.msra.mxu0 0.0
  %3457 = vmatprep.subr.mxu0 0.0
  %3458 = vmatpush1.msra.mxu0 0.0
  %3459 = vmatprep.subr.mxu0 0.0
  %3460 = vmatpush1.msra.mxu0 0.0
  %3461 = vmatprep.subr.mxu0 0.0
  %3462 = vmatpush1.msra.mxu0 0.0
  %3463 = vmatprep.subr.mxu0 0.0
  %3464 = vmatpush1.msra.mxu0 0.0
  %3465 = vmatprep.subr.mxu0 0.0
  %3466 = vmatpush1.msra.mxu0 0.0
  %3467 = vmatprep.subr.mxu0 0.0
  %3468 = vmatpush1.msra.mxu0 0.0
  %3469 = vmatprep.subr.mxu0 0.0
  %3470 = vmatpush1.msra.mxu0 0.0
  %3471 = vmatprep.subr.mxu0 0.0
  %3472 = vmatpush1.msra.mxu0 0.0
  %3473 = vmatprep.subr.mxu0 0.0
  %3474 = vmatpush1.msra.mxu0 0.0
  %3475 = vmatprep.subr.mxu0 0.0
  %3476 = vmatpush1.msra.mxu0 %v3334
  %3477 = vmatprep.subr.mxu0 0.0
  %3478 = vmatpush1.msra.mxu0 %v3333
  %3479 = vmatprep.subr.mxu0 0.0
  %3480 = vmatpush1.msra.mxu0 %v3332
  %3481 = vmatprep.subr.mxu0 0.0
  %3482 = vmatpush1.msra.mxu0 %v3331
  %3483 = vmatprep.subr.mxu0 0.0
  %3484 = vmatpush2.msra.mxu0 0.0
  %3485 = vmatprep.subr.mxu0 0.0
  %3486 = vmatpush2.msra.mxu0 0.0
  %3487 = vmatprep.subr.mxu0 0.0
  %3488 = vmatpush2.msra.mxu0 0.0
  %3489 = vmatprep.subr.mxu0 0.0
  %3490 = vmatpush2.msra.mxu0 0.0
  %3491 = vmatprep.subr.mxu0 0.0
  %3492 = vmatpush2.msra.mxu0 0.0
  %3493 = vmatprep.subr.mxu0 0.0
  %3494 = vmatpush2.msra.mxu0 0.0
  %3495 = vmatprep.subr.mxu0 0.0
  %3496 = vmatpush2.msra.mxu0 0.0
  %3497 = vmatprep.subr.mxu0 0.0
  %3498 = vmatpush2.msra.mxu0 0.0
  %3499 = vmatprep.subr.mxu0 0.0
  %3500 = vmatpush2.msra.mxu0 0.0
  %3501 = vmatprep.subr.mxu0 0.0
  %3502 = vmatpush2.msra.mxu0 0.0
  %3503 = vmatprep.subr.mxu0 0.0
  %3504 = vmatpush2.msra.mxu0 0.0
  %3505 = vmatprep.subr.mxu0 0.0
  %3506 = vmatpush2.msra.mxu0 0.0
  %3507 = vmatprep.subr.mxu0 0.0
  %3508 = vmatpush2.msra.mxu0 0.0
  %3509 = vmatprep.subr.mxu0 0.0
  %3510 = vmatpush2.msra.mxu0 0.0
  %3511 = vmatprep.subr.mxu0 0.0
  %3512 = vmatpush2.msra.mxu0 0.0
  %3513 = vmatprep.subr.mxu0 0.0
  %3514 = vmatpush2.msra.mxu0 0.0
  %3515 = vmatprep.mubr.f32.mxu0 0.0
  %3516 = vmatmul.mubr.f32.gmra.mxu0 %v3344
  %v3517 = vpop.f32.mrf.mxu0
  %v3518 = vadd.f32 %v3340, %v3517
  %v3519 = vpop.f32.mrf.mxu0
  %3520 = vmatprep.mubr.f32.mxu0 0.0
  %3521 = vmatmul.mubr.f32.gmra.mxu0 %v3347
  %v3522 = vpop.f32.mrf.mxu0
  %v3523 = vadd.f32 %v3340, %v3522
  %v3524 = vpop.f32.mrf.mxu0
  %3525 = vmatprep.mubr.f32.mxu0 0.0
  %3526 = vmatmul.mubr.f32.gmra.mxu0 %v3350
  %v3527 = vpop.f32.mrf.mxu0
  %v3528 = vadd.f32 %v3340, %v3527
  %v3529 = vpop.f32.mrf.mxu0
  %3530 = vmatprep.mubr.f32.mxu0 0.0
  %3531 = vmatmul.mubr.f32.gmra.mxu0 %v3353
  %v3532 = vpop.f32.mrf.mxu0
  %v3533 = vadd.f32 %v3340, %v3532
  %v3534 = vpop.f32.mrf.mxu0
  %3535 = vmatprep.mubr.f32.mxu0 0.0
  %3536 = vmatmul.mubr.f32.gmra.mxu0 %v3356
  %v3537 = vpop.f32.mrf.mxu0
  %v3538 = vadd.f32 %v3340, %v3537
  %v3539 = vpop.f32.mrf.mxu0
  %3540 = vmatprep.mubr.f32.mxu0 0.0
  %3541 = vmatmul.mubr.f32.gmra.mxu0 %v3359
  %v3542 = vpop.f32.mrf.mxu0
  %v3543 = vadd.f32 %v3340, %v3542
  %v3544 = vpop.f32.mrf.mxu0
  %3545 = vmatprep.mubr.f32.mxu0 0.0
  %3546 = vmatmul.mubr.f32.gmra.mxu0 %v3362
  %v3547 = vpop.f32.mrf.mxu0
  %v3548 = vadd.f32 %v3340, %v3547
  %v3549 = vpop.f32.mrf.mxu0
  %3550 = vmatprep.mubr.f32.mxu0 0.0
  %3551 = vmatmul.mubr.f32.gmra.mxu0 %v3365
  %v3552 = vpop.f32.mrf.mxu0
  %v3553 = vadd.f32 %v3340, %v3552
  %v3554 = vpop.f32.mrf.mxu0
  %3555 = vmatprep.mubr.f32.mxu0 0.0
  %3556 = vmatmul.mubr.f32.gmra.mxu0 %v3368
  %v3557 = vpop.f32.mrf.mxu0
  %v3558 = vadd.f32 %v3340, %v3557
  %v3559 = vpop.f32.mrf.mxu0
  %3560 = vmatprep.mubr.f32.mxu0 0.0
  %3561 = vmatmul.mubr.f32.gmra.mxu0 %v3371
  %v3562 = vpop.f32.mrf.mxu0
  %v3563 = vadd.f32 %v3340, %v3562
  %v3564 = vpop.f32.mrf.mxu0
  %3565 = vmatprep.mubr.f32.mxu0 0.0
  %3566 = vmatmul.mubr.f32.gmra.mxu0 %v3374
  %v3567 = vpop.f32.mrf.mxu0
  %v3568 = vadd.f32 %v3340, %v3567
  %v3569 = vpop.f32.mrf.mxu0
  %3570 = vmatprep.mubr.f32.mxu0 0.0
  %3571 = vmatmul.mubr.f32.gmra.mxu0 %v3377
  %v3572 = vpop.f32.mrf.mxu0
  %v3573 = vadd.f32 %v3340, %v3572
  %v3574 = vpop.f32.mrf.mxu0
  %3575 = vmatprep.mubr.f32.mxu0 0.0
  %3576 = vmatmul.mubr.f32.gmra.mxu0 %v3380
  %v3577 = vpop.f32.mrf.mxu0
  %v3578 = vadd.f32 %v3340, %v3577
  %v3579 = vpop.f32.mrf.mxu0
  %3580 = vmatprep.mubr.f32.mxu0 0.0
  %3581 = vmatmul.mubr.f32.gmra.mxu0 %v3383
  %v3582 = vpop.f32.mrf.mxu0
  %v3583 = vadd.f32 %v3340, %v3582
  %v3584 = vpop.f32.mrf.mxu0
  %3585 = vmatprep.mubr.f32.mxu0 0.0
  %3586 = vmatmul.mubr.f32.gmra.mxu0 %v3386
  %v3587 = vpop.f32.mrf.mxu0
  %v3588 = vadd.f32 %v3340, %v3587
  %v3589 = vpop.f32.mrf.mxu0
  %3590 = vmatprep.mubr.f32.mxu0 0.0
  %3591 = vmatmul.mubr.f32.gmra.mxu0 %v3389
  %v3592 = vpop.f32.mrf.mxu0
  %v3593 = vadd.f32 %v3340, %v3592
  %v3594 = vpop.f32.mrf.mxu0
  %3595 = vmatprep.mubr.f32.mxu0 0.0
  %3596 = vmatmul.mubr.f32.gmra.mxu0 %v3392
  %v3597 = vpop.f32.mrf.mxu0
  %v3598 = vadd.f32 %v3340, %v3597
  %v3599 = vpop.f32.mrf.mxu0
  %3600 = vmatprep.mubr.f32.mxu0 0.0
  %3601 = vmatmul.mubr.f32.gmra.mxu0 %v3395
  %v3602 = vpop.f32.mrf.mxu0
  %v3603 = vadd.f32 %v3340, %v3602
  %v3604 = vpop.f32.mrf.mxu0
  %3605 = vmatprep.mubr.f32.mxu0 0.0
  %3606 = vmatmul.mubr.f32.gmra.mxu0 %v3398
  %v3607 = vpop.f32.mrf.mxu0
  %v3608 = vadd.f32 %v3340, %v3607
  %v3609 = vpop.f32.mrf.mxu0
  %3610 = vmatprep.mubr.f32.mxu0 0.0
  %3611 = vmatmul.mubr.f32.gmra.mxu0 %v3401
  %v3612 = vpop.f32.mrf.mxu0
  %v3613 = vadd.f32 %v3340, %v3612
  %v3614 = vpop.f32.mrf.mxu0
  %3615 = vmatprep.mubr.f32.mxu0 0.0
  %3616 = vmatmul.mubr.f32.gmra.mxu0 %v3404
  %v3617 = vpop.f32.mrf.mxu0
  %v3618 = vadd.f32 %v3340, %v3617
  %v3619 = vpop.f32.mrf.mxu0
  %3620 = vmatprep.mubr.f32.mxu0 0.0
  %3621 = vmatmul.mubr.f32.gmra.mxu0 %v3407
  %v3622 = vpop.f32.mrf.mxu0
  %v3623 = vadd.f32 %v3340, %v3622
  %v3624 = vpop.f32.mrf.mxu0
  %3625 = vmatprep.mubr.f32.mxu0 0.0
  %3626 = vmatmul.mubr.f32.gmra.mxu0 %v3410
  %v3627 = vpop.f32.mrf.mxu0
  %v3628 = vadd.f32 %v3340, %v3627
  %v3629 = vpop.f32.mrf.mxu0
  %3630 = vmatprep.mubr.f32.mxu0 0.0
  %3631 = vmatmul.mubr.f32.gmra.mxu0 %v3413
  %v3632 = vpop.f32.mrf.mxu0
  %v3633 = vadd.f32 %v3340, %v3632
  %v3634 = vpop.f32.mrf.mxu0
  %3635 = vmatprep.mubr.f32.mxu0 0.0
  %3636 = vmatmul.mubr.f32.gmra.mxu0 %v3416
  %v3637 = vpop.f32.mrf.mxu0
  %v3638 = vadd.f32 %v3340, %v3637
  %v3639 = vpop.f32.mrf.mxu0
  %3640 = vmatprep.mubr.f32.mxu0 0.0
  %3641 = vmatmul.mubr.f32.gmra.mxu0 %v3419
  %v3642 = vpop.f32.mrf.mxu0
  %v3643 = vadd.f32 %v3340, %v3642
  %v3644 = vpop.f32.mrf.mxu0
  %3645 = vmatprep.mubr.f32.mxu0 0.0
  %3646 = vmatmul.mubr.f32.gmra.mxu0 %v3422
  %v3647 = vpop.f32.mrf.mxu0
  %v3648 = vadd.f32 %v3340, %v3647
  %v3649 = vpop.f32.mrf.mxu0
  %3650 = vmatprep.mubr.f32.mxu0 0.0
  %3651 = vmatmul.mubr.f32.gmra.mxu0 %v3425
  %v3652 = vpop.f32.mrf.mxu0
  %v3653 = vadd.f32 %v3340, %v3652
  %v3654 = vpop.f32.mrf.mxu0
  %3655 = vmatprep.mubr.f32.mxu0 0.0
  %3656 = vmatmul.mubr.f32.gmra.mxu0 %v3428
  %v3657 = vpop.f32.mrf.mxu0
  %v3658 = vadd.f32 %v3340, %v3657
  %v3659 = vpop.f32.mrf.mxu0
  %3660 = vmatprep.mubr.f32.mxu0 0.0
  %3661 = vmatmul.mubr.f32.gmra.mxu0 %v3431
  %v3662 = vpop.f32.mrf.mxu0
  %v3663 = vadd.f32 %v3340, %v3662
  %v3664 = vpop.f32.mrf.mxu0
  %3665 = vmatprep.mubr.f32.mxu0 0.0
  %3666 = vmatmul.mubr.f32.gmra.mxu0 %v3434
  %v3667 = vpop.f32.mrf.mxu0
  %v3668 = vadd.f32 %v3340, %v3667
  %v3669 = vpop.f32.mrf.mxu0
  %3670 = vmatprep.mubr.f32.mxu0 0.0
  %3671 = vmatmul.mubr.f32.gmra.mxu0 %v3437
  %v3672 = vpop.f32.mrf.mxu0
  %v3673 = vadd.f32 %v3340, %v3672
  %v3674 = vpop.f32.mrf.mxu0
  %3675 = vmatprep.mubr.f32.mxu0 0.0
  %3676 = vmatmul.mubr.f32.gmra.mxu0 %v3440
  %v3677 = vpop.f32.mrf.mxu0
  %v3678 = vadd.f32 %v3340, %v3677
  %v3679 = vpop.f32.mrf.mxu0
  %3680 = vmatprep.mubr.f32.mxu0 0.0
  %3681 = vmatmul.mubr.f32.gmra.mxu0 %v3443
  %v3682 = vpop.f32.mrf.mxu0
  %v3683 = vadd.f32 %v3340, %v3682
  %v3684 = vpop.f32.mrf.mxu0
  %3685 = vmatprep.mubr.f32.mxu0 0.0
  %3686 = vmatmul.mubr.f32.gmra.mxu0 %v3446
  %v3687 = vpop.f32.mrf.mxu0
  %v3688 = vadd.f32 %v3340, %v3687
  %v3689 = vpop.f32.mrf.mxu0
  %3690 = vmatprep.mubr.f32.mxu0 0.0
  %3691 = vmatmul.mubr.f32.gmra.mxu0 %v3449
  %v3692 = vpop.f32.mrf.mxu0
  %v3693 = vadd.f32 %v3340, %v3692
  %v3694 = vpop.f32.mrf.mxu0
  %3695 = vdwg.mxu0
  %3696 = vst.msk [vmem:[%s10] sm:$0xff] %vm2573, %v3518
  %3697 = vst.msk [vmem:[%s10 + $0x8] sm:$0xff] %vm2573, %v3523
  %3698 = vst.msk [vmem:[%s10 + $0x10] sm:$0xff] %vm2573, %v3528
  %3699 = vst.msk [vmem:[%s10 + $0x18] sm:$0xff] %vm2573, %v3533
  %3700 = vst.msk [vmem:[%s10 + $0x20] sm:$0xff] %vm2573, %v3538
  %3701 = vst.msk [vmem:[%s10 + $0x28] sm:$0xff] %vm2573, %v3543
  %3702 = vst.msk [vmem:[%s10 + $0x30] sm:$0xff] %vm2573, %v3548
  %3703 = vst.msk [vmem:[%s10 + $0x38] sm:$0xff] %vm2573, %v3553
  %3704 = vst.msk [vmem:[%s10 + $0x40] sm:$0xff] %vm2573, %v3558
  %3705 = vst.msk [vmem:[%s10 + $0x48] sm:$0xff] %vm2573, %v3563
  %3706 = vst.msk [vmem:[%s10 + $0x50] sm:$0xff] %vm2573, %v3568
  %3707 = vst.msk [vmem:[%s10 + $0x58] sm:$0xff] %vm2573, %v3573
  %3708 = vst.msk [vmem:[%s10 + $0x60] sm:$0xff] %vm2573, %v3578
  %3709 = vst.msk [vmem:[%s10 + $0x68] sm:$0xff] %vm2573, %v3583
  %3710 = vst.msk [vmem:[%s10 + $0x70] sm:$0xff] %vm2573, %v3588
  %3711 = vst.msk [vmem:[%s10 + $0x78] sm:$0xff] %vm2573, %v3593
  %3712 = vst.msk [vmem:[%s10 + $0x80] sm:$0xff] %vm2573, %v3598
  %3713 = vst.msk [vmem:[%s10 + $0x88] sm:$0xff] %vm2573, %v3603
  %3732 = vrot.lane.b32.xlu0 %v3608, 64
  %v3733 = vpop.permute.xlu0 %3732
  %3734 = vrot.lane.b32.xlu0 %v3613, 64
  %v3735 = vpop.permute.xlu0 %3734
  %3736 = vrot.lane.b32.xlu0 %v3618, 64
  %v3737 = vpop.permute.xlu0 %3736
  %3738 = vrot.lane.b32.xlu0 %v3623, 64
  %v3739 = vpop.permute.xlu0 %3738
  %3740 = vrot.lane.b32.xlu0 %v3628, 64
  %v3741 = vpop.permute.xlu0 %3740
  %3742 = vrot.lane.b32.xlu0 %v3633, 64
  %v3743 = vpop.permute.xlu0 %3742
  %3744 = vrot.lane.b32.xlu0 %v3638, 64
  %v3745 = vpop.permute.xlu0 %3744
  %3746 = vrot.lane.b32.xlu0 %v3643, 64
  %v3747 = vpop.permute.xlu0 %3746
  %3748 = vrot.lane.b32.xlu0 %v3648, 64
  %v3749 = vpop.permute.xlu0 %3748
  %3750 = vrot.lane.b32.xlu0 %v3653, 64
  %v3751 = vpop.permute.xlu0 %3750
  %3752 = vrot.lane.b32.xlu0 %v3658, 64
  %v3753 = vpop.permute.xlu0 %3752
  %3754 = vrot.lane.b32.xlu0 %v3663, 64
  %v3755 = vpop.permute.xlu0 %3754
  %3756 = vrot.lane.b32.xlu0 %v3668, 64
  %v3757 = vpop.permute.xlu0 %3756
  %3758 = vrot.lane.b32.xlu0 %v3673, 64
  %v3759 = vpop.permute.xlu0 %3758
  %3760 = vrot.lane.b32.xlu0 %v3678, 64
  %v3761 = vpop.permute.xlu0 %3760
  %3762 = vrot.lane.b32.xlu0 %v3683, 64
  %v3763 = vpop.permute.xlu0 %3762
  %3764 = vrot.lane.b32.xlu0 %v3688, 64
  %v3765 = vpop.permute.xlu0 %3764
  %3766 = vrot.lane.b32.xlu0 %v3693, 64
  %v3767 = vpop.permute.xlu0 %3766
  %vm3786 = vcmask 1048064
  %3787 = vst.msk [vmem:[%s10] sm:$0xff] %vm3786, %v3733
  %3788 = vst.msk [vmem:[%s10 + $0x8] sm:$0xff] %vm3786, %v3735
  %3789 = vst.msk [vmem:[%s10 + $0x10] sm:$0xff] %vm3786, %v3737
  %3790 = vst.msk [vmem:[%s10 + $0x18] sm:$0xff] %vm3786, %v3739
  %3791 = vst.msk [vmem:[%s10 + $0x20] sm:$0xff] %vm3786, %v3741
  %3792 = vst.msk [vmem:[%s10 + $0x28] sm:$0xff] %vm3786, %v3743
  %3793 = vst.msk [vmem:[%s10 + $0x30] sm:$0xff] %vm3786, %v3745
  %3794 = vst.msk [vmem:[%s10 + $0x38] sm:$0xff] %vm3786, %v3747
  %3795 = vst.msk [vmem:[%s10 + $0x40] sm:$0xff] %vm3786, %v3749
  %3796 = vst.msk [vmem:[%s10 + $0x48] sm:$0xff] %vm3786, %v3751
  %3797 = vst.msk [vmem:[%s10 + $0x50] sm:$0xff] %vm3786, %v3753
  %3798 = vst.msk [vmem:[%s10 + $0x58] sm:$0xff] %vm3786, %v3755
  %3799 = vst.msk [vmem:[%s10 + $0x60] sm:$0xff] %vm3786, %v3757
  %3800 = vst.msk [vmem:[%s10 + $0x68] sm:$0xff] %vm3786, %v3759
  %3801 = vst.msk [vmem:[%s10 + $0x70] sm:$0xff] %vm3786, %v3761
  %3802 = vst.msk [vmem:[%s10 + $0x78] sm:$0xff] %vm3786, %v3763
  %3803 = vst.msk [vmem:[%s10 + $0x80] sm:$0xff] %vm3786, %v3765
  %3804 = vst.msk [vmem:[%s10 + $0x88] sm:$0xff] %vm3786, %v3767
  // Predicated region
  $region42: #{dwpose_wrapper_forward.1} parent=0 // pred_check
    _
  $region43: #{dwpose_wrapper_forward.1} parent=0 // pred_check_branch
    %3806 = sbr.rel (0) target = $region45
  $region44: #{dwpose_wrapper_forward.1} parent=0 // pred_region
    _
  $region45: #{dwpose_wrapper_forward.1} parent=0 // pred_fallthru
    _
  // Predicated region
  $region46: #{dwpose_wrapper_forward.1} parent=0 // pred_check
    _
  $region47: #{dwpose_wrapper_forward.1} parent=0 // pred_check_branch
    %3808 = sbr.rel (0) target = $region49
  $region48: #{dwpose_wrapper_forward.1} parent=0 // pred_region
    _
  $region49: #{dwpose_wrapper_forward.1} parent=0 // pred_fallthru
    _

</llo_original>
